<compile_context>
chip_gen: v7x
topology: tpu7x:2x2x1
jax: 0.10.0
libtpu: 0.0.40
codegen_flags: <defaults>
</compile_context>

<pallas_src>
import functools

import numpy as np
import jax
import jax.numpy as jnp
from jax.experimental import pallas as pl
from jax.experimental.pallas import tpu as pltpu

LN_EPS = 1e-5          # nn.LayerNorm default (Down / BertLayerOutput, no affine)
ATTN_LN_EPS = 1e-12    # HF BertSelfOutput LayerNorm eps (affine)
MXU_DTYPE = jnp.bfloat16  # matmul-operand dtype; accumulation & elementwise stay f32


# ----------------------------------------------------------------------------
# In-kernel helpers
# ----------------------------------------------------------------------------
def _erf(x):
    # Mosaic has no erf lowering; Abramowitz & Stegun 7.1.26 polynomial
    # (|err| < 1.5e-7), built from exp/abs only.
    a1, a2, a3, a4, a5 = (0.254829592, -0.284496736, 1.421413741,
                          -1.453152027, 1.061405429)
    p = 0.3275911
    sgn = jnp.where(x < 0.0, -1.0, 1.0)
    ax = jnp.abs(x)
    t = 1.0 / (1.0 + p * ax)
    poly = ((((a5 * t + a4) * t + a3) * t + a2) * t + a1) * t
    return sgn * (1.0 - poly * jnp.exp(-ax * ax))


def _gelu_exact(x):
    return 0.5 * x * (1.0 + _erf(x * (1.0 / np.sqrt(2.0))))


def _ln(x, eps):
    mean = jnp.mean(x, axis=-1, keepdims=True)
    var = jnp.mean((x - mean) ** 2, axis=-1, keepdims=True)
    return (x - mean) * jax.lax.rsqrt(var + eps)


def _mxu(x):
    return x.astype(MXU_DTYPE)


def _const_index_map(ndim):
    zeros = (0,) * ndim

    def imap(b):
        return zeros

    return imap


def _const_spec(arr):
    # Whole-array block, same block for every grid step (weights / biases).
    return pl.BlockSpec(arr.shape, _const_index_map(arr.ndim))


# ----------------------------------------------------------------------------
# Kernel 1: initial Down block = LayerNorm(no affine) + folded LoRA
#   y = ln(x) @ Wf + b2       (Wf = W1 @ W2, folded wrapper-side)
# ----------------------------------------------------------------------------
def _ln_lora_kernel(x_ref, w_ref, b_ref, o_ref, *, eps):
    x = x_ref[...].astype(jnp.float32)
    y = jnp.dot(_mxu(_ln(x, eps)), w_ref[...],
                preferred_element_type=jnp.float32) + b_ref[...]
    o_ref[...] = y.astype(o_ref.dtype)


def ln_lora(x, wf, b2, *, eps=LN_EPS, tm=512):
    M, Din = x.shape
    Dout = wf.shape[1]
    tm = min(tm, M)               # full-M block at toy sizes, big tiles otherwise
    assert M % tm == 0
    return pl.pallas_call(
        functools.partial(_ln_lora_kernel, eps=eps),
        out_shape=jax.ShapeDtypeStruct((M, Dout), x.dtype),
        grid=(M // tm,),
        in_specs=[
            pl.BlockSpec((tm, Din), lambda i: (i, 0)),
            pl.BlockSpec((Din, Dout), lambda i: (0, 0)),
            pl.BlockSpec((1, Dout), lambda i: (0, 0)),
        ],
        out_specs=pl.BlockSpec((tm, Dout), lambda i: (i, 0)),
        compiler_params=pltpu.CompilerParams(dimension_semantics=("parallel",)),
    )(x, wf, b2)


# ----------------------------------------------------------------------------
# Kernel 2: fully fused layer step (per batch element)
#   new_up   = up   + ChoppedBertLayer_i(down)            * rm
#   new_down = down + Down_{i+1}(new_up)                  * rm   (if present)
# ----------------------------------------------------------------------------
def _fused_layer_kernel(*refs, num_heads, head_dim, residual_multiplier,
                        with_down):
    if with_down:
        (up_ref, down_ref,
         wq, wk, wv, bq, bk, bv, wo, bo, gamma, beta,
         wi, bi, owf, ob2, dwf, db2,
         new_up_ref, new_down_ref) = refs
    else:
        (up_ref, down_ref,
         wq, wk, wv, bq, bk, bv, wo, bo, gamma, beta,
         wi, bi, owf, ob2,
         new_up_ref) = refs
        dwf = db2 = new_down_ref = None

    nh, hd = num_heads, head_dim
    x = down_ref[0].astype(jnp.float32)            # (S, H)  H = down_size
    S, H = x.shape

    # ---- BertAttention: batched over heads (leading batch dim, no relayouts) --
    xb = _mxu(jnp.broadcast_to(x, (nh, S, H)))     # (nh, S, H), tiny
    qh = jnp.einsum('hsk,hkd->hsd', xb, wq[...],
                    preferred_element_type=jnp.float32) + bq[...]
    kh = jnp.einsum('hsk,hkd->hsd', xb, wk[...],
                    preferred_element_type=jnp.float32) + bk[...]
    vh = jnp.einsum('hsk,hkd->hsd', xb, wv[...],
                    preferred_element_type=jnp.float32) + bv[...]

    scale = 1.0 / np.sqrt(hd)
    s = jnp.einsum('hqd,hkd->hqk', _mxu(qh), _mxu(kh),
                   preferred_element_type=jnp.float32) * scale
    s = s - jnp.max(s, axis=-1, keepdims=True)
    e = jnp.exp(s)
    p = e * pl.reciprocal(jnp.sum(e, axis=-1, keepdims=True), approx=True)
    ctx = jnp.einsum('hqk,hkd->hqd', _mxu(p), _mxu(vh),
                     preferred_element_type=jnp.float32)     # (nh, S, hd)

    # Head merge + out-projection without concat/transpose:
    #   ctx_concat @ Wo == sum_h ctx_h @ Wo[h*hd:(h+1)*hd, :]
    parts = jnp.einsum('hsd,hdk->hsk', _mxu(ctx), wo[...],
                       preferred_element_type=jnp.float32)   # (nh, S, H)
    attn_out = jnp.sum(parts, axis=0) + bo[...]

    h1 = attn_out + x                                        # BertSelfOutput residual
    mean = jnp.mean(h1, axis=-1, keepdims=True)
    var = jnp.mean((h1 - mean) ** 2, axis=-1, keepdims=True)
    a = (h1 - mean) * jax.lax.rsqrt(var + ATTN_LN_EPS) * gamma[...] + beta[...]

    # ---- BertIntermediate: Linear + exact GELU -------------------------------
    inter = jnp.dot(_mxu(a), wi[...],
                    preferred_element_type=jnp.float32) + bi[...]
    inter = _gelu_exact(inter)

    # ---- BertLayerOutput: LN(no affine) + folded LoRA, then `up` residual ----
    up_res = jnp.dot(_mxu(_ln(inter, LN_EPS)), owf[...],
                     preferred_element_type=jnp.float32) + ob2[...]
    new_up = up_ref[0].astype(jnp.float32) + up_res * residual_multiplier
    new_up_ref[...] = new_up[None].astype(new_up_ref.dtype)

    # ---- Next Down block: LN(no affine) + folded LoRA, then `down` residual --
    if with_down:
        d_res = jnp.dot(_mxu(_ln(new_up, LN_EPS)), dwf[...],
                        preferred_element_type=jnp.float32) + db2[...]
        new_down = x + d_res * residual_multiplier
        new_down_ref[...] = new_down[None].astype(new_down_ref.dtype)


def fused_layer(up, down, lp, dp_next, *, num_heads, head_dim,
                residual_multiplier):
    B, S, UP = up.shape
    DOWN = down.shape[-1]
    with_down = dp_next is not None

    weights = [lp['wq'], lp['wk'], lp['wv'], lp['bq'], lp['bk'], lp['bv'],
               lp['wo'], lp['bo'], lp['gamma'], lp['beta'],
               lp['wi'], lp['bi'], lp['owf'], lp['ob2']]
    if with_down:
        weights += [dp_next['wf'], dp_next['b2']]

    in_specs = ([pl.BlockSpec((1, S, UP), lambda b: (b, 0, 0)),
                 pl.BlockSpec((1, S, DOWN), lambda b: (b, 0, 0))]
                + [_const_spec(w) for w in weights])

    if with_down:
        out_shape = (jax.ShapeDtypeStruct((B, S, UP), up.dtype),
                     jax.ShapeDtypeStruct((B, S, DOWN), down.dtype))
        out_specs = (pl.BlockSpec((1, S, UP), lambda b: (b, 0, 0)),
                     pl.BlockSpec((1, S, DOWN), lambda b: (b, 0, 0)))
    else:
        out_shape = jax.ShapeDtypeStruct((B, S, UP), up.dtype)
        out_specs = pl.BlockSpec((1, S, UP), lambda b: (b, 0, 0))

    kern = functools.partial(_fused_layer_kernel, num_heads=num_heads,
                             head_dim=head_dim,
                             residual_multiplier=residual_multiplier,
                             with_down=with_down)
    return pl.pallas_call(
        kern,
        out_shape=out_shape,
        grid=(B,),
        in_specs=in_specs,
        out_specs=out_specs,
        compiler_params=pltpu.CompilerParams(dimension_semantics=("parallel",)),
    )(up, down, *weights)


# ----------------------------------------------------------------------------
# Wrapper-side parameter preparation (pure JAX, outside the kernels):
#   * fold LoRA W1@W2 (HIGHEST precision), cast matmul weights to bf16
#   * split Q/K/V/O weights per attention head (leading head dim)
# ----------------------------------------------------------------------------
def prepare_params(params, *, num_heads, head_dim, mxu_dtype=MXU_DTYPE):
    def fold(w1, w2):
        # NOTE: for production dims (large in*out) keep the rank-k path instead.
        return jnp.matmul(w1, w2, precision=jax.lax.Precision.HIGHEST).astype(mxu_dtype)

    downs = []
    for d in params['downs']:
        downs.append(dict(wf=fold(d['w1'], d['w2']), b2=d['b2']))

    layers = []
    for l in params['layers']:
        a = l['attn']
        H = a['wq'].shape[0]

        def split_w(w):   # (H, H) -> (nh, H, hd): head h uses columns h*hd:(h+1)*hd
            return jnp.transpose(w.reshape(H, num_heads, head_dim),
                                 (1, 0, 2)).astype(mxu_dtype)

        def split_b(b):   # (1, H) -> (nh, 1, hd), kept f32 (added to f32 accum)
            return b.reshape(num_heads, head_dim)[:, None, :]

        layers.append(dict(
            wq=split_w(a['wq']), wk=split_w(a['wk']), wv=split_w(a['wv']),
            bq=split_b(a['bq']), bk=split_b(a['bk']), bv=split_b(a['bv']),
            wo=a['wo'].reshape(num_heads, head_dim, H).astype(mxu_dtype),
            bo=a['bo'], gamma=a['gamma'], beta=a['beta'],
            wi=l['wi'].astype(mxu_dtype), bi=l['bi'],
            owf=fold(l['ow1'], l['ow2']), ob2=l['ob2'],
        ))
    return dict(downs=downs, layers=layers)


# ----------------------------------------------------------------------------
# AugmentedBert forward: 1 initial Down kernel + 1 fused kernel per layer
# ----------------------------------------------------------------------------
def pallas_forward(emb, params, *, residual_multiplier, num_heads, head_dim):
    B, S, _ = emb.shape
    M = B * S
    kp = prepare_params(params, num_heads=num_heads, head_dim=head_dim)

    up = emb
    down = ln_lora(emb.reshape(M, -1),
                   kp['downs'][0]['wf'], kp['downs'][0]['b2']).reshape(B, S, -1)

    n = len(kp['layers'])
    for i in range(n):
        nxt = kp['downs'][i + 1] if i < n - 1 else None
        res = fused_layer(up, down, kp['layers'][i], nxt,
                          num_heads=num_heads, head_dim=head_dim,
                          residual_multiplier=residual_multiplier)
        if nxt is not None:
            up, down = res
        else:
            up = res
    return up


# ----------------------------------------------------------------------------
# Pure-JAX reference (true semantics: exact erf GELU, HIGHEST-precision matmuls,
# un-folded LoRA, f32 weights)
# ----------------------------------------------------------------------------
def _mm(a, b):
    return jnp.matmul(a, b, precision=jax.lax.Precision.HIGHEST)


def _ref_ln(x, eps, gamma=None, beta=None):
    mean = jnp.mean(x, axis=-1, keepdims=True)
    var = jnp.mean((x - mean) ** 2, axis=-1, keepdims=True)
    y = (x - mean) / jnp.sqrt(var + eps)
    if gamma is not None:
        y = y * gamma + beta
    return y


def _ref_ln_lora(x, w1, w2, b2, eps=LN_EPS):
    return _mm(_mm(_ref_ln(x, eps), w1), w2) + b2


def _ref_attention(x, p, num_heads, head_dim):
    B, S, H = x.shape
    q = _mm(x, p['wq']) + p['bq']
    k = _mm(x, p['wk']) + p['bk']
    v = _mm(x, p['wv']) + p['bv']

    def split(t):
        return t.reshape(B, S, num_heads, head_dim).transpose(0, 2, 1, 3)

    qh, kh, vh = split(q), split(k), split(v)
    scores = jnp.einsum('bhqd,bhkd->bhqk', qh, kh,
                        precision=jax.lax.Precision.HIGHEST) / np.sqrt(head_dim)
    probs = jax.nn.softmax(scores, axis=-1)
    ctx = jnp.einsum('bhqk,bhkd->bhqd', probs, vh,
                     precision=jax.lax.Precision.HIGHEST)
    ctx = ctx.transpose(0, 2, 1, 3).reshape(B, S, H)
    out = _mm(ctx, p['wo']) + p['bo']
    return _ref_ln(out + x, ATTN_LN_EPS, p['gamma'], p['beta'])


def ref_forward(emb, params, residual_multiplier, num_heads, head_dim):
    B, S, _ = emb.shape
    M = B * S

    def down_apply(p, x):
        return _ref_ln_lora(x.reshape(M, -1), p['w1'], p['w2'], p['b2']).reshape(B, S, -1)

    def chopped_apply(p, x):
        a = _ref_attention(x, p['attn'], num_heads, head_dim)
        inter = jax.nn.gelu(_mm(a.reshape(M, -1), p['wi']) + p['bi'], approximate=False)
        return _ref_ln_lora(inter, p['ow1'], p['ow2'], p['ob2']).reshape(B, S, -1)

    up = emb
    down = down_apply(params['downs'][0], up)
    n = len(params['layers'])
    for i in range(n - 1):
        up = up + chopped_apply(params['layers'][i], down) * residual_multiplier
        down = down + down_apply(params['downs'][i + 1], up) * residual_multiplier
    up = up + chopped_apply(params['layers'][n - 1], down) * residual_multiplier
    return up


# ----------------------------------------------------------------------------
# Deterministic parameter init (synthetic; shapes follow the module __init__)
# ----------------------------------------------------------------------------
def init_params(key, num_layers, up_size, down_size, k, inter_size):
    cnt = [0]

    def nrm(shape, scale=0.05):
        cnt[0] += 1
        return (scale * jax.random.normal(jax.random.fold_in(key, cnt[0]),
                                          shape)).astype(jnp.float32)

    H = down_size
    downs, layers = [], []
    for _ in range(num_layers):
        downs.append(dict(w1=nrm((up_size, k)),        # LoRA in_to_k (no bias)
                          w2=nrm((k, down_size)),      # LoRA k_to_out
                          b2=nrm((1, down_size))))
        attn = dict(wq=nrm((H, H)), bq=nrm((1, H)),
                    wk=nrm((H, H)), bk=nrm((1, H)),
                    wv=nrm((H, H)), bv=nrm((1, H)),
                    wo=nrm((H, H)), bo=nrm((1, H)),
                    gamma=(1.0 + nrm((1, H))), beta=nrm((1, H)))
        layers.append(dict(attn=attn,
                           wi=nrm((H, inter_size)), bi=nrm((1, inter_size)),
                           ow1=nrm((inter_size, k)),
                           ow2=nrm((k, up_size)),
                           ob2=nrm((1, up_size))))
    return dict(downs=downs, layers=layers)


if __name__ == "__main__":
    # Small shapes consistent with the module's conventions.
    B, S = 2, 8
    UP_SIZE, DOWN_SIZE, K_RANK, INTER = 64, 32, 8, 128
    NUM_HEADS, HEAD_DIM = 4, 8           # NUM_HEADS * HEAD_DIM == DOWN_SIZE
    NUM_LAYERS = 2
    RESIDUAL_MULTIPLIER = 1.0

    key = jax.random.PRNGKey(0)
    pkey, ekey = jax.random.split(key)
    params = init_params(pkey, NUM_LAYERS, UP_SIZE, DOWN_SIZE, K_RANK, INTER)
    emb = jax.random.normal(ekey, (B, S, UP_SIZE), jnp.float32)

    fwd = jax.jit(functools.partial(pallas_forward,
                                    residual_multiplier=RESIDUAL_MULTIPLIER,
                                    num_heads=NUM_HEADS, head_dim=HEAD_DIM))
    out = jax.block_until_ready(fwd(emb, params))

    ref = ref_forward(emb, params, RESIDUAL_MULTIPLIER, NUM_HEADS, HEAD_DIM)
    max_err = float(jnp.max(jnp.abs(out - ref)))
    if not np.allclose(np.asarray(out), np.asarray(ref), atol=5e-2, rtol=5e-2):
        raise AssertionError(f"Pallas output mismatch vs reference (max abs err {max_err})")

    print("KERNEL_OK")
</pallas_src>

<mosaic_0001>
module attributes {stable_mosaic.version = 11 : i64} {
  func.func @_ln_lora_kernel(%arg0: i32, %arg1: memref<16x64xf32, #tpu.memory_space<vmem>>, %arg2: memref<64x32xbf16, #tpu.memory_space<vmem>>, %arg3: memref<1x32xf32, #tpu.memory_space<vmem>>, %arg4: memref<16x32xf32, #tpu.memory_space<vmem>>) attributes {dimension_semantics = [#tpu.dimension_semantics<parallel>], iteration_bounds = array<i64: 1>, scalar_prefetch = 0 : i64, scratch_operands = 0 : i64, tpu.core_type = #tpu.core_type<tc>, window_params = [{transform_indices = @transform_0, window_bounds = array<i64: 16, 64>}, {pipeline_mode = #tpu.pipeline_mode<synchronous>, transform_indices = @transform_1, window_bounds = array<i64: 64, 32>}, {pipeline_mode = #tpu.pipeline_mode<synchronous>, transform_indices = @transform_2, window_bounds = array<i64: 1, 32>}, {transform_indices = @transform_3, window_bounds = array<i64: 16, 32>}]} {
    %c0 = arith.constant 0 : index
    %c0_0 = arith.constant 0 : index
    %0 = vector.load %arg1[%c0, %c0_0] : memref<16x64xf32, #tpu.memory_space<vmem>>, vector<16x64xf32>
    %cst = arith.constant dense<0.000000e+00> : vector<16xf32>
    %1 = vector.multi_reduction <add>, %0, %cst [1] : vector<16x64xf32> to vector<16xf32>
    %2 = vector.shape_cast %1 : vector<16xf32> to vector<16x1xf32>
    %cst_1 = arith.constant 6.400000e+01 : f32
    %3 = vector.broadcast %cst_1 : f32 to vector<16x1xf32>
    %4 = arith.divf %2, %3 : vector<16x1xf32>
    %5 = vector.broadcast %4 : vector<16x1xf32> to vector<16x64xf32>
    %6 = arith.subf %0, %5 : vector<16x64xf32>
    %7 = arith.mulf %6, %6 : vector<16x64xf32>
    %cst_2 = arith.constant dense<0.000000e+00> : vector<16xf32>
    %8 = vector.multi_reduction <add>, %7, %cst_2 [1] : vector<16x64xf32> to vector<16xf32>
    %9 = vector.shape_cast %8 : vector<16xf32> to vector<16x1xf32>
    %cst_3 = arith.constant 6.400000e+01 : f32
    %10 = vector.broadcast %cst_3 : f32 to vector<16x1xf32>
    %11 = arith.divf %9, %10 : vector<16x1xf32>
    %12 = vector.broadcast %4 : vector<16x1xf32> to vector<16x64xf32>
    %13 = arith.subf %0, %12 : vector<16x64xf32>
    %cst_4 = arith.constant 9.99999974E-6 : f32
    %14 = vector.broadcast %cst_4 : f32 to vector<16x1xf32>
    %15 = arith.addf %11, %14 : vector<16x1xf32>
    %16 = math.rsqrt %15 : vector<16x1xf32>
    %17 = vector.broadcast %16 : vector<16x1xf32> to vector<16x64xf32>
    %18 = arith.mulf %13, %17 : vector<16x64xf32>
    %19 = arith.truncf %18 : vector<16x64xf32> to vector<16x64xbf16>
    %c0_5 = arith.constant 0 : index
    %c0_6 = arith.constant 0 : index
    %20 = vector.load %arg2[%c0_5, %c0_6] : memref<64x32xbf16, #tpu.memory_space<vmem>>, vector<64x32xbf16>
    %cst_7 = arith.constant dense<0.000000e+00> : vector<16x32xf32>
    %21 = tpu.matmul %19, %20, %cst_7 {dimension_numbers = #tpu.dot_dimension_numbers<[1], [0], [0], [1], [0, 0, 1, 1], [], []>} : vector<16x64xbf16>, vector<64x32xbf16>, vector<16x32xf32> -> vector<16x32xf32>
    %c0_8 = arith.constant 0 : index
    %c0_9 = arith.constant 0 : index
    %22 = vector.load %arg3[%c0_8, %c0_9] : memref<1x32xf32, #tpu.memory_space<vmem>>, vector<1x32xf32>
    %23 = vector.broadcast %22 : vector<1x32xf32> to vector<16x32xf32>
    %24 = arith.addf %21, %23 : vector<16x32xf32>
    %c0_10 = arith.constant 0 : index
    %c0_11 = arith.constant 0 : index
    %25 = vector.load %arg4[%c0_10, %c0_11] : memref<16x32xf32, #tpu.memory_space<vmem>>, vector<16x32xf32>
    tpu.vector_store %arg4[%c0_10, %c0_11], %24 {strides = array<i32>} : memref<16x32xf32, #tpu.memory_space<vmem>>, vector<16x32xf32>,
    return
  }
  func.func @transform_0(%arg0: i32) -> (i32, i32) {
    %c0_i32 = arith.constant 0 : i32
    %c0_i32_0 = arith.constant 0 : i32
    return %arg0, %c0_i32 : i32, i32
  }
  func.func @transform_1(%arg0: i32) -> (i32, i32) {
    %c0_i32 = arith.constant 0 : i32
    %c0_i32_0 = arith.constant 0 : i32
    %c0_i32_1 = arith.constant 0 : i32
    return %c0_i32, %c0_i32_0 : i32, i32
  }
  func.func @transform_2(%arg0: i32) -> (i32, i32) {
    %c0_i32 = arith.constant 0 : i32
    %c0_i32_0 = arith.constant 0 : i32
    %c0_i32_1 = arith.constant 0 : i32
    return %c0_i32, %c0_i32_0 : i32, i32
  }
  func.func @transform_3(%arg0: i32) -> (i32, i32) {
    %c0_i32 = arith.constant 0 : i32
    %c0_i32_0 = arith.constant 0 : i32
    return %arg0, %c0_i32 : i32, i32
  }
}

module attributes {stable_mosaic.version = 11 : i64} {
  func.func @_fused_layer_kernel(%arg0: i32, %arg1: memref<1x8x64xf32, #tpu.memory_space<vmem>>, %arg2: memref<1x8x32xf32, #tpu.memory_space<vmem>>, %arg3: memref<4x32x8xbf16, #tpu.memory_space<vmem>>, %arg4: memref<4x32x8xbf16, #tpu.memory_space<vmem>>, %arg5: memref<4x32x8xbf16, #tpu.memory_space<vmem>>, %arg6: memref<4x1x8xf32, #tpu.memory_space<vmem>>, %arg7: memref<4x1x8xf32, #tpu.memory_space<vmem>>, %arg8: memref<4x1x8xf32, #tpu.memory_space<vmem>>, %arg9: memref<4x8x32xbf16, #tpu.memory_space<vmem>>, %arg10: memref<1x32xf32, #tpu.memory_space<vmem>>, %arg11: memref<1x32xf32, #tpu.memory_space<vmem>>, %arg12: memref<1x32xf32, #tpu.memory_space<vmem>>, %arg13: memref<32x128xbf16, #tpu.memory_space<vmem>>, %arg14: memref<1x128xf32, #tpu.memory_space<vmem>>, %arg15: memref<128x64xbf16, #tpu.memory_space<vmem>>, %arg16: memref<1x64xf32, #tpu.memory_space<vmem>>, %arg17: memref<64x32xbf16, #tpu.memory_space<vmem>>, %arg18: memref<1x32xf32, #tpu.memory_space<vmem>>, %arg19: memref<1x8x64xf32, #tpu.memory_space<vmem>>, %arg20: memref<1x8x32xf32, #tpu.memory_space<vmem>>) attributes {dimension_semantics = [#tpu.dimension_semantics<parallel>], iteration_bounds = array<i64: 2>, scalar_prefetch = 0 : i64, scratch_operands = 0 : i64, tpu.core_type = #tpu.core_type<tc>, window_params = [{transform_indices = @transform_0, window_bounds = array<i64: 1, 8, 64>}, {transform_indices = @transform_1, window_bounds = array<i64: 1, 8, 32>}, {pipeline_mode = #tpu.pipeline_mode<synchronous>, transform_indices = @transform_2, window_bounds = array<i64: 4, 32, 8>}, {pipeline_mode = #tpu.pipeline_mode<synchronous>, transform_indices = @transform_3, window_bounds = array<i64: 4, 32, 8>}, {pipeline_mode = #tpu.pipeline_mode<synchronous>, transform_indices = @transform_4, window_bounds = array<i64: 4, 32, 8>}, {pipeline_mode = #tpu.pipeline_mode<synchronous>, transform_indices = @transform_5, window_bounds = array<i64: 4, 1, 8>}, {pipeline_mode = #tpu.pipeline_mode<synchronous>, transform_indices = @transform_6, window_bounds = array<i64: 4, 1, 8>}, {pipeline_mode = #tpu.pipeline_mode<synchronous>, transform_indices = @transform_7, window_bounds = array<i64: 4, 1, 8>}, {pipeline_mode = #tpu.pipeline_mode<synchronous>, transform_indices = @transform_8, window_bounds = array<i64: 4, 8, 32>}, {pipeline_mode = #tpu.pipeline_mode<synchronous>, transform_indices = @transform_9, window_bounds = array<i64: 1, 32>}, {pipeline_mode = #tpu.pipeline_mode<synchronous>, transform_indices = @transform_10, window_bounds = array<i64: 1, 32>}, {pipeline_mode = #tpu.pipeline_mode<synchronous>, transform_indices = @transform_11, window_bounds = array<i64: 1, 32>}, {pipeline_mode = #tpu.pipeline_mode<synchronous>, transform_indices = @transform_12, window_bounds = array<i64: 32, 128>}, {pipeline_mode = #tpu.pipeline_mode<synchronous>, transform_indices = @transform_13, window_bounds = array<i64: 1, 128>}, {pipeline_mode = #tpu.pipeline_mode<synchronous>, transform_indices = @transform_14, window_bounds = array<i64: 128, 64>}, {pipeline_mode = #tpu.pipeline_mode<synchronous>, transform_indices = @transform_15, window_bounds = array<i64: 1, 64>}, {pipeline_mode = #tpu.pipeline_mode<synchronous>, transform_indices = @transform_16, window_bounds = array<i64: 64, 32>}, {pipeline_mode = #tpu.pipeline_mode<synchronous>, transform_indices = @transform_17, window_bounds = array<i64: 1, 32>}, {transform_indices = @transform_18, window_bounds = array<i64: 1, 8, 64>}, {transform_indices = @transform_19, window_bounds = array<i64: 1, 8, 32>}]} {
    %c0 = arith.constant 0 : index
    %c0_0 = arith.constant 0 : index
    %c0_1 = arith.constant 0 : index
    %0 = vector.load %arg2[%c0, %c0_0, %c0_1] : memref<1x8x32xf32, #tpu.memory_space<vmem>>, vector<1x8x32xf32>
    %1 = vector.shape_cast %0 : vector<1x8x32xf32> to vector<8x32xf32>
    %2 = vector.shape_cast %1 : vector<8x32xf32> to vector<1x8x32xf32>
    %3 = vector.broadcast %2 : vector<1x8x32xf32> to vector<4x8x32xf32>
    %4 = arith.truncf %3 : vector<4x8x32xf32> to vector<4x8x32xbf16>
    %c0_2 = arith.constant 0 : index
    %c0_3 = arith.constant 0 : index
    %c0_4 = arith.constant 0 : index
    %5 = vector.load %arg3[%c0_2, %c0_3, %c0_4] : memref<4x32x8xbf16, #tpu.memory_space<vmem>>, vector<4x32x8xbf16>
    "tpu.trace_start"() <{level = 10 : i32, message = "hsk,hkd->hsd"}> : () -> ()
    %cst = arith.constant dense<0.000000e+00> : vector<4x8x8xf32>
    %6 = tpu.matmul %4, %5, %cst {dimension_numbers = #tpu.dot_dimension_numbers<[2], [1], [1], [2], [0, 0, 0, 1, 1, 2], [0], [0]>} : vector<4x8x32xbf16>, vector<4x32x8xbf16>, vector<4x8x8xf32> -> vector<4x8x8xf32>
    "tpu.trace_stop"() : () -> ()
    %c0_5 = arith.constant 0 : index
    %c0_6 = arith.constant 0 : index
    %c0_7 = arith.constant 0 : index
    %7 = vector.load %arg6[%c0_5, %c0_6, %c0_7] : memref<4x1x8xf32, #tpu.memory_space<vmem>>, vector<4x1x8xf32>
    %8 = vector.broadcast %7 : vector<4x1x8xf32> to vector<4x8x8xf32>
    %9 = arith.addf %6, %8 : vector<4x8x8xf32>
    %c0_8 = arith.constant 0 : index
    %c0_9 = arith.constant 0 : index
    %c0_10 = arith.constant 0 : index
    %10 = vector.load %arg4[%c0_8, %c0_9, %c0_10] : memref<4x32x8xbf16, #tpu.memory_space<vmem>>, vector<4x32x8xbf16>
    "tpu.trace_start"() <{level = 10 : i32, message = "hsk,hkd->hsd"}> : () -> ()
    %cst_11 = arith.constant dense<0.000000e+00> : vector<4x8x8xf32>
    %11 = tpu.matmul %4, %10, %cst_11 {dimension_numbers = #tpu.dot_dimension_numbers<[2], [1], [1], [2], [0, 0, 0, 1, 1, 2], [0], [0]>} : vector<4x8x32xbf16>, vector<4x32x8xbf16>, vector<4x8x8xf32> -> vector<4x8x8xf32>
    "tpu.trace_stop"() : () -> ()
    %c0_12 = arith.constant 0 : index
    %c0_13 = arith.constant 0 : index
    %c0_14 = arith.constant 0 : index
    %12 = vector.load %arg7[%c0_12, %c0_13, %c0_14] : memref<4x1x8xf32, #tpu.memory_space<vmem>>, vector<4x1x8xf32>
    %13 = vector.broadcast %12 : vector<4x1x8xf32> to vector<4x8x8xf32>
    %14 = arith.addf %11, %13 : vector<4x8x8xf32>
    %c0_15 = arith.constant 0 : index
    %c0_16 = arith.constant 0 : index
    %c0_17 = arith.constant 0 : index
    %15 = vector.load %arg5[%c0_15, %c0_16, %c0_17] : memref<4x32x8xbf16, #tpu.memory_space<vmem>>, vector<4x32x8xbf16>
    "tpu.trace_start"() <{level = 10 : i32, message = "hsk,hkd->hsd"}> : () -> ()
    %cst_18 = arith.constant dense<0.000000e+00> : vector<4x8x8xf32>
    %16 = tpu.matmul %4, %15, %cst_18 {dimension_numbers = #tpu.dot_dimension_numbers<[2], [1], [1], [2], [0, 0, 0, 1, 1, 2], [0], [0]>} : vector<4x8x32xbf16>, vector<4x32x8xbf16>, vector<4x8x8xf32> -> vector<4x8x8xf32>
    "tpu.trace_stop"() : () -> ()
    %c0_19 = arith.constant 0 : index
    %c0_20 = arith.constant 0 : index
    %c0_21 = arith.constant 0 : index
    %17 = vector.load %arg8[%c0_19, %c0_20, %c0_21] : memref<4x1x8xf32, #tpu.memory_space<vmem>>, vector<4x1x8xf32>
    %18 = vector.broadcast %17 : vector<4x1x8xf32> to vector<4x8x8xf32>
    %19 = arith.addf %16, %18 : vector<4x8x8xf32>
    %20 = arith.truncf %9 : vector<4x8x8xf32> to vector<4x8x8xbf16>
    %21 = arith.truncf %14 : vector<4x8x8xf32> to vector<4x8x8xbf16>
    "tpu.trace_start"() <{level = 10 : i32, message = "hqd,hkd->hqk"}> : () -> ()
    %cst_22 = arith.constant dense<0.000000e+00> : vector<4x8x8xf32>
    %22 = tpu.matmul %20, %21, %cst_22 {dimension_numbers = #tpu.dot_dimension_numbers<[2], [2], [1], [1], [0, 0, 0, 1, 1, 1], [0], [0]>} : vector<4x8x8xbf16>, vector<4x8x8xbf16>, vector<4x8x8xf32> -> vector<4x8x8xf32>
    "tpu.trace_stop"() : () -> ()
    %cst_23 = arith.constant 0.353553385 : f32
    %23 = vector.broadcast %cst_23 : f32 to vector<4x8x8xf32>
    %24 = arith.mulf %22, %23 : vector<4x8x8xf32>
    %cst_24 = arith.constant dense<0xFF800000> : vector<4x8xf32>
    %25 = vector.multi_reduction <maximumf>, %24, %cst_24 [2] : vector<4x8x8xf32> to vector<4x8xf32>
    %26 = vector.shape_cast %25 : vector<4x8xf32> to vector<4x8x1xf32>
    %27 = vector.broadcast %26 : vector<4x8x1xf32> to vector<4x8x8xf32>
    %28 = arith.subf %24, %27 : vector<4x8x8xf32>
    %29 = math.exp %28 : vector<4x8x8xf32>
    %cst_25 = arith.constant dense<0.000000e+00> : vector<4x8xf32>
    %30 = vector.multi_reduction <add>, %29, %cst_25 [2] : vector<4x8x8xf32> to vector<4x8xf32>
    %31 = vector.shape_cast %30 : vector<4x8xf32> to vector<4x8x1xf32>
    %32 = tpu.reciprocal %31 {approx = true} : vector<4x8x1xf32> -> vector<4x8x1xf32>
    %33 = vector.broadcast %32 : vector<4x8x1xf32> to vector<4x8x8xf32>
    %34 = arith.mulf %29, %33 : vector<4x8x8xf32>
    %35 = arith.truncf %34 : vector<4x8x8xf32> to vector<4x8x8xbf16>
    %36 = arith.truncf %19 : vector<4x8x8xf32> to vector<4x8x8xbf16>
    "tpu.trace_start"() <{level = 10 : i32, message = "hqk,hkd->hqd"}> : () -> ()
    %cst_26 = arith.constant dense<0.000000e+00> : vector<4x8x8xf32>
    %37 = tpu.matmul %35, %36, %cst_26 {dimension_numbers = #tpu.dot_dimension_numbers<[2], [1], [1], [2], [0, 0, 0, 1, 1, 2], [0], [0]>} : vector<4x8x8xbf16>, vector<4x8x8xbf16>, vector<4x8x8xf32> -> vector<4x8x8xf32>
    "tpu.trace_stop"() : () -> ()
    %38 = arith.truncf %37 : vector<4x8x8xf32> to vector<4x8x8xbf16>
    %c0_27 = arith.constant 0 : index
    %c0_28 = arith.constant 0 : index
    %c0_29 = arith.constant 0 : index
    %39 = vector.load %arg9[%c0_27, %c0_28, %c0_29] : memref<4x8x32xbf16, #tpu.memory_space<vmem>>, vector<4x8x32xbf16>
    "tpu.trace_start"() <{level = 10 : i32, message = "hsd,hdk->hsk"}> : () -> ()
    %cst_30 = arith.constant dense<0.000000e+00> : vector<4x8x32xf32>
    %40 = tpu.matmul %38, %39, %cst_30 {dimension_numbers = #tpu.dot_dimension_numbers<[2], [1], [1], [2], [0, 0, 0, 1, 1, 2], [0], [0]>} : vector<4x8x8xbf16>, vector<4x8x32xbf16>, vector<4x8x32xf32> -> vector<4x8x32xf32>
    "tpu.trace_stop"() : () -> ()
    %cst_31 = arith.constant dense<0.000000e+00> : vector<8x32xf32>
    %41 = vector.multi_reduction <add>, %40, %cst_31 [0] : vector<4x8x32xf32> to vector<8x32xf32>
    %c0_32 = arith.constant 0 : index
    %c0_33 = arith.constant 0 : index
    %42 = vector.load %arg10[%c0_32, %c0_33] : memref<1x32xf32, #tpu.memory_space<vmem>>, vector<1x32xf32>
    %43 = vector.broadcast %42 : vector<1x32xf32> to vector<8x32xf32>
    %44 = arith.addf %41, %43 : vector<8x32xf32>
    %45 = arith.addf %44, %1 : vector<8x32xf32>
    %cst_34 = arith.constant dense<0.000000e+00> : vector<8xf32>
    %46 = vector.multi_reduction <add>, %45, %cst_34 [1] : vector<8x32xf32> to vector<8xf32>
    %47 = vector.shape_cast %46 : vector<8xf32> to vector<8x1xf32>
    %cst_35 = arith.constant 3.200000e+01 : f32
    %48 = vector.broadcast %cst_35 : f32 to vector<8x1xf32>
    %49 = arith.divf %47, %48 : vector<8x1xf32>
    %50 = vector.broadcast %49 : vector<8x1xf32> to vector<8x32xf32>
    %51 = arith.subf %45, %50 : vector<8x32xf32>
    %52 = arith.mulf %51, %51 : vector<8x32xf32>
    %cst_36 = arith.constant dense<0.000000e+00> : vector<8xf32>
    %53 = vector.multi_reduction <add>, %52, %cst_36 [1] : vector<8x32xf32> to vector<8xf32>
    %54 = vector.shape_cast %53 : vector<8xf32> to vector<8x1xf32>
    %cst_37 = arith.constant 3.200000e+01 : f32
    %55 = vector.broadcast %cst_37 : f32 to vector<8x1xf32>
    %56 = arith.divf %54, %55 : vector<8x1xf32>
    %57 = vector.broadcast %49 : vector<8x1xf32> to vector<8x32xf32>
    %58 = arith.subf %45, %57 : vector<8x32xf32>
    %cst_38 = arith.constant 9.99999996E-13 : f32
    %59 = vector.broadcast %cst_38 : f32 to vector<8x1xf32>
    %60 = arith.addf %56, %59 : vector<8x1xf32>
    %61 = math.rsqrt %60 : vector<8x1xf32>
    %62 = vector.broadcast %61 : vector<8x1xf32> to vector<8x32xf32>
    %63 = arith.mulf %58, %62 : vector<8x32xf32>
    %c0_39 = arith.constant 0 : index
    %c0_40 = arith.constant 0 : index
    %64 = vector.load %arg11[%c0_39, %c0_40] : memref<1x32xf32, #tpu.memory_space<vmem>>, vector<1x32xf32>
    %65 = vector.broadcast %64 : vector<1x32xf32> to vector<8x32xf32>
    %66 = arith.mulf %63, %65 : vector<8x32xf32>
    %c0_41 = arith.constant 0 : index
    %c0_42 = arith.constant 0 : index
    %67 = vector.load %arg12[%c0_41, %c0_42] : memref<1x32xf32, #tpu.memory_space<vmem>>, vector<1x32xf32>
    %68 = vector.broadcast %67 : vector<1x32xf32> to vector<8x32xf32>
    %69 = arith.addf %66, %68 : vector<8x32xf32>
    %70 = arith.truncf %69 : vector<8x32xf32> to vector<8x32xbf16>
    %c0_43 = arith.constant 0 : index
    %c0_44 = arith.constant 0 : index
    %71 = vector.load %arg13[%c0_43, %c0_44] : memref<32x128xbf16, #tpu.memory_space<vmem>>, vector<32x128xbf16>
    %cst_45 = arith.constant dense<0.000000e+00> : vector<8x128xf32>
    %72 = tpu.matmul %70, %71, %cst_45 {dimension_numbers = #tpu.dot_dimension_numbers<[1], [0], [0], [1], [0, 0, 1, 1], [], []>} : vector<8x32xbf16>, vector<32x128xbf16>, vector<8x128xf32> -> vector<8x128xf32>
    %c0_46 = arith.constant 0 : index
    %c0_47 = arith.constant 0 : index
    %73 = vector.load %arg14[%c0_46, %c0_47] : memref<1x128xf32, #tpu.memory_space<vmem>>, vector<1x128xf32>
    %74 = vector.broadcast %73 : vector<1x128xf32> to vector<8x128xf32>
    %75 = arith.addf %72, %74 : vector<8x128xf32>
    %cst_48 = arith.constant 5.000000e-01 : f32
    %76 = vector.broadcast %cst_48 : f32 to vector<8x128xf32>
    %77 = arith.mulf %76, %75 : vector<8x128xf32>
    %cst_49 = arith.constant 0.707106769 : f32
    %78 = vector.broadcast %cst_49 : f32 to vector<8x128xf32>
    %79 = arith.mulf %75, %78 : vector<8x128xf32>
    %cst_50 = arith.constant 0.000000e+00 : f32
    %80 = vector.broadcast %cst_50 : f32 to vector<8x128xf32>
    %81 = arith.cmpf olt, %79, %80 : vector<8x128xf32>
    %cst_51 = arith.constant -1.000000e+00 : f32
    %cst_52 = arith.constant 1.000000e+00 : f32
    %82 = vector.broadcast %cst_51 : f32 to vector<8x128xf32>
    %83 = vector.broadcast %cst_52 : f32 to vector<8x128xf32>
    %84 = arith.select %81, %82, %83 : vector<8x128xi1>, vector<8x128xf32>
    %85 = math.absf %79 : vector<8x128xf32>
    %cst_53 = arith.constant 0.327591091 : f32
    %86 = vector.broadcast %cst_53 : f32 to vector<8x128xf32>
    %87 = arith.mulf %86, %85 : vector<8x128xf32>
    %cst_54 = arith.constant 1.000000e+00 : f32
    %88 = vector.broadcast %cst_54 : f32 to vector<8x128xf32>
    %89 = arith.addf %88, %87 : vector<8x128xf32>
    %cst_55 = arith.constant 1.000000e+00 : f32
    %90 = vector.broadcast %cst_55 : f32 to vector<8x128xf32>
    %91 = arith.divf %90, %89 : vector<8x128xf32>
    %cst_56 = arith.constant 1.06140542 : f32
    %92 = vector.broadcast %cst_56 : f32 to vector<8x128xf32>
    %93 = arith.mulf %92, %91 : vector<8x128xf32>
    %cst_57 = arith.constant -1.45315206 : f32
    %94 = vector.broadcast %cst_57 : f32 to vector<8x128xf32>
    %95 = arith.addf %93, %94 : vector<8x128xf32>
    %96 = arith.mulf %95, %91 : vector<8x128xf32>
    %cst_58 = arith.constant 1.42141378 : f32
    %97 = vector.broadcast %cst_58 : f32 to vector<8x128xf32>
    %98 = arith.addf %96, %97 : vector<8x128xf32>
    %99 = arith.mulf %98, %91 : vector<8x128xf32>
    %cst_59 = arith.constant -0.284496725 : f32
    %100 = vector.broadcast %cst_59 : f32 to vector<8x128xf32>
    %101 = arith.addf %99, %100 : vector<8x128xf32>
    %102 = arith.mulf %101, %91 : vector<8x128xf32>
    %cst_60 = arith.constant 0.254829586 : f32
    %103 = vector.broadcast %cst_60 : f32 to vector<8x128xf32>
    %104 = arith.addf %102, %103 : vector<8x128xf32>
    %105 = arith.mulf %104, %91 : vector<8x128xf32>
    %cst_61 = arith.constant 0.000000e+00 : f32
    %106 = vector.broadcast %cst_61 : f32 to vector<8x128xf32>
    %107 = arith.subf %106, %85 : vector<8x128xf32>
    %108 = arith.mulf %107, %85 : vector<8x128xf32>
    %109 = math.exp %108 : vector<8x128xf32>
    %110 = arith.mulf %105, %109 : vector<8x128xf32>
    %cst_62 = arith.constant 1.000000e+00 : f32
    %111 = vector.broadcast %cst_62 : f32 to vector<8x128xf32>
    %112 = arith.subf %111, %110 : vector<8x128xf32>
    %113 = arith.mulf %84, %112 : vector<8x128xf32>
    %cst_63 = arith.constant 1.000000e+00 : f32
    %114 = vector.broadcast %cst_63 : f32 to vector<8x128xf32>
    %115 = arith.addf %114, %113 : vector<8x128xf32>
    %116 = arith.mulf %77, %115 : vector<8x128xf32>
    %cst_64 = arith.constant dense<0.000000e+00> : vector<8xf32>
    %117 = vector.multi_reduction <add>, %116, %cst_64 [1] : vector<8x128xf32> to vector<8xf32>
    %118 = vector.shape_cast %117 : vector<8xf32> to vector<8x1xf32>
    %cst_65 = arith.constant 1.280000e+02 : f32
    %119 = vector.broadcast %cst_65 : f32 to vector<8x1xf32>
    %120 = arith.divf %118, %119 : vector<8x1xf32>
    %121 = vector.broadcast %120 : vector<8x1xf32> to vector<8x128xf32>
    %122 = arith.subf %116, %121 : vector<8x128xf32>
    %123 = arith.mulf %122, %122 : vector<8x128xf32>
    %cst_66 = arith.constant dense<0.000000e+00> : vector<8xf32>
    %124 = vector.multi_reduction <add>, %123, %cst_66 [1] : vector<8x128xf32> to vector<8xf32>
    %125 = vector.shape_cast %124 : vector<8xf32> to vector<8x1xf32>
    %cst_67 = arith.constant 1.280000e+02 : f32
    %126 = vector.broadcast %cst_67 : f32 to vector<8x1xf32>
    %127 = arith.divf %125, %126 : vector<8x1xf32>
    %128 = vector.broadcast %120 : vector<8x1xf32> to vector<8x128xf32>
    %129 = arith.subf %116, %128 : vector<8x128xf32>
    %cst_68 = arith.constant 9.99999974E-6 : f32
    %130 = vector.broadcast %cst_68 : f32 to vector<8x1xf32>
    %131 = arith.addf %127, %130 : vector<8x1xf32>
    %132 = math.rsqrt %131 : vector<8x1xf32>
    %133 = vector.broadcast %132 : vector<8x1xf32> to vector<8x128xf32>
    %134 = arith.mulf %129, %133 : vector<8x128xf32>
    %135 = arith.truncf %134 : vector<8x128xf32> to vector<8x128xbf16>
    %c0_69 = arith.constant 0 : index
    %c0_70 = arith.constant 0 : index
    %136 = vector.load %arg15[%c0_69, %c0_70] : memref<128x64xbf16, #tpu.memory_space<vmem>>, vector<128x64xbf16>
    %cst_71 = arith.constant dense<0.000000e+00> : vector<8x64xf32>
    %137 = tpu.matmul %135, %136, %cst_71 {dimension_numbers = #tpu.dot_dimension_numbers<[1], [0], [0], [1], [0, 0, 1, 1], [], []>} : vector<8x128xbf16>, vector<128x64xbf16>, vector<8x64xf32> -> vector<8x64xf32>
    %c0_72 = arith.constant 0 : index
    %c0_73 = arith.constant 0 : index
    %138 = vector.load %arg16[%c0_72, %c0_73] : memref<1x64xf32, #tpu.memory_space<vmem>>, vector<1x64xf32>
    %139 = vector.broadcast %138 : vector<1x64xf32> to vector<8x64xf32>
    %140 = arith.addf %137, %139 : vector<8x64xf32>
    %c0_74 = arith.constant 0 : index
    %c0_75 = arith.constant 0 : index
    %c0_76 = arith.constant 0 : index
    %141 = vector.load %arg1[%c0_74, %c0_75, %c0_76] : memref<1x8x64xf32, #tpu.memory_space<vmem>>, vector<1x8x64xf32>
    %142 = vector.shape_cast %141 : vector<1x8x64xf32> to vector<8x64xf32>
    %cst_77 = arith.constant 1.000000e+00 : f32
    %143 = vector.broadcast %cst_77 : f32 to vector<8x64xf32>
    %144 = arith.mulf %140, %143 : vector<8x64xf32>
    %145 = arith.addf %142, %144 : vector<8x64xf32>
    %146 = vector.shape_cast %145 : vector<8x64xf32> to vector<1x8x64xf32>
    %c0_78 = arith.constant 0 : index
    %c0_79 = arith.constant 0 : index
    %c0_80 = arith.constant 0 : index
    %147 = vector.load %arg19[%c0_78, %c0_79, %c0_80] : memref<1x8x64xf32, #tpu.memory_space<vmem>>, vector<1x8x64xf32>
    tpu.vector_store %arg19[%c0_78, %c0_79, %c0_80], %146 {strides = array<i32>} : memref<1x8x64xf32, #tpu.memory_space<vmem>>, vector<1x8x64xf32>,
    %cst_81 = arith.constant dense<0.000000e+00> : vector<8xf32>
    %148 = vector.multi_reduction <add>, %145, %cst_81 [1] : vector<8x64xf32> to vector<8xf32>
    %149 = vector.shape_cast %148 : vector<8xf32> to vector<8x1xf32>
    %cst_82 = arith.constant 6.400000e+01 : f32
    %150 = vector.broadcast %cst_82 : f32 to vector<8x1xf32>
    %151 = arith.divf %149, %150 : vector<8x1xf32>
    %152 = vector.broadcast %151 : vector<8x1xf32> to vector<8x64xf32>
    %153 = arith.subf %145, %152 : vector<8x64xf32>
    %154 = arith.mulf %153, %153 : vector<8x64xf32>
    %cst_83 = arith.constant dense<0.000000e+00> : vector<8xf32>
    %155 = vector.multi_reduction <add>, %154, %cst_83 [1] : vector<8x64xf32> to vector<8xf32>
    %156 = vector.shape_cast %155 : vector<8xf32> to vector<8x1xf32>
    %cst_84 = arith.constant 6.400000e+01 : f32
    %157 = vector.broadcast %cst_84 : f32 to vector<8x1xf32>
    %158 = arith.divf %156, %157 : vector<8x1xf32>
    %159 = vector.broadcast %151 : vector<8x1xf32> to vector<8x64xf32>
    %160 = arith.subf %145, %159 : vector<8x64xf32>
    %cst_85 = arith.constant 9.99999974E-6 : f32
    %161 = vector.broadcast %cst_85 : f32 to vector<8x1xf32>
    %162 = arith.addf %158, %161 : vector<8x1xf32>
    %163 = math.rsqrt %162 : vector<8x1xf32>
    %164 = vector.broadcast %163 : vector<8x1xf32> to vector<8x64xf32>
    %165 = arith.mulf %160, %164 : vector<8x64xf32>
    %166 = arith.truncf %165 : vector<8x64xf32> to vector<8x64xbf16>
    %c0_86 = arith.constant 0 : index
    %c0_87 = arith.constant 0 : index
    %167 = vector.load %arg17[%c0_86, %c0_87] : memref<64x32xbf16, #tpu.memory_space<vmem>>, vector<64x32xbf16>
    %cst_88 = arith.constant dense<0.000000e+00> : vector<8x32xf32>
    %168 = tpu.matmul %166, %167, %cst_88 {dimension_numbers = #tpu.dot_dimension_numbers<[1], [0], [0], [1], [0, 0, 1, 1], [], []>} : vector<8x64xbf16>, vector<64x32xbf16>, vector<8x32xf32> -> vector<8x32xf32>
    %c0_89 = arith.constant 0 : index
    %c0_90 = arith.constant 0 : index
    %169 = vector.load %arg18[%c0_89, %c0_90] : memref<1x32xf32, #tpu.memory_space<vmem>>, vector<1x32xf32>
    %170 = vector.broadcast %169 : vector<1x32xf32> to vector<8x32xf32>
    %171 = arith.addf %168, %170 : vector<8x32xf32>
    %cst_91 = arith.constant 1.000000e+00 : f32
    %172 = vector.broadcast %cst_91 : f32 to vector<8x32xf32>
    %173 = arith.mulf %171, %172 : vector<8x32xf32>
    %174 = arith.addf %1, %173 : vector<8x32xf32>
    %175 = vector.shape_cast %174 : vector<8x32xf32> to vector<1x8x32xf32>
    %c0_92 = arith.constant 0 : index
    %c0_93 = arith.constant 0 : index
    %c0_94 = arith.constant 0 : index
    %176 = vector.load %arg20[%c0_92, %c0_93, %c0_94] : memref<1x8x32xf32, #tpu.memory_space<vmem>>, vector<1x8x32xf32>
    tpu.vector_store %arg20[%c0_92, %c0_93, %c0_94], %175 {strides = array<i32>} : memref<1x8x32xf32, #tpu.memory_space<vmem>>, vector<1x8x32xf32>,
    return
  }
  func.func @transform_0(%arg0: i32) -> (i32, i32, i32) {
    %c0_i32 = arith.constant 0 : i32
    %c0_i32_0 = arith.constant 0 : i32
    %c0_i32_1 = arith.constant 0 : i32
    return %arg0, %c0_i32, %c0_i32_0 : i32, i32, i32
  }
  func.func @transform_1(%arg0: i32) -> (i32, i32, i32) {
    %c0_i32 = arith.constant 0 : i32
    %c0_i32_0 = arith.constant 0 : i32
    %c0_i32_1 = arith.constant 0 : i32
    return %arg0, %c0_i32, %c0_i32_0 : i32, i32, i32
  }
  func.func @transform_2(%arg0: i32) -> (i32, i32, i32) {
    %c0_i32 = arith.constant 0 : i32
    %c0_i32_0 = arith.constant 0 : i32
    %c0_i32_1 = arith.constant 0 : i32
    %c0_i32_2 = arith.constant 0 : i32
    return %c0_i32, %c0_i32_0, %c0_i32_1 : i32, i32, i32
  }
  func.func @transform_3(%arg0: i32) -> (i32, i32, i32) {
    %c0_i32 = arith.constant 0 : i32
    %c0_i32_0 = arith.constant 0 : i32
    %c0_i32_1 = arith.constant 0 : i32
    %c0_i32_2 = arith.constant 0 : i32
    return %c0_i32, %c0_i32_0, %c0_i32_1 : i32, i32, i32
  }
  func.func @transform_4(%arg0: i32) -> (i32, i32, i32) {
    %c0_i32 = arith.constant 0 : i32
    %c0_i32_0 = arith.constant 0 : i32
    %c0_i32_1 = arith.constant 0 : i32
    %c0_i32_2 = arith.constant 0 : i32
    return %c0_i32, %c0_i32_0, %c0_i32_1 : i32, i32, i32
  }
  func.func @transform_5(%arg0: i32) -> (i32, i32, i32) {
    %c0_i32 = arith.constant 0 : i32
    %c0_i32_0 = arith.constant 0 : i32
    %c0_i32_1 = arith.constant 0 : i32
    %c0_i32_2 = arith.constant 0 : i32
    return %c0_i32, %c0_i32_0, %c0_i32_1 : i32, i32, i32
  }
  func.func @transform_6(%arg0: i32) -> (i32, i32, i32) {
    %c0_i32 = arith.constant 0 : i32
    %c0_i32_0 = arith.constant 0 : i32
    %c0_i32_1 = arith.constant 0 : i32
    %c0_i32_2 = arith.constant 0 : i32
    return %c0_i32, %c0_i32_0, %c0_i32_1 : i32, i32, i32
  }
  func.func @transform_7(%arg0: i32) -> (i32, i32, i32) {
    %c0_i32 = arith.constant 0 : i32
    %c0_i32_0 = arith.constant 0 : i32
    %c0_i32_1 = arith.constant 0 : i32
    %c0_i32_2 = arith.constant 0 : i32
    return %c0_i32, %c0_i32_0, %c0_i32_1 : i32, i32, i32
  }
  func.func @transform_8(%arg0: i32) -> (i32, i32, i32) {
    %c0_i32 = arith.constant 0 : i32
    %c0_i32_0 = arith.constant 0 : i32
    %c0_i32_1 = arith.constant 0 : i32
    %c0_i32_2 = arith.constant 0 : i32
    return %c0_i32, %c0_i32_0, %c0_i32_1 : i32, i32, i32
  }
  func.func @transform_9(%arg0: i32) -> (i32, i32) {
    %c0_i32 = arith.constant 0 : i32
    %c0_i32_0 = arith.constant 0 : i32
    %c0_i32_1 = arith.constant 0 : i32
    return %c0_i32, %c0_i32_0 : i32, i32
  }
  func.func @transform_10(%arg0: i32) -> (i32, i32) {
    %c0_i32 = arith.constant 0 : i32
    %c0_i32_0 = arith.constant 0 : i32
    %c0_i32_1 = arith.constant 0 : i32
    return %c0_i32, %c0_i32_0 : i32, i32
  }
  func.func @transform_11(%arg0: i32) -> (i32, i32) {
    %c0_i32 = arith.constant 0 : i32
    %c0_i32_0 = arith.constant 0 : i32
    %c0_i32_1 = arith.constant 0 : i32
    return %c0_i32, %c0_i32_0 : i32, i32
  }
  func.func @transform_12(%arg0: i32) -> (i32, i32) {
    %c0_i32 = arith.constant 0 : i32
    %c0_i32_0 = arith.constant 0 : i32
    %c0_i32_1 = arith.constant 0 : i32
    return %c0_i32, %c0_i32_0 : i32, i32
  }
  func.func @transform_13(%arg0: i32) -> (i32, i32) {
    %c0_i32 = arith.constant 0 : i32
    %c0_i32_0 = arith.constant 0 : i32
    %c0_i32_1 = arith.constant 0 : i32
    return %c0_i32, %c0_i32_0 : i32, i32
  }
  func.func @transform_14(%arg0: i32) -> (i32, i32) {
    %c0_i32 = arith.constant 0 : i32
    %c0_i32_0 = arith.constant 0 : i32
    %c0_i32_1 = arith.constant 0 : i32
    return %c0_i32, %c0_i32_0 : i32, i32
  }
  func.func @transform_15(%arg0: i32) -> (i32, i32) {
    %c0_i32 = arith.constant 0 : i32
    %c0_i32_0 = arith.constant 0 : i32
    %c0_i32_1 = arith.constant 0 : i32
    return %c0_i32, %c0_i32_0 : i32, i32
  }
  func.func @transform_16(%arg0: i32) -> (i32, i32) {
    %c0_i32 = arith.constant 0 : i32
    %c0_i32_0 = arith.constant 0 : i32
    %c0_i32_1 = arith.constant 0 : i32
    return %c0_i32, %c0_i32_0 : i32, i32
  }
  func.func @transform_17(%arg0: i32) -> (i32, i32) {
    %c0_i32 = arith.constant 0 : i32
    %c0_i32_0 = arith.constant 0 : i32
    %c0_i32_1 = arith.constant 0 : i32
    return %c0_i32, %c0_i32_0 : i32, i32
  }
  func.func @transform_18(%arg0: i32) -> (i32, i32, i32) {
    %c0_i32 = arith.constant 0 : i32
    %c0_i32_0 = arith.constant 0 : i32
    %c0_i32_1 = arith.constant 0 : i32
    return %arg0, %c0_i32, %c0_i32_0 : i32, i32, i32
  }
  func.func @transform_19(%arg0: i32) -> (i32, i32, i32) {
    %c0_i32 = arith.constant 0 : i32
    %c0_i32_0 = arith.constant 0 : i32
    %c0_i32_1 = arith.constant 0 : i32
    return %arg0, %c0_i32, %c0_i32_0 : i32, i32, i32
  }
}

module attributes {stable_mosaic.version = 11 : i64} {
  func.func @_fused_layer_kernel(%arg0: i32, %arg1: memref<1x8x64xf32, #tpu.memory_space<vmem>>, %arg2: memref<1x8x32xf32, #tpu.memory_space<vmem>>, %arg3: memref<4x32x8xbf16, #tpu.memory_space<vmem>>, %arg4: memref<4x32x8xbf16, #tpu.memory_space<vmem>>, %arg5: memref<4x32x8xbf16, #tpu.memory_space<vmem>>, %arg6: memref<4x1x8xf32, #tpu.memory_space<vmem>>, %arg7: memref<4x1x8xf32, #tpu.memory_space<vmem>>, %arg8: memref<4x1x8xf32, #tpu.memory_space<vmem>>, %arg9: memref<4x8x32xbf16, #tpu.memory_space<vmem>>, %arg10: memref<1x32xf32, #tpu.memory_space<vmem>>, %arg11: memref<1x32xf32, #tpu.memory_space<vmem>>, %arg12: memref<1x32xf32, #tpu.memory_space<vmem>>, %arg13: memref<32x128xbf16, #tpu.memory_space<vmem>>, %arg14: memref<1x128xf32, #tpu.memory_space<vmem>>, %arg15: memref<128x64xbf16, #tpu.memory_space<vmem>>, %arg16: memref<1x64xf32, #tpu.memory_space<vmem>>, %arg17: memref<1x8x64xf32, #tpu.memory_space<vmem>>) attributes {dimension_semantics = [#tpu.dimension_semantics<parallel>], iteration_bounds = array<i64: 2>, scalar_prefetch = 0 : i64, scratch_operands = 0 : i64, tpu.core_type = #tpu.core_type<tc>, window_params = [{transform_indices = @transform_0, window_bounds = array<i64: 1, 8, 64>}, {transform_indices = @transform_1, window_bounds = array<i64: 1, 8, 32>}, {pipeline_mode = #tpu.pipeline_mode<synchronous>, transform_indices = @transform_2, window_bounds = array<i64: 4, 32, 8>}, {pipeline_mode = #tpu.pipeline_mode<synchronous>, transform_indices = @transform_3, window_bounds = array<i64: 4, 32, 8>}, {pipeline_mode = #tpu.pipeline_mode<synchronous>, transform_indices = @transform_4, window_bounds = array<i64: 4, 32, 8>}, {pipeline_mode = #tpu.pipeline_mode<synchronous>, transform_indices = @transform_5, window_bounds = array<i64: 4, 1, 8>}, {pipeline_mode = #tpu.pipeline_mode<synchronous>, transform_indices = @transform_6, window_bounds = array<i64: 4, 1, 8>}, {pipeline_mode = #tpu.pipeline_mode<synchronous>, transform_indices = @transform_7, window_bounds = array<i64: 4, 1, 8>}, {pipeline_mode = #tpu.pipeline_mode<synchronous>, transform_indices = @transform_8, window_bounds = array<i64: 4, 8, 32>}, {pipeline_mode = #tpu.pipeline_mode<synchronous>, transform_indices = @transform_9, window_bounds = array<i64: 1, 32>}, {pipeline_mode = #tpu.pipeline_mode<synchronous>, transform_indices = @transform_10, window_bounds = array<i64: 1, 32>}, {pipeline_mode = #tpu.pipeline_mode<synchronous>, transform_indices = @transform_11, window_bounds = array<i64: 1, 32>}, {pipeline_mode = #tpu.pipeline_mode<synchronous>, transform_indices = @transform_12, window_bounds = array<i64: 32, 128>}, {pipeline_mode = #tpu.pipeline_mode<synchronous>, transform_indices = @transform_13, window_bounds = array<i64: 1, 128>}, {pipeline_mode = #tpu.pipeline_mode<synchronous>, transform_indices = @transform_14, window_bounds = array<i64: 128, 64>}, {pipeline_mode = #tpu.pipeline_mode<synchronous>, transform_indices = @transform_15, window_bounds = array<i64: 1, 64>}, {transform_indices = @transform_16, window_bounds = array<i64: 1, 8, 64>}]} {
    %c0 = arith.constant 0 : index
    %c0_0 = arith.constant 0 : index
    %c0_1 = arith.constant 0 : index
    %0 = vector.load %arg2[%c0, %c0_0, %c0_1] : memref<1x8x32xf32, #tpu.memory_space<vmem>>, vector<1x8x32xf32>
    %1 = vector.shape_cast %0 : vector<1x8x32xf32> to vector<8x32xf32>
    %2 = vector.shape_cast %1 : vector<8x32xf32> to vector<1x8x32xf32>
    %3 = vector.broadcast %2 : vector<1x8x32xf32> to vector<4x8x32xf32>
    %4 = arith.truncf %3 : vector<4x8x32xf32> to vector<4x8x32xbf16>
    %c0_2 = arith.constant 0 : index
    %c0_3 = arith.constant 0 : index
    %c0_4 = arith.constant 0 : index
    %5 = vector.load %arg3[%c0_2, %c0_3, %c0_4] : memref<4x32x8xbf16, #tpu.memory_space<vmem>>, vector<4x32x8xbf16>
    "tpu.trace_start"() <{level = 10 : i32, message = "hsk,hkd->hsd"}> : () -> ()
    %cst = arith.constant dense<0.000000e+00> : vector<4x8x8xf32>
    %6 = tpu.matmul %4, %5, %cst {dimension_numbers = #tpu.dot_dimension_numbers<[2], [1], [1], [2], [0, 0, 0, 1, 1, 2], [0], [0]>} : vector<4x8x32xbf16>, vector<4x32x8xbf16>, vector<4x8x8xf32> -> vector<4x8x8xf32>
    "tpu.trace_stop"() : () -> ()
    %c0_5 = arith.constant 0 : index
    %c0_6 = arith.constant 0 : index
    %c0_7 = arith.constant 0 : index
    %7 = vector.load %arg6[%c0_5, %c0_6, %c0_7] : memref<4x1x8xf32, #tpu.memory_space<vmem>>, vector<4x1x8xf32>
    %8 = vector.broadcast %7 : vector<4x1x8xf32> to vector<4x8x8xf32>
    %9 = arith.addf %6, %8 : vector<4x8x8xf32>
    %c0_8 = arith.constant 0 : index
    %c0_9 = arith.constant 0 : index
    %c0_10 = arith.constant 0 : index
    %10 = vector.load %arg4[%c0_8, %c0_9, %c0_10] : memref<4x32x8xbf16, #tpu.memory_space<vmem>>, vector<4x32x8xbf16>
    "tpu.trace_start"() <{level = 10 : i32, message = "hsk,hkd->hsd"}> : () -> ()
    %cst_11 = arith.constant dense<0.000000e+00> : vector<4x8x8xf32>
    %11 = tpu.matmul %4, %10, %cst_11 {dimension_numbers = #tpu.dot_dimension_numbers<[2], [1], [1], [2], [0, 0, 0, 1, 1, 2], [0], [0]>} : vector<4x8x32xbf16>, vector<4x32x8xbf16>, vector<4x8x8xf32> -> vector<4x8x8xf32>
    "tpu.trace_stop"() : () -> ()
    %c0_12 = arith.constant 0 : index
    %c0_13 = arith.constant 0 : index
    %c0_14 = arith.constant 0 : index
    %12 = vector.load %arg7[%c0_12, %c0_13, %c0_14] : memref<4x1x8xf32, #tpu.memory_space<vmem>>, vector<4x1x8xf32>
    %13 = vector.broadcast %12 : vector<4x1x8xf32> to vector<4x8x8xf32>
    %14 = arith.addf %11, %13 : vector<4x8x8xf32>
    %c0_15 = arith.constant 0 : index
    %c0_16 = arith.constant 0 : index
    %c0_17 = arith.constant 0 : index
    %15 = vector.load %arg5[%c0_15, %c0_16, %c0_17] : memref<4x32x8xbf16, #tpu.memory_space<vmem>>, vector<4x32x8xbf16>
    "tpu.trace_start"() <{level = 10 : i32, message = "hsk,hkd->hsd"}> : () -> ()
    %cst_18 = arith.constant dense<0.000000e+00> : vector<4x8x8xf32>
    %16 = tpu.matmul %4, %15, %cst_18 {dimension_numbers = #tpu.dot_dimension_numbers<[2], [1], [1], [2], [0, 0, 0, 1, 1, 2], [0], [0]>} : vector<4x8x32xbf16>, vector<4x32x8xbf16>, vector<4x8x8xf32> -> vector<4x8x8xf32>
    "tpu.trace_stop"() : () -> ()
    %c0_19 = arith.constant 0 : index
    %c0_20 = arith.constant 0 : index
    %c0_21 = arith.constant 0 : index
    %17 = vector.load %arg8[%c0_19, %c0_20, %c0_21] : memref<4x1x8xf32, #tpu.memory_space<vmem>>, vector<4x1x8xf32>
    %18 = vector.broadcast %17 : vector<4x1x8xf32> to vector<4x8x8xf32>
    %19 = arith.addf %16, %18 : vector<4x8x8xf32>
    %20 = arith.truncf %9 : vector<4x8x8xf32> to vector<4x8x8xbf16>
    %21 = arith.truncf %14 : vector<4x8x8xf32> to vector<4x8x8xbf16>
    "tpu.trace_start"() <{level = 10 : i32, message = "hqd,hkd->hqk"}> : () -> ()
    %cst_22 = arith.constant dense<0.000000e+00> : vector<4x8x8xf32>
    %22 = tpu.matmul %20, %21, %cst_22 {dimension_numbers = #tpu.dot_dimension_numbers<[2], [2], [1], [1], [0, 0, 0, 1, 1, 1], [0], [0]>} : vector<4x8x8xbf16>, vector<4x8x8xbf16>, vector<4x8x8xf32> -> vector<4x8x8xf32>
    "tpu.trace_stop"() : () -> ()
    %cst_23 = arith.constant 0.353553385 : f32
    %23 = vector.broadcast %cst_23 : f32 to vector<4x8x8xf32>
    %24 = arith.mulf %22, %23 : vector<4x8x8xf32>
    %cst_24 = arith.constant dense<0xFF800000> : vector<4x8xf32>
    %25 = vector.multi_reduction <maximumf>, %24, %cst_24 [2] : vector<4x8x8xf32> to vector<4x8xf32>
    %26 = vector.shape_cast %25 : vector<4x8xf32> to vector<4x8x1xf32>
    %27 = vector.broadcast %26 : vector<4x8x1xf32> to vector<4x8x8xf32>
    %28 = arith.subf %24, %27 : vector<4x8x8xf32>
    %29 = math.exp %28 : vector<4x8x8xf32>
    %cst_25 = arith.constant dense<0.000000e+00> : vector<4x8xf32>
    %30 = vector.multi_reduction <add>, %29, %cst_25 [2] : vector<4x8x8xf32> to vector<4x8xf32>
    %31 = vector.shape_cast %30 : vector<4x8xf32> to vector<4x8x1xf32>
    %32 = tpu.reciprocal %31 {approx = true} : vector<4x8x1xf32> -> vector<4x8x1xf32>
    %33 = vector.broadcast %32 : vector<4x8x1xf32> to vector<4x8x8xf32>
    %34 = arith.mulf %29, %33 : vector<4x8x8xf32>
    %35 = arith.truncf %34 : vector<4x8x8xf32> to vector<4x8x8xbf16>
    %36 = arith.truncf %19 : vector<4x8x8xf32> to vector<4x8x8xbf16>
    "tpu.trace_start"() <{level = 10 : i32, message = "hqk,hkd->hqd"}> : () -> ()
    %cst_26 = arith.constant dense<0.000000e+00> : vector<4x8x8xf32>
    %37 = tpu.matmul %35, %36, %cst_26 {dimension_numbers = #tpu.dot_dimension_numbers<[2], [1], [1], [2], [0, 0, 0, 1, 1, 2], [0], [0]>} : vector<4x8x8xbf16>, vector<4x8x8xbf16>, vector<4x8x8xf32> -> vector<4x8x8xf32>
    "tpu.trace_stop"() : () -> ()
    %38 = arith.truncf %37 : vector<4x8x8xf32> to vector<4x8x8xbf16>
    %c0_27 = arith.constant 0 : index
    %c0_28 = arith.constant 0 : index
    %c0_29 = arith.constant 0 : index
    %39 = vector.load %arg9[%c0_27, %c0_28, %c0_29] : memref<4x8x32xbf16, #tpu.memory_space<vmem>>, vector<4x8x32xbf16>
    "tpu.trace_start"() <{level = 10 : i32, message = "hsd,hdk->hsk"}> : () -> ()
    %cst_30 = arith.constant dense<0.000000e+00> : vector<4x8x32xf32>
    %40 = tpu.matmul %38, %39, %cst_30 {dimension_numbers = #tpu.dot_dimension_numbers<[2], [1], [1], [2], [0, 0, 0, 1, 1, 2], [0], [0]>} : vector<4x8x8xbf16>, vector<4x8x32xbf16>, vector<4x8x32xf32> -> vector<4x8x32xf32>
    "tpu.trace_stop"() : () -> ()
    %cst_31 = arith.constant dense<0.000000e+00> : vector<8x32xf32>
    %41 = vector.multi_reduction <add>, %40, %cst_31 [0] : vector<4x8x32xf32> to vector<8x32xf32>
    %c0_32 = arith.constant 0 : index
    %c0_33 = arith.constant 0 : index
    %42 = vector.load %arg10[%c0_32, %c0_33] : memref<1x32xf32, #tpu.memory_space<vmem>>, vector<1x32xf32>
    %43 = vector.broadcast %42 : vector<1x32xf32> to vector<8x32xf32>
    %44 = arith.addf %41, %43 : vector<8x32xf32>
    %45 = arith.addf %44, %1 : vector<8x32xf32>
    %cst_34 = arith.constant dense<0.000000e+00> : vector<8xf32>
    %46 = vector.multi_reduction <add>, %45, %cst_34 [1] : vector<8x32xf32> to vector<8xf32>
    %47 = vector.shape_cast %46 : vector<8xf32> to vector<8x1xf32>
    %cst_35 = arith.constant 3.200000e+01 : f32
    %48 = vector.broadcast %cst_35 : f32 to vector<8x1xf32>
    %49 = arith.divf %47, %48 : vector<8x1xf32>
    %50 = vector.broadcast %49 : vector<8x1xf32> to vector<8x32xf32>
    %51 = arith.subf %45, %50 : vector<8x32xf32>
    %52 = arith.mulf %51, %51 : vector<8x32xf32>
    %cst_36 = arith.constant dense<0.000000e+00> : vector<8xf32>
    %53 = vector.multi_reduction <add>, %52, %cst_36 [1] : vector<8x32xf32> to vector<8xf32>
    %54 = vector.shape_cast %53 : vector<8xf32> to vector<8x1xf32>
    %cst_37 = arith.constant 3.200000e+01 : f32
    %55 = vector.broadcast %cst_37 : f32 to vector<8x1xf32>
    %56 = arith.divf %54, %55 : vector<8x1xf32>
    %57 = vector.broadcast %49 : vector<8x1xf32> to vector<8x32xf32>
    %58 = arith.subf %45, %57 : vector<8x32xf32>
    %cst_38 = arith.constant 9.99999996E-13 : f32
    %59 = vector.broadcast %cst_38 : f32 to vector<8x1xf32>
    %60 = arith.addf %56, %59 : vector<8x1xf32>
    %61 = math.rsqrt %60 : vector<8x1xf32>
    %62 = vector.broadcast %61 : vector<8x1xf32> to vector<8x32xf32>
    %63 = arith.mulf %58, %62 : vector<8x32xf32>
    %c0_39 = arith.constant 0 : index
    %c0_40 = arith.constant 0 : index
    %64 = vector.load %arg11[%c0_39, %c0_40] : memref<1x32xf32, #tpu.memory_space<vmem>>, vector<1x32xf32>
    %65 = vector.broadcast %64 : vector<1x32xf32> to vector<8x32xf32>
    %66 = arith.mulf %63, %65 : vector<8x32xf32>
    %c0_41 = arith.constant 0 : index
    %c0_42 = arith.constant 0 : index
    %67 = vector.load %arg12[%c0_41, %c0_42] : memref<1x32xf32, #tpu.memory_space<vmem>>, vector<1x32xf32>
    %68 = vector.broadcast %67 : vector<1x32xf32> to vector<8x32xf32>
    %69 = arith.addf %66, %68 : vector<8x32xf32>
    %70 = arith.truncf %69 : vector<8x32xf32> to vector<8x32xbf16>
    %c0_43 = arith.constant 0 : index
    %c0_44 = arith.constant 0 : index
    %71 = vector.load %arg13[%c0_43, %c0_44] : memref<32x128xbf16, #tpu.memory_space<vmem>>, vector<32x128xbf16>
    %cst_45 = arith.constant dense<0.000000e+00> : vector<8x128xf32>
    %72 = tpu.matmul %70, %71, %cst_45 {dimension_numbers = #tpu.dot_dimension_numbers<[1], [0], [0], [1], [0, 0, 1, 1], [], []>} : vector<8x32xbf16>, vector<32x128xbf16>, vector<8x128xf32> -> vector<8x128xf32>
    %c0_46 = arith.constant 0 : index
    %c0_47 = arith.constant 0 : index
    %73 = vector.load %arg14[%c0_46, %c0_47] : memref<1x128xf32, #tpu.memory_space<vmem>>, vector<1x128xf32>
    %74 = vector.broadcast %73 : vector<1x128xf32> to vector<8x128xf32>
    %75 = arith.addf %72, %74 : vector<8x128xf32>
    %cst_48 = arith.constant 5.000000e-01 : f32
    %76 = vector.broadcast %cst_48 : f32 to vector<8x128xf32>
    %77 = arith.mulf %76, %75 : vector<8x128xf32>
    %cst_49 = arith.constant 0.707106769 : f32
    %78 = vector.broadcast %cst_49 : f32 to vector<8x128xf32>
    %79 = arith.mulf %75, %78 : vector<8x128xf32>
    %cst_50 = arith.constant 0.000000e+00 : f32
    %80 = vector.broadcast %cst_50 : f32 to vector<8x128xf32>
    %81 = arith.cmpf olt, %79, %80 : vector<8x128xf32>
    %cst_51 = arith.constant -1.000000e+00 : f32
    %cst_52 = arith.constant 1.000000e+00 : f32
    %82 = vector.broadcast %cst_51 : f32 to vector<8x128xf32>
    %83 = vector.broadcast %cst_52 : f32 to vector<8x128xf32>
    %84 = arith.select %81, %82, %83 : vector<8x128xi1>, vector<8x128xf32>
    %85 = math.absf %79 : vector<8x128xf32>
    %cst_53 = arith.constant 0.327591091 : f32
    %86 = vector.broadcast %cst_53 : f32 to vector<8x128xf32>
    %87 = arith.mulf %86, %85 : vector<8x128xf32>
    %cst_54 = arith.constant 1.000000e+00 : f32
    %88 = vector.broadcast %cst_54 : f32 to vector<8x128xf32>
    %89 = arith.addf %88, %87 : vector<8x128xf32>
    %cst_55 = arith.constant 1.000000e+00 : f32
    %90 = vector.broadcast %cst_55 : f32 to vector<8x128xf32>
    %91 = arith.divf %90, %89 : vector<8x128xf32>
    %cst_56 = arith.constant 1.06140542 : f32
    %92 = vector.broadcast %cst_56 : f32 to vector<8x128xf32>
    %93 = arith.mulf %92, %91 : vector<8x128xf32>
    %cst_57 = arith.constant -1.45315206 : f32
    %94 = vector.broadcast %cst_57 : f32 to vector<8x128xf32>
    %95 = arith.addf %93, %94 : vector<8x128xf32>
    %96 = arith.mulf %95, %91 : vector<8x128xf32>
    %cst_58 = arith.constant 1.42141378 : f32
    %97 = vector.broadcast %cst_58 : f32 to vector<8x128xf32>
    %98 = arith.addf %96, %97 : vector<8x128xf32>
    %99 = arith.mulf %98, %91 : vector<8x128xf32>
    %cst_59 = arith.constant -0.284496725 : f32
    %100 = vector.broadcast %cst_59 : f32 to vector<8x128xf32>
    %101 = arith.addf %99, %100 : vector<8x128xf32>
    %102 = arith.mulf %101, %91 : vector<8x128xf32>
    %cst_60 = arith.constant 0.254829586 : f32
    %103 = vector.broadcast %cst_60 : f32 to vector<8x128xf32>
    %104 = arith.addf %102, %103 : vector<8x128xf32>
    %105 = arith.mulf %104, %91 : vector<8x128xf32>
    %cst_61 = arith.constant 0.000000e+00 : f32
    %106 = vector.broadcast %cst_61 : f32 to vector<8x128xf32>
    %107 = arith.subf %106, %85 : vector<8x128xf32>
    %108 = arith.mulf %107, %85 : vector<8x128xf32>
    %109 = math.exp %108 : vector<8x128xf32>
    %110 = arith.mulf %105, %109 : vector<8x128xf32>
    %cst_62 = arith.constant 1.000000e+00 : f32
    %111 = vector.broadcast %cst_62 : f32 to vector<8x128xf32>
    %112 = arith.subf %111, %110 : vector<8x128xf32>
    %113 = arith.mulf %84, %112 : vector<8x128xf32>
    %cst_63 = arith.constant 1.000000e+00 : f32
    %114 = vector.broadcast %cst_63 : f32 to vector<8x128xf32>
    %115 = arith.addf %114, %113 : vector<8x128xf32>
    %116 = arith.mulf %77, %115 : vector<8x128xf32>
    %cst_64 = arith.constant dense<0.000000e+00> : vector<8xf32>
    %117 = vector.multi_reduction <add>, %116, %cst_64 [1] : vector<8x128xf32> to vector<8xf32>
    %118 = vector.shape_cast %117 : vector<8xf32> to vector<8x1xf32>
    %cst_65 = arith.constant 1.280000e+02 : f32
    %119 = vector.broadcast %cst_65 : f32 to vector<8x1xf32>
    %120 = arith.divf %118, %119 : vector<8x1xf32>
    %121 = vector.broadcast %120 : vector<8x1xf32> to vector<8x128xf32>
    %122 = arith.subf %116, %121 : vector<8x128xf32>
    %123 = arith.mulf %122, %122 : vector<8x128xf32>
    %cst_66 = arith.constant dense<0.000000e+00> : vector<8xf32>
    %124 = vector.multi_reduction <add>, %123, %cst_66 [1] : vector<8x128xf32> to vector<8xf32>
    %125 = vector.shape_cast %124 : vector<8xf32> to vector<8x1xf32>
    %cst_67 = arith.constant 1.280000e+02 : f32
    %126 = vector.broadcast %cst_67 : f32 to vector<8x1xf32>
    %127 = arith.divf %125, %126 : vector<8x1xf32>
    %128 = vector.broadcast %120 : vector<8x1xf32> to vector<8x128xf32>
    %129 = arith.subf %116, %128 : vector<8x128xf32>
    %cst_68 = arith.constant 9.99999974E-6 : f32
    %130 = vector.broadcast %cst_68 : f32 to vector<8x1xf32>
    %131 = arith.addf %127, %130 : vector<8x1xf32>
    %132 = math.rsqrt %131 : vector<8x1xf32>
    %133 = vector.broadcast %132 : vector<8x1xf32> to vector<8x128xf32>
    %134 = arith.mulf %129, %133 : vector<8x128xf32>
    %135 = arith.truncf %134 : vector<8x128xf32> to vector<8x128xbf16>
    %c0_69 = arith.constant 0 : index
    %c0_70 = arith.constant 0 : index
    %136 = vector.load %arg15[%c0_69, %c0_70] : memref<128x64xbf16, #tpu.memory_space<vmem>>, vector<128x64xbf16>
    %cst_71 = arith.constant dense<0.000000e+00> : vector<8x64xf32>
    %137 = tpu.matmul %135, %136, %cst_71 {dimension_numbers = #tpu.dot_dimension_numbers<[1], [0], [0], [1], [0, 0, 1, 1], [], []>} : vector<8x128xbf16>, vector<128x64xbf16>, vector<8x64xf32> -> vector<8x64xf32>
    %c0_72 = arith.constant 0 : index
    %c0_73 = arith.constant 0 : index
    %138 = vector.load %arg16[%c0_72, %c0_73] : memref<1x64xf32, #tpu.memory_space<vmem>>, vector<1x64xf32>
    %139 = vector.broadcast %138 : vector<1x64xf32> to vector<8x64xf32>
    %140 = arith.addf %137, %139 : vector<8x64xf32>
    %c0_74 = arith.constant 0 : index
    %c0_75 = arith.constant 0 : index
    %c0_76 = arith.constant 0 : index
    %141 = vector.load %arg1[%c0_74, %c0_75, %c0_76] : memref<1x8x64xf32, #tpu.memory_space<vmem>>, vector<1x8x64xf32>
    %142 = vector.shape_cast %141 : vector<1x8x64xf32> to vector<8x64xf32>
    %cst_77 = arith.constant 1.000000e+00 : f32
    %143 = vector.broadcast %cst_77 : f32 to vector<8x64xf32>
    %144 = arith.mulf %140, %143 : vector<8x64xf32>
    %145 = arith.addf %142, %144 : vector<8x64xf32>
    %146 = vector.shape_cast %145 : vector<8x64xf32> to vector<1x8x64xf32>
    %c0_78 = arith.constant 0 : index
    %c0_79 = arith.constant 0 : index
    %c0_80 = arith.constant 0 : index
    %147 = vector.load %arg17[%c0_78, %c0_79, %c0_80] : memref<1x8x64xf32, #tpu.memory_space<vmem>>, vector<1x8x64xf32>
    tpu.vector_store %arg17[%c0_78, %c0_79, %c0_80], %146 {strides = array<i32>} : memref<1x8x64xf32, #tpu.memory_space<vmem>>, vector<1x8x64xf32>,
    return
  }
  func.func @transform_0(%arg0: i32) -> (i32, i32, i32) {
    %c0_i32 = arith.constant 0 : i32
    %c0_i32_0 = arith.constant 0 : i32
    %c0_i32_1 = arith.constant 0 : i32
    return %arg0, %c0_i32, %c0_i32_0 : i32, i32, i32
  }
  func.func @transform_1(%arg0: i32) -> (i32, i32, i32) {
    %c0_i32 = arith.constant 0 : i32
    %c0_i32_0 = arith.constant 0 : i32
    %c0_i32_1 = arith.constant 0 : i32
    return %arg0, %c0_i32, %c0_i32_0 : i32, i32, i32
  }
  func.func @transform_2(%arg0: i32) -> (i32, i32, i32) {
    %c0_i32 = arith.constant 0 : i32
    %c0_i32_0 = arith.constant 0 : i32
    %c0_i32_1 = arith.constant 0 : i32
    %c0_i32_2 = arith.constant 0 : i32
    return %c0_i32, %c0_i32_0, %c0_i32_1 : i32, i32, i32
  }
  func.func @transform_3(%arg0: i32) -> (i32, i32, i32) {
    %c0_i32 = arith.constant 0 : i32
    %c0_i32_0 = arith.constant 0 : i32
    %c0_i32_1 = arith.constant 0 : i32
    %c0_i32_2 = arith.constant 0 : i32
    return %c0_i32, %c0_i32_0, %c0_i32_1 : i32, i32, i32
  }
  func.func @transform_4(%arg0: i32) -> (i32, i32, i32) {
    %c0_i32 = arith.constant 0 : i32
    %c0_i32_0 = arith.constant 0 : i32
    %c0_i32_1 = arith.constant 0 : i32
    %c0_i32_2 = arith.constant 0 : i32
    return %c0_i32, %c0_i32_0, %c0_i32_1 : i32, i32, i32
  }
  func.func @transform_5(%arg0: i32) -> (i32, i32, i32) {
    %c0_i32 = arith.constant 0 : i32
    %c0_i32_0 = arith.constant 0 : i32
    %c0_i32_1 = arith.constant 0 : i32
    %c0_i32_2 = arith.constant 0 : i32
    return %c0_i32, %c0_i32_0, %c0_i32_1 : i32, i32, i32
  }
  func.func @transform_6(%arg0: i32) -> (i32, i32, i32) {
    %c0_i32 = arith.constant 0 : i32
    %c0_i32_0 = arith.constant 0 : i32
    %c0_i32_1 = arith.constant 0 : i32
    %c0_i32_2 = arith.constant 0 : i32
    return %c0_i32, %c0_i32_0, %c0_i32_1 : i32, i32, i32
  }
  func.func @transform_7(%arg0: i32) -> (i32, i32, i32) {
    %c0_i32 = arith.constant 0 : i32
    %c0_i32_0 = arith.constant 0 : i32
    %c0_i32_1 = arith.constant 0 : i32
    %c0_i32_2 = arith.constant 0 : i32
    return %c0_i32, %c0_i32_0, %c0_i32_1 : i32, i32, i32
  }
  func.func @transform_8(%arg0: i32) -> (i32, i32, i32) {
    %c0_i32 = arith.constant 0 : i32
    %c0_i32_0 = arith.constant 0 : i32
    %c0_i32_1 = arith.constant 0 : i32
    %c0_i32_2 = arith.constant 0 : i32
    return %c0_i32, %c0_i32_0, %c0_i32_1 : i32, i32, i32
  }
  func.func @transform_9(%arg0: i32) -> (i32, i32) {
    %c0_i32 = arith.constant 0 : i32
    %c0_i32_0 = arith.constant 0 : i32
    %c0_i32_1 = arith.constant 0 : i32
    return %c0_i32, %c0_i32_0 : i32, i32
  }
  func.func @transform_10(%arg0: i32) -> (i32, i32) {
    %c0_i32 = arith.constant 0 : i32
    %c0_i32_0 = arith.constant 0 : i32
    %c0_i32_1 = arith.constant 0 : i32
    return %c0_i32, %c0_i32_0 : i32, i32
  }
  func.func @transform_11(%arg0: i32) -> (i32, i32) {
    %c0_i32 = arith.constant 0 : i32
    %c0_i32_0 = arith.constant 0 : i32
    %c0_i32_1 = arith.constant 0 : i32
    return %c0_i32, %c0_i32_0 : i32, i32
  }
  func.func @transform_12(%arg0: i32) -> (i32, i32) {
    %c0_i32 = arith.constant 0 : i32
    %c0_i32_0 = arith.constant 0 : i32
    %c0_i32_1 = arith.constant 0 : i32
    return %c0_i32, %c0_i32_0 : i32, i32
  }
  func.func @transform_13(%arg0: i32) -> (i32, i32) {
    %c0_i32 = arith.constant 0 : i32
    %c0_i32_0 = arith.constant 0 : i32
    %c0_i32_1 = arith.constant 0 : i32
    return %c0_i32, %c0_i32_0 : i32, i32
  }
  func.func @transform_14(%arg0: i32) -> (i32, i32) {
    %c0_i32 = arith.constant 0 : i32
    %c0_i32_0 = arith.constant 0 : i32
    %c0_i32_1 = arith.constant 0 : i32
    return %c0_i32, %c0_i32_0 : i32, i32
  }
  func.func @transform_15(%arg0: i32) -> (i32, i32) {
    %c0_i32 = arith.constant 0 : i32
    %c0_i32_0 = arith.constant 0 : i32
    %c0_i32_1 = arith.constant 0 : i32
    return %c0_i32, %c0_i32_0 : i32, i32
  }
  func.func @transform_16(%arg0: i32) -> (i32, i32, i32) {
    %c0_i32 = arith.constant 0 : i32
    %c0_i32_0 = arith.constant 0 : i32
    %c0_i32_1 = arith.constant 0 : i32
    return %arg0, %c0_i32, %c0_i32_0 : i32, i32, i32
  }
}

</mosaic_0001>

<llo_original>
// kernel: pallas_forward.3
$region0: #{pallas_forward.3}
  #allocation0 [shape = 'u32[]', space=smem, size = 0x4, offset = 0x4, fixed_abs, tag = 'smem constant byte address 0x4 - core index']
  #allocation1 [shape = 'u32[144,128]{1,0:T(1,128)}', space=vmem, size = 0x12000, scoped, tag = 'internal scratch']
  %s0 = inlined_call_operand.vmem [shape: f32[16,64], index: 0, kind: input, shape index: {}]
  %s1 = inlined_call_operand.vmem [shape: bf16[64,32], index: 1, kind: input, shape index: {}]
  %s2 = inlined_call_operand.vmem [shape: f32[1,32], index: 2, kind: input, shape index: {}]
  %s3 = inlined_call_operand.vmem [shape: f32[16,32], index: 3, kind: output, shape index: {}]
  %s4 = sld [smem:[#allocation0]]
  $region22: #{pallas_forward.3} parent=0
    _
  %s6 = ssub.s32 1, %s4
  %s7 = scalar_select 0, %s6, %s4
  // Predicated region
  $region2: #{pallas_forward.3} parent=0 // pred_check
    _
  $region3: #{pallas_forward.3} parent=0 // pred_check_branch
    %9 = sbr.rel (0) target = $region5
  $region4: #{pallas_forward.3} parent=0 // pred_region
    _
  $region5: #{pallas_forward.3} parent=0 // pred_fallthru
    _
  // Predicated region
  $region6: #{pallas_forward.3} parent=0 // pred_check
    _
  $region7: #{pallas_forward.3} parent=0 // pred_check_branch
    %11 = sbr.rel (0) target = $region9
  $region8: #{pallas_forward.3} parent=0 // pred_region
    _
  $region9: #{pallas_forward.3} parent=0 // pred_fallthru
    _
  // Predicated region
  $region10: #{pallas_forward.3} parent=0 // pred_check
    _
  $region11: #{pallas_forward.3} parent=0 // pred_check_branch
    %13 = sbr.rel (0) target = $region13
  $region12: #{pallas_forward.3} parent=0 // pred_region
    _
  $region13: #{pallas_forward.3} parent=0 // pred_fallthru
    _
  %v15 = vld [vmem:[%s0] sm:$0xff]
  %v16 = vld [vmem:[%s0 + $0x8] sm:$0xff]
  %vm17 = vcmask 523264
  %v18 = vsel %vm17, %v15, 0.0
  %19 = vadd.xlane.f32.xlu0 %v18
  %v20 = vpop.xlane.xlu0 %19
  %v21 = vsel %vm17, %v16, 0.0
  %22 = vadd.xlane.f32.xlu0 %v21
  %v23 = vpop.xlane.xlu0 %22
  %v24 = vrcp.pop 64.0
  %v25 = vmul.f32 %v20, %v24
  %v26 = vmul.f32 %v23, %v24
  %v27 = vsub.f32 %v15, %v25
  %v28 = vsub.f32 %v16, %v26
  %v29 = vmul.f32 %v27, %v27
  %v30 = vmul.f32 %v28, %v28
  %v31 = vsel %vm17, %v29, 0.0
  %32 = vadd.xlane.f32.xlu0 %v31
  %v33 = vpop.xlane.xlu0 %32
  %v34 = vsel %vm17, %v30, 0.0
  %35 = vadd.xlane.f32.xlu0 %v34
  %v36 = vpop.xlane.xlu0 %35
  %v37 = vmul.f32 %v33, %v24
  %v38 = vmul.f32 %v36, %v24
  %v39 = vadd.f32 %v37, 1e-05
  %v40 = vadd.f32 %v38, 1e-05
  %v41 = vrsqrt.pop %v39
  %v42 = vrsqrt.pop %v40
  %v43 = vmul.f32 %v27, %v41
  %v44 = vmul.f32 %v28, %v42
  %v45 = vpack.c.bf16 %v44, %v43
  %v46 = vld [vmem:[%s1] sm:$0xf]
  %v47 = vld [vmem:[%s1 + $0x4] sm:$0xf]
  %v48 = vld [vmem:[%s1 + $0x8] sm:$0xf]
  %v49 = vld [vmem:[%s1 + $0xc] sm:$0xf]
  %v50 = vld [vmem:[%s1 + $0x10] sm:$0xf]
  %v51 = vld [vmem:[%s1 + $0x14] sm:$0xf]
  %v52 = vld [vmem:[%s1 + $0x18] sm:$0xf]
  %v53 = vld [vmem:[%s1 + $0x1c] sm:$0xf]
  %v54 = vld [vmem:[%s2] sm:$0x1]
  %v56 = vlaneseq
  %v57 = vshrl.u32 %v56, 7
  %v58 = vsub.s32 0, %v57
  %v59 = vrot.slane %v54, %v58
  %v69 = vunpack.c.l.b16 %v46
  %v70 = vunpack.c.l.b16 %v47
  %v71 = vunpack.c.l.b16 %v48
  %v72 = vunpack.c.l.b16 %v49
  %v73 = vunpack.c.l.b16 %v50
  %v74 = vunpack.c.l.b16 %v51
  %v75 = vunpack.c.l.b16 %v52
  %v76 = vunpack.c.l.b16 %v53
  %v77 = vpack.c.b16 %v70, %v69
  %v78 = vpack.c.b16 %v72, %v71
  %v79 = vpack.c.b16 %v74, %v73
  %v80 = vpack.c.b16 %v76, %v75
  %v86 = vsel %vm17, %v45, 0
  %88 = vmatprep.subr.bf16.mxu0 0
  %89 = vmatpush1.bf16.msra.mxu0 %v77
  %90 = vmatprep.subr.bf16.mxu0 0
  %91 = vmatpush1.bf16.msra.mxu0 %v78
  %92 = vmatprep.subr.bf16.mxu0 0
  %93 = vmatpush1.bf16.msra.mxu0 %v79
  %94 = vmatprep.subr.bf16.mxu0 0
  %95 = vmatpush1.bf16.msra.mxu0 %v80
  %96 = vmatprep.subr.bf16.mxu0 0
  %97 = vmatpush1.bf16.msra.mxu0 0
  %98 = vmatprep.subr.bf16.mxu0 0
  %99 = vmatpush1.bf16.msra.mxu0 0
  %100 = vmatprep.subr.bf16.mxu0 0
  %101 = vmatpush1.bf16.msra.mxu0 0
  %102 = vmatprep.subr.bf16.mxu0 0
  %103 = vmatpush1.bf16.msra.mxu0 0
  %104 = vmatprep.subr.bf16.mxu0 0
  %105 = vmatpush1.bf16.msra.mxu0 0
  %106 = vmatprep.subr.bf16.mxu0 0
  %107 = vmatpush1.bf16.msra.mxu0 0
  %108 = vmatprep.subr.bf16.mxu0 0
  %109 = vmatpush1.bf16.msra.mxu0 0
  %110 = vmatprep.subr.bf16.mxu0 0
  %111 = vmatpush1.bf16.msra.mxu0 0
  %112 = vmatprep.subr.bf16.mxu0 0
  %113 = vmatpush1.bf16.msra.mxu0 0
  %114 = vmatprep.subr.bf16.mxu0 0
  %115 = vmatpush1.bf16.msra.mxu0 0
  %116 = vmatprep.subr.bf16.mxu0 0
  %117 = vmatpush1.bf16.msra.mxu0 0
  %118 = vmatprep.subr.bf16.mxu0 0
  %119 = vmatpush1.bf16.msra.mxu0 0
  %120 = vmatprep.mubr.bf16.mxu0 0
  %121 = vmatmul.mubr.bf16.gmra.mrb[0].mxu0 %v86
  %v122 = vpop.f32.mrb[0].mxu0
  %v123 = vadd.f32 %v59, %v122
  %v124 = vpop.f32.mrb[0].mxu0
  %v125 = vpop.f32.mrb[0].mxu0
  %v126 = vadd.f32 %v59, %v125
  %v127 = vpop.f32.mrb[0].mxu0
  %128 = vdwg.mxu0
  %vm129 = vcmask 261120
  %130 = vst.msk [vmem:[%s3] sm:$0xff] %vm129, %v123
  %131 = vst.msk [vmem:[%s3 + $0x8] sm:$0xff] %vm129, %v126
  // Predicated region
  $region14: #{pallas_forward.3} parent=0 // pred_check
    _
  $region15: #{pallas_forward.3} parent=0 // pred_check_branch
    %133 = sbr.rel (0) target = $region17
  $region16: #{pallas_forward.3} parent=0 // pred_region
    _
  $region17: #{pallas_forward.3} parent=0 // pred_fallthru
    _
  // Predicated region
  $region18: #{pallas_forward.3} parent=0 // pred_check
    _
  $region19: #{pallas_forward.3} parent=0 // pred_check_branch
    %135 = sbr.rel (0) target = $region21
  $region20: #{pallas_forward.3} parent=0 // pred_region
    _
  $region21: #{pallas_forward.3} parent=0 // pred_fallthru
    _

// kernel: pallas_forward.5
$region0: #{pallas_forward.5}
  #allocation0 [shape = 'u32[]', space=smem, size = 0x4, offset = 0x4, fixed_abs, tag = 'smem constant byte address 0x4 - core index']
  #allocation1 [shape = 'u32[144,128]{1,0:T(1,128)}', space=vmem, size = 0x12000, scoped, tag = 'internal scratch']
  %s0 = inlined_call_operand.vmem [shape: f32[2,8,64], index: 0, kind: input, shape index: {}]
  %s1 = inlined_call_operand.vmem [shape: f32[2,8,32], index: 1, kind: input, shape index: {}]
  %s2 = inlined_call_operand.vmem [shape: bf16[4,32,8], index: 2, kind: input, shape index: {}]
  %s3 = inlined_call_operand.vmem [shape: bf16[4,32,8], index: 3, kind: input, shape index: {}]
  %s4 = inlined_call_operand.vmem [shape: bf16[4,32,8], index: 4, kind: input, shape index: {}]
  %s5 = inlined_call_operand.vmem [shape: f32[4,1,8], index: 5, kind: input, shape index: {}]
  %s6 = inlined_call_operand.vmem [shape: f32[4,1,8], index: 6, kind: input, shape index: {}]
  %s7 = inlined_call_operand.vmem [shape: f32[4,1,8], index: 7, kind: input, shape index: {}]
  %s8 = inlined_call_operand.vmem [shape: bf16[4,8,32], index: 8, kind: input, shape index: {}]
  %s9 = inlined_call_operand.vmem [shape: f32[1,32], index: 9, kind: input, shape index: {}]
  %s10 = inlined_call_operand.vmem [shape: f32[1,32], index: 10, kind: input, shape index: {}]
  %s11 = inlined_call_operand.vmem [shape: f32[1,32], index: 11, kind: input, shape index: {}]
  %s12 = inlined_call_operand.vmem [shape: bf16[32,128], index: 12, kind: input, shape index: {}]
  %s13 = inlined_call_operand.vmem [shape: f32[1,128], index: 13, kind: input, shape index: {}]
  %s14 = inlined_call_operand.vmem [shape: bf16[128,64], index: 14, kind: input, shape index: {}]
  %s15 = inlined_call_operand.vmem [shape: f32[1,64], index: 15, kind: input, shape index: {}]
  %s16 = inlined_call_operand.hbm [shape: f32[2,8,64], index: 16, kind: output, shape index: {}]
  %s17 = sld [smem:[#allocation0]]
  $region97: #{pallas_forward.5} parent=0
    _
  %s19 = ssub.s32 1, %s17
  %s20 = scalar_select 0, %s19, %s17
  $region1: #{pallas_forward.5} parent=0
    #allocation2 [shape = 'u8[8192]{0}', space=vmem, size = 0x2000, scoped, tag = 'output window, operand 0']
    #allocation3 [shape = 's32[2]{0}', space=sflag, size = 0x8, scoped, tag = 'scoped memory for pallas_forward.5']
    %21 = vsyncpa [#allocation3], 0
    %s22 = scalar_lea.sflag [#allocation3], 1
    %23 = vsyncpa %s22, 0
    loop: start=0, step=1, limit=4
    $region2: #{pallas_forward.5} parent=1 // loop_pre_header
      _
    $region3: #{pallas_forward.5} parent=1 // loop_header
      %s25 = sphi 0, %s29
      %p26 = scmp.ge.s32.totalorder %s25, 4
      %s35 = sphi 0, %s37
      %s38 = sphi 0, %s35
      %s39 = sphi 0, %s38
      %s55 = sphi 0, %s39
      %s61 = sphi 0, %s63
      %s64 = sphi 0, %s61
      %s65 = sphi 0, %s64
      %s81 = sphi 0, %s65
      %s85 = sphi 0, %s85
      %s87 = sphi 0, %s85
      %s88 = sphi 0, %s87
      %s102 = sphi 0, %s88
      %s106 = sphi 0, %s106
      %s108 = sphi 0, %s106
      %s109 = sphi 0, %s108
      %s123 = sphi 0, %s109
      %s127 = sphi 0, %s127
      %s129 = sphi 0, %s127
      %s130 = sphi 0, %s129
      %s144 = sphi 0, %s130
      %s148 = sphi 0, %s148
      %s150 = sphi 0, %s148
      %s151 = sphi 0, %s150
      %s165 = sphi 0, %s151
      %s169 = sphi 0, %s169
      %s171 = sphi 0, %s169
      %s172 = sphi 0, %s171
      %s186 = sphi 0, %s172
      %s190 = sphi 0, %s190
      %s192 = sphi 0, %s190
      %s193 = sphi 0, %s192
      %s207 = sphi 0, %s193
      %s211 = sphi 0, %s211
      %s213 = sphi 0, %s211
      %s214 = sphi 0, %s213
      %s228 = sphi 0, %s214
      %s232 = sphi 0, %s232
      %s234 = sphi 0, %s232
      %s235 = sphi 0, %s234
      %s249 = sphi 0, %s235
      %s253 = sphi 0, %s253
      %s255 = sphi 0, %s253
      %s256 = sphi 0, %s255
      %s270 = sphi 0, %s256
      %s274 = sphi 0, %s274
      %s276 = sphi 0, %s274
      %s277 = sphi 0, %s276
      %s291 = sphi 0, %s277
      %s295 = sphi 0, %s295
      %s297 = sphi 0, %s295
      %s298 = sphi 0, %s297
      %s312 = sphi 0, %s298
      %s316 = sphi 0, %s316
      %s318 = sphi 0, %s316
      %s319 = sphi 0, %s318
      %s333 = sphi 0, %s319
      %s337 = sphi 0, %s337
      %s339 = sphi 0, %s337
      %s340 = sphi 0, %s339
      %s354 = sphi 0, %s340
      %s358 = sphi 0, %s358
      %s360 = sphi 0, %s358
      %s361 = sphi 0, %s360
      %s375 = sphi 0, %s361
      %s381 = sphi 0, %s383
      %s384 = sphi 0, %s381
      %s385 = sphi 0, %s384
      %s401 = sphi 0, %s385
    $region4: #{pallas_forward.5} parent=1 // loop_header_branch
      %28 = sbr.rel (%p26) target = $region8
    $region5: #{pallas_forward.5} parent=1 // loop_body
      %s30 = ssub.s32 %s25, 1
      %s31 = ssub.s32 %s25, 2
      %s32 = sadd.s32 %s25, 1
      %s33 = ssub.s32 %s25, %s32
      %p34 = scmp.eq.s32.totalorder %s33, 0
      %s36 = sadd.s32 %s35, 1
      %s37 = scalar_select %p34, %s35, %s36
      %p40 = pneg %p34
      %p41 = scmp.eq.s32.totalorder %s25, 1
      %p42 = por %p40, %p41
      %p43 = scmp.ne.s32.totalorder %s35, %s38
      %p44 = scmp.eq.s32.totalorder %s25, 0
      %p45 = por %p43, %p44
      %p46 = scmp.ne.s32.totalorder %s35, %s38
      %p47 = scmp.eq.s32.totalorder %s30, 1
      %p48 = por %p46, %p47
      %p49 = scmp.ne.s32.totalorder %s38, %s39
      %p50 = scmp.eq.s32.totalorder %s30, 0
      %p51 = por %p49, %p50
      %p52 = scmp.ne.s32.totalorder %s38, %s39
      %p53 = scmp.eq.s32.totalorder %s31, 1
      %p54 = por %p52, %p53
      %p56 = scmp.ne.s32.totalorder %s39, %s55
      %p57 = scmp.eq.s32.totalorder %s31, 0
      %p58 = por %p56, %p57
      %s59 = ssub.s32 %s25, %s32
      %p60 = scmp.eq.s32.totalorder %s59, 0
      %s62 = sadd.s32 %s61, 1
      %s63 = scalar_select %p60, %s61, %s62
      %p66 = pneg %p60
      %p67 = scmp.eq.s32.totalorder %s25, 1
      %p68 = por %p66, %p67
      %p69 = scmp.ne.s32.totalorder %s61, %s64
      %p70 = scmp.eq.s32.totalorder %s25, 0
      %p71 = por %p69, %p70
      %p72 = scmp.ne.s32.totalorder %s61, %s64
      %p73 = scmp.eq.s32.totalorder %s30, 1
      %p74 = por %p72, %p73
      %p75 = scmp.ne.s32.totalorder %s64, %s65
      %p76 = scmp.eq.s32.totalorder %s30, 0
      %p77 = por %p75, %p76
      %p78 = scmp.ne.s32.totalorder %s64, %s65
      %p79 = scmp.eq.s32.totalorder %s31, 1
      %p80 = por %p78, %p79
      %p82 = scmp.ne.s32.totalorder %s65, %s81
      %p83 = scmp.eq.s32.totalorder %s31, 0
      %p84 = por %p82, %p83
      %s86 = sadd.s32 %s85, 1
      %p89 = scmp.eq.s32.totalorder %s25, 1
      %p90 = scmp.ne.s32.totalorder %s85, %s87
      %p91 = scmp.eq.s32.totalorder %s25, 0
      %p92 = por %p90, %p91
      %p93 = scmp.ne.s32.totalorder %s85, %s87
      %p94 = scmp.eq.s32.totalorder %s30, 1
      %p95 = por %p93, %p94
      %p96 = scmp.ne.s32.totalorder %s87, %s88
      %p97 = scmp.eq.s32.totalorder %s30, 0
      %p98 = por %p96, %p97
      %p99 = scmp.ne.s32.totalorder %s87, %s88
      %p100 = scmp.eq.s32.totalorder %s31, 1
      %p101 = por %p99, %p100
      %p103 = scmp.ne.s32.totalorder %s88, %s102
      %p104 = scmp.eq.s32.totalorder %s31, 0
      %p105 = por %p103, %p104
      %s107 = sadd.s32 %s106, 1
      %p110 = scmp.eq.s32.totalorder %s25, 1
      %p111 = scmp.ne.s32.totalorder %s106, %s108
      %p112 = scmp.eq.s32.totalorder %s25, 0
      %p113 = por %p111, %p112
      %p114 = scmp.ne.s32.totalorder %s106, %s108
      %p115 = scmp.eq.s32.totalorder %s30, 1
      %p116 = por %p114, %p115
      %p117 = scmp.ne.s32.totalorder %s108, %s109
      %p118 = scmp.eq.s32.totalorder %s30, 0
      %p119 = por %p117, %p118
      %p120 = scmp.ne.s32.totalorder %s108, %s109
      %p121 = scmp.eq.s32.totalorder %s31, 1
      %p122 = por %p120, %p121
      %p124 = scmp.ne.s32.totalorder %s109, %s123
      %p125 = scmp.eq.s32.totalorder %s31, 0
      %p126 = por %p124, %p125
      %s128 = sadd.s32 %s127, 1
      %p131 = scmp.eq.s32.totalorder %s25, 1
      %p132 = scmp.ne.s32.totalorder %s127, %s129
      %p133 = scmp.eq.s32.totalorder %s25, 0
      %p134 = por %p132, %p133
      %p135 = scmp.ne.s32.totalorder %s127, %s129
      %p136 = scmp.eq.s32.totalorder %s30, 1
      %p137 = por %p135, %p136
      %p138 = scmp.ne.s32.totalorder %s129, %s130
      %p139 = scmp.eq.s32.totalorder %s30, 0
      %p140 = por %p138, %p139
      %p141 = scmp.ne.s32.totalorder %s129, %s130
      %p142 = scmp.eq.s32.totalorder %s31, 1
      %p143 = por %p141, %p142
      %p145 = scmp.ne.s32.totalorder %s130, %s144
      %p146 = scmp.eq.s32.totalorder %s31, 0
      %p147 = por %p145, %p146
      %s149 = sadd.s32 %s148, 1
      %p152 = scmp.eq.s32.totalorder %s25, 1
      %p153 = scmp.ne.s32.totalorder %s148, %s150
      %p154 = scmp.eq.s32.totalorder %s25, 0
      %p155 = por %p153, %p154
      %p156 = scmp.ne.s32.totalorder %s148, %s150
      %p157 = scmp.eq.s32.totalorder %s30, 1
      %p158 = por %p156, %p157
      %p159 = scmp.ne.s32.totalorder %s150, %s151
      %p160 = scmp.eq.s32.totalorder %s30, 0
      %p161 = por %p159, %p160
      %p162 = scmp.ne.s32.totalorder %s150, %s151
      %p163 = scmp.eq.s32.totalorder %s31, 1
      %p164 = por %p162, %p163
      %p166 = scmp.ne.s32.totalorder %s151, %s165
      %p167 = scmp.eq.s32.totalorder %s31, 0
      %p168 = por %p166, %p167
      %s170 = sadd.s32 %s169, 1
      %p173 = scmp.eq.s32.totalorder %s25, 1
      %p174 = scmp.ne.s32.totalorder %s169, %s171
      %p175 = scmp.eq.s32.totalorder %s25, 0
      %p176 = por %p174, %p175
      %p177 = scmp.ne.s32.totalorder %s169, %s171
      %p178 = scmp.eq.s32.totalorder %s30, 1
      %p179 = por %p177, %p178
      %p180 = scmp.ne.s32.totalorder %s171, %s172
      %p181 = scmp.eq.s32.totalorder %s30, 0
      %p182 = por %p180, %p181
      %p183 = scmp.ne.s32.totalorder %s171, %s172
      %p184 = scmp.eq.s32.totalorder %s31, 1
      %p185 = por %p183, %p184
      %p187 = scmp.ne.s32.totalorder %s172, %s186
      %p188 = scmp.eq.s32.totalorder %s31, 0
      %p189 = por %p187, %p188
      %s191 = sadd.s32 %s190, 1
      %p194 = scmp.eq.s32.totalorder %s25, 1
      %p195 = scmp.ne.s32.totalorder %s190, %s192
      %p196 = scmp.eq.s32.totalorder %s25, 0
      %p197 = por %p195, %p196
      %p198 = scmp.ne.s32.totalorder %s190, %s192
      %p199 = scmp.eq.s32.totalorder %s30, 1
      %p200 = por %p198, %p199
      %p201 = scmp.ne.s32.totalorder %s192, %s193
      %p202 = scmp.eq.s32.totalorder %s30, 0
      %p203 = por %p201, %p202
      %p204 = scmp.ne.s32.totalorder %s192, %s193
      %p205 = scmp.eq.s32.totalorder %s31, 1
      %p206 = por %p204, %p205
      %p208 = scmp.ne.s32.totalorder %s193, %s207
      %p209 = scmp.eq.s32.totalorder %s31, 0
      %p210 = por %p208, %p209
      %s212 = sadd.s32 %s211, 1
      %p215 = scmp.eq.s32.totalorder %s25, 1
      %p216 = scmp.ne.s32.totalorder %s211, %s213
      %p217 = scmp.eq.s32.totalorder %s25, 0
      %p218 = por %p216, %p217
      %p219 = scmp.ne.s32.totalorder %s211, %s213
      %p220 = scmp.eq.s32.totalorder %s30, 1
      %p221 = por %p219, %p220
      %p222 = scmp.ne.s32.totalorder %s213, %s214
      %p223 = scmp.eq.s32.totalorder %s30, 0
      %p224 = por %p222, %p223
      %p225 = scmp.ne.s32.totalorder %s213, %s214
      %p226 = scmp.eq.s32.totalorder %s31, 1
      %p227 = por %p225, %p226
      %p229 = scmp.ne.s32.totalorder %s214, %s228
      %p230 = scmp.eq.s32.totalorder %s31, 0
      %p231 = por %p229, %p230
      %s233 = sadd.s32 %s232, 1
      %p236 = scmp.eq.s32.totalorder %s25, 1
      %p237 = scmp.ne.s32.totalorder %s232, %s234
      %p238 = scmp.eq.s32.totalorder %s25, 0
      %p239 = por %p237, %p238
      %p240 = scmp.ne.s32.totalorder %s232, %s234
      %p241 = scmp.eq.s32.totalorder %s30, 1
      %p242 = por %p240, %p241
      %p243 = scmp.ne.s32.totalorder %s234, %s235
      %p244 = scmp.eq.s32.totalorder %s30, 0
      %p245 = por %p243, %p244
      %p246 = scmp.ne.s32.totalorder %s234, %s235
      %p247 = scmp.eq.s32.totalorder %s31, 1
      %p248 = por %p246, %p247
      %p250 = scmp.ne.s32.totalorder %s235, %s249
      %p251 = scmp.eq.s32.totalorder %s31, 0
      %p252 = por %p250, %p251
      %s254 = sadd.s32 %s253, 1
      %p257 = scmp.eq.s32.totalorder %s25, 1
      %p258 = scmp.ne.s32.totalorder %s253, %s255
      %p259 = scmp.eq.s32.totalorder %s25, 0
      %p260 = por %p258, %p259
      %p261 = scmp.ne.s32.totalorder %s253, %s255
      %p262 = scmp.eq.s32.totalorder %s30, 1
      %p263 = por %p261, %p262
      %p264 = scmp.ne.s32.totalorder %s255, %s256
      %p265 = scmp.eq.s32.totalorder %s30, 0
      %p266 = por %p264, %p265
      %p267 = scmp.ne.s32.totalorder %s255, %s256
      %p268 = scmp.eq.s32.totalorder %s31, 1
      %p269 = por %p267, %p268
      %p271 = scmp.ne.s32.totalorder %s256, %s270
      %p272 = scmp.eq.s32.totalorder %s31, 0
      %p273 = por %p271, %p272
      %s275 = sadd.s32 %s274, 1
      %p278 = scmp.eq.s32.totalorder %s25, 1
      %p279 = scmp.ne.s32.totalorder %s274, %s276
      %p280 = scmp.eq.s32.totalorder %s25, 0
      %p281 = por %p279, %p280
      %p282 = scmp.ne.s32.totalorder %s274, %s276
      %p283 = scmp.eq.s32.totalorder %s30, 1
      %p284 = por %p282, %p283
      %p285 = scmp.ne.s32.totalorder %s276, %s277
      %p286 = scmp.eq.s32.totalorder %s30, 0
      %p287 = por %p285, %p286
      %p288 = scmp.ne.s32.totalorder %s276, %s277
      %p289 = scmp.eq.s32.totalorder %s31, 1
      %p290 = por %p288, %p289
      %p292 = scmp.ne.s32.totalorder %s277, %s291
      %p293 = scmp.eq.s32.totalorder %s31, 0
      %p294 = por %p292, %p293
      %s296 = sadd.s32 %s295, 1
      %p299 = scmp.eq.s32.totalorder %s25, 1
      %p300 = scmp.ne.s32.totalorder %s295, %s297
      %p301 = scmp.eq.s32.totalorder %s25, 0
      %p302 = por %p300, %p301
      %p303 = scmp.ne.s32.totalorder %s295, %s297
      %p304 = scmp.eq.s32.totalorder %s30, 1
      %p305 = por %p303, %p304
      %p306 = scmp.ne.s32.totalorder %s297, %s298
      %p307 = scmp.eq.s32.totalorder %s30, 0
      %p308 = por %p306, %p307
      %p309 = scmp.ne.s32.totalorder %s297, %s298
      %p310 = scmp.eq.s32.totalorder %s31, 1
      %p311 = por %p309, %p310
      %p313 = scmp.ne.s32.totalorder %s298, %s312
      %p314 = scmp.eq.s32.totalorder %s31, 0
      %p315 = por %p313, %p314
      %s317 = sadd.s32 %s316, 1
      %p320 = scmp.eq.s32.totalorder %s25, 1
      %p321 = scmp.ne.s32.totalorder %s316, %s318
      %p322 = scmp.eq.s32.totalorder %s25, 0
      %p323 = por %p321, %p322
      %p324 = scmp.ne.s32.totalorder %s316, %s318
      %p325 = scmp.eq.s32.totalorder %s30, 1
      %p326 = por %p324, %p325
      %p327 = scmp.ne.s32.totalorder %s318, %s319
      %p328 = scmp.eq.s32.totalorder %s30, 0
      %p329 = por %p327, %p328
      %p330 = scmp.ne.s32.totalorder %s318, %s319
      %p331 = scmp.eq.s32.totalorder %s31, 1
      %p332 = por %p330, %p331
      %p334 = scmp.ne.s32.totalorder %s319, %s333
      %p335 = scmp.eq.s32.totalorder %s31, 0
      %p336 = por %p334, %p335
      %s338 = sadd.s32 %s337, 1
      %p341 = scmp.eq.s32.totalorder %s25, 1
      %p342 = scmp.ne.s32.totalorder %s337, %s339
      %p343 = scmp.eq.s32.totalorder %s25, 0
      %p344 = por %p342, %p343
      %p345 = scmp.ne.s32.totalorder %s337, %s339
      %p346 = scmp.eq.s32.totalorder %s30, 1
      %p347 = por %p345, %p346
      %p348 = scmp.ne.s32.totalorder %s339, %s340
      %p349 = scmp.eq.s32.totalorder %s30, 0
      %p350 = por %p348, %p349
      %p351 = scmp.ne.s32.totalorder %s339, %s340
      %p352 = scmp.eq.s32.totalorder %s31, 1
      %p353 = por %p351, %p352
      %p355 = scmp.ne.s32.totalorder %s340, %s354
      %p356 = scmp.eq.s32.totalorder %s31, 0
      %p357 = por %p355, %p356
      %s359 = sadd.s32 %s358, 1
      %p362 = scmp.eq.s32.totalorder %s25, 1
      %p363 = scmp.ne.s32.totalorder %s358, %s360
      %p364 = scmp.eq.s32.totalorder %s25, 0
      %p365 = por %p363, %p364
      %p366 = scmp.ne.s32.totalorder %s358, %s360
      %p367 = scmp.eq.s32.totalorder %s30, 1
      %p368 = por %p366, %p367
      %p369 = scmp.ne.s32.totalorder %s360, %s361
      %p370 = scmp.eq.s32.totalorder %s30, 0
      %p371 = por %p369, %p370
      %p372 = scmp.ne.s32.totalorder %s360, %s361
      %p373 = scmp.eq.s32.totalorder %s31, 1
      %p374 = por %p372, %p373
      %p376 = scmp.ne.s32.totalorder %s361, %s375
      %p377 = scmp.eq.s32.totalorder %s31, 0
      %p378 = por %p376, %p377
      %s379 = ssub.s32 %s25, %s32
      %p380 = scmp.eq.s32.totalorder %s379, 0
      %s382 = sadd.s32 %s381, 1
      %s383 = scalar_select %p380, %s381, %s382
      %p386 = pneg %p380
      %p387 = scmp.eq.s32.totalorder %s25, 1
      %p388 = por %p386, %p387
      %p389 = scmp.ne.s32.totalorder %s381, %s384
      %p390 = scmp.eq.s32.totalorder %s25, 0
      %p391 = por %p389, %p390
      %p392 = scmp.ne.s32.totalorder %s381, %s384
      %p393 = scmp.eq.s32.totalorder %s30, 1
      %p394 = por %p392, %p393
      %p395 = scmp.ne.s32.totalorder %s384, %s385
      %p396 = scmp.eq.s32.totalorder %s30, 0
      %p397 = por %p395, %p396
      %p398 = scmp.ne.s32.totalorder %s384, %s385
      %p399 = scmp.eq.s32.totalorder %s31, 1
      %p400 = por %p398, %p399
      %p402 = scmp.ne.s32.totalorder %s385, %s401
      %p403 = scmp.eq.s32.totalorder %s31, 0
      %p404 = por %p402, %p403
      %p405 = scmp.le.s32.totalorder 1, %s25
      %p406 = scmp.lt.s32.totalorder %s25, 3
      %p407 = pnand %p405, %p406
      %p408 = pneg %p407
      // Predicated region
      $region9: #{pallas_forward.5} parent=5 // pred_check
        _
      $region10: #{pallas_forward.5} parent=5 // pred_check_branch
        %410 = sbr.rel (%p407) target = $region12
      $region11: #{pallas_forward.5} parent=5 // pred_region
        %s411 = ssub.s32 %s25, 1
        // Predicated region
        $region13: #{pallas_forward.5} parent=11 // pred_check
          %p412 = pneg %p98
        $region14: #{pallas_forward.5} parent=11 // pred_check_branch
          %414 = sbr.rel (%p412) target = $region16
        $region15: #{pallas_forward.5} parent=11 // pred_region
          _
        $region16: #{pallas_forward.5} parent=11 // pred_fallthru
          _
        // Predicated region
        $region17: #{pallas_forward.5} parent=11 // pred_check
          %p415 = pneg %p119
        $region18: #{pallas_forward.5} parent=11 // pred_check_branch
          %417 = sbr.rel (%p415) target = $region20
        $region19: #{pallas_forward.5} parent=11 // pred_region
          _
        $region20: #{pallas_forward.5} parent=11 // pred_fallthru
          _
        // Predicated region
        $region21: #{pallas_forward.5} parent=11 // pred_check
          %p418 = pneg %p140
        $region22: #{pallas_forward.5} parent=11 // pred_check_branch
          %420 = sbr.rel (%p418) target = $region24
        $region23: #{pallas_forward.5} parent=11 // pred_region
          _
        $region24: #{pallas_forward.5} parent=11 // pred_fallthru
          _
        // Predicated region
        $region25: #{pallas_forward.5} parent=11 // pred_check
          %p421 = pneg %p161
        $region26: #{pallas_forward.5} parent=11 // pred_check_branch
          %423 = sbr.rel (%p421) target = $region28
        $region27: #{pallas_forward.5} parent=11 // pred_region
          _
        $region28: #{pallas_forward.5} parent=11 // pred_fallthru
          _
        // Predicated region
        $region29: #{pallas_forward.5} parent=11 // pred_check
          %p424 = pneg %p182
        $region30: #{pallas_forward.5} parent=11 // pred_check_branch
          %426 = sbr.rel (%p424) target = $region32
        $region31: #{pallas_forward.5} parent=11 // pred_region
          _
        $region32: #{pallas_forward.5} parent=11 // pred_fallthru
          _
        // Predicated region
        $region33: #{pallas_forward.5} parent=11 // pred_check
          %p427 = pneg %p203
        $region34: #{pallas_forward.5} parent=11 // pred_check_branch
          %429 = sbr.rel (%p427) target = $region36
        $region35: #{pallas_forward.5} parent=11 // pred_region
          _
        $region36: #{pallas_forward.5} parent=11 // pred_fallthru
          _
        // Predicated region
        $region37: #{pallas_forward.5} parent=11 // pred_check
          %p430 = pneg %p224
        $region38: #{pallas_forward.5} parent=11 // pred_check_branch
          %432 = sbr.rel (%p430) target = $region40
        $region39: #{pallas_forward.5} parent=11 // pred_region
          _
        $region40: #{pallas_forward.5} parent=11 // pred_fallthru
          _
        // Predicated region
        $region41: #{pallas_forward.5} parent=11 // pred_check
          %p433 = pneg %p245
        $region42: #{pallas_forward.5} parent=11 // pred_check_branch
          %435 = sbr.rel (%p433) target = $region44
        $region43: #{pallas_forward.5} parent=11 // pred_region
          _
        $region44: #{pallas_forward.5} parent=11 // pred_fallthru
          _
        // Predicated region
        $region45: #{pallas_forward.5} parent=11 // pred_check
          %p436 = pneg %p266
        $region46: #{pallas_forward.5} parent=11 // pred_check_branch
          %438 = sbr.rel (%p436) target = $region48
        $region47: #{pallas_forward.5} parent=11 // pred_region
          _
        $region48: #{pallas_forward.5} parent=11 // pred_fallthru
          _
        // Predicated region
        $region49: #{pallas_forward.5} parent=11 // pred_check
          %p439 = pneg %p287
        $region50: #{pallas_forward.5} parent=11 // pred_check_branch
          %441 = sbr.rel (%p439) target = $region52
        $region51: #{pallas_forward.5} parent=11 // pred_region
          _
        $region52: #{pallas_forward.5} parent=11 // pred_fallthru
          _
        // Predicated region
        $region53: #{pallas_forward.5} parent=11 // pred_check
          %p442 = pneg %p308
        $region54: #{pallas_forward.5} parent=11 // pred_check_branch
          %444 = sbr.rel (%p442) target = $region56
        $region55: #{pallas_forward.5} parent=11 // pred_region
          _
        $region56: #{pallas_forward.5} parent=11 // pred_fallthru
          _
        // Predicated region
        $region57: #{pallas_forward.5} parent=11 // pred_check
          %p445 = pneg %p329
        $region58: #{pallas_forward.5} parent=11 // pred_check_branch
          %447 = sbr.rel (%p445) target = $region60
        $region59: #{pallas_forward.5} parent=11 // pred_region
          _
        $region60: #{pallas_forward.5} parent=11 // pred_fallthru
          _
        // Predicated region
        $region61: #{pallas_forward.5} parent=11 // pred_check
          %p448 = pneg %p350
        $region62: #{pallas_forward.5} parent=11 // pred_check_branch
          %450 = sbr.rel (%p448) target = $region64
        $region63: #{pallas_forward.5} parent=11 // pred_region
          _
        $region64: #{pallas_forward.5} parent=11 // pred_fallthru
          _
        // Predicated region
        $region65: #{pallas_forward.5} parent=11 // pred_check
          %p451 = pneg %p371
        $region66: #{pallas_forward.5} parent=11 // pred_check_branch
          %453 = sbr.rel (%p451) target = $region68
        $region67: #{pallas_forward.5} parent=11 // pred_region
          _
        $region68: #{pallas_forward.5} parent=11 // pred_fallthru
          _
      $region12: #{pallas_forward.5} parent=5 // pred_fallthru
        _
      %p454 = scmp.lt.s32.totalorder %s25, 2
      // Predicated region
      $region69: #{pallas_forward.5} parent=5 // pred_check
        %p455 = pneg %p454
      $region70: #{pallas_forward.5} parent=5 // pred_check_branch
        %457 = sbr.rel (%p455) target = $region72
      $region71: #{pallas_forward.5} parent=5 // pred_region
        // Predicated region
        $region73: #{pallas_forward.5} parent=71 // pred_check
          %p458 = pneg %p45
        $region74: #{pallas_forward.5} parent=71 // pred_check_branch
          %460 = sbr.rel (%p458) target = $region76
        $region75: #{pallas_forward.5} parent=71 // pred_region
          %p461 = scmp.lt.s32.totalorder %s25, 1
          %s462 = scalar_select %p461, %s25, 1
          %s463 = smul.addr %s462, 8
          %s464 = scalar_lea.vmem %s0, %s463
        $region76: #{pallas_forward.5} parent=71 // pred_fallthru
          _
        // Predicated region
        $region77: #{pallas_forward.5} parent=71 // pred_check
          %p465 = pneg %p71
        $region78: #{pallas_forward.5} parent=71 // pred_check_branch
          %467 = sbr.rel (%p465) target = $region80
        $region79: #{pallas_forward.5} parent=71 // pred_region
          %p468 = scmp.lt.s32.totalorder %s25, 1
          %s469 = scalar_select %p468, %s25, 1
          %s470 = smul.addr %s469, 8
          %s471 = scalar_lea.vmem %s1, %s470
        $region80: #{pallas_forward.5} parent=71 // pred_fallthru
          _
      $region72: #{pallas_forward.5} parent=5 // pred_fallthru
        _
      %p472 = scmp.le.s32.totalorder 1, %s25
      %p473 = scmp.lt.s32.totalorder %s25, 3
      %p474 = pnand %p472, %p473
      %p475 = pneg %p474
      // Predicated region
      $region81: #{pallas_forward.5} parent=5 // pred_check
        _
      $region82: #{pallas_forward.5} parent=5 // pred_check_branch
        %477 = sbr.rel (%p474) target = $region84
      $region83: #{pallas_forward.5} parent=5 // pred_region
        %s478 = ssub.s32 %s25, 1
        %p479 = scmp.lt.s32.totalorder %s30, 1
        %s480 = scalar_select %p479, %s30, 1
        %s481 = smul.addr %s480, 8
        %s482 = scalar_lea.vmem %s0, %s481
        %p483 = pneg %p51
        %p484 = pneg %p48
        %p485 = scmp.lt.s32.totalorder %s30, 1
        %s486 = scalar_select %p485, %s30, 1
        %s487 = smul.addr %s486, 8
        %s488 = scalar_lea.vmem %s1, %s487
        %p489 = pneg %p77
        %p490 = pneg %p74
        %p491 = pneg %p98
        %p492 = pneg %p95
        %p493 = pneg %p119
        %p494 = pneg %p116
        %p495 = pneg %p140
        %p496 = pneg %p137
        %p497 = pneg %p161
        %p498 = pneg %p158
        %p499 = pneg %p182
        %p500 = pneg %p179
        %p501 = pneg %p203
        %p502 = pneg %p200
        %p503 = pneg %p224
        %p504 = pneg %p221
        %p505 = pneg %p245
        %p506 = pneg %p242
        %p507 = pneg %p266
        %p508 = pneg %p263
        %p509 = pneg %p287
        %p510 = pneg %p284
        %p511 = pneg %p308
        %p512 = pneg %p305
        %p513 = pneg %p329
        %p514 = pneg %p326
        %p515 = pneg %p350
        %p516 = pneg %p347
        %p517 = pneg %p371
        %p518 = pneg %p368
        %p519 = pneg %p397
        %p520 = pneg %p394
        %s521 = sand.u32 %s384, 1
        %s522 = scalar_lea.sflag [#allocation3], %s521
        %s523 = sand.u32 %s384, 1
        %s524 = smul.addr %s523, 8
        %s525 = scalar_lea.vmem [#allocation2], %s524
        %p526 = scmp.lt.s32.totalorder %s30, 1
        %s527 = scalar_select %p526, %s30, 1
        %s528 = smul.addr %s527, 8
        %s529 = scalar_lea.vmem %s0, %s528
        %p530 = scmp.lt.s32.totalorder %s30, 1
        %s531 = scalar_select %p530, %s30, 1
        %s532 = smul.addr %s531, 8
        %s533 = scalar_lea.vmem %s1, %s532
        %v535 = vld [vmem:[%s533] sm:$0xff]
        %v536 = vpack.c.bf16 %v535, %v535
        %v537 = vld [vmem:[%s2] sm:$0xf]
        %v538 = vld [vmem:[%s2 + $0x4] sm:$0xf]
        %v539 = vld [vmem:[%s2 + $0x8] sm:$0xf]
        %v540 = vld [vmem:[%s2 + $0xc] sm:$0xf]
        %v541 = vld [vmem:[%s2 + $0x10] sm:$0xf]
        %v542 = vld [vmem:[%s2 + $0x14] sm:$0xf]
        %v543 = vld [vmem:[%s2 + $0x18] sm:$0xf]
        %v544 = vld [vmem:[%s2 + $0x1c] sm:$0xf]
        %v545 = vld [vmem:[%s2 + $0x20] sm:$0xf]
        %v546 = vld [vmem:[%s2 + $0x24] sm:$0xf]
        %v547 = vld [vmem:[%s2 + $0x28] sm:$0xf]
        %v548 = vld [vmem:[%s2 + $0x2c] sm:$0xf]
        %v549 = vld [vmem:[%s2 + $0x30] sm:$0xf]
        %v550 = vld [vmem:[%s2 + $0x34] sm:$0xf]
        %v551 = vld [vmem:[%s2 + $0x38] sm:$0xf]
        %v552 = vld [vmem:[%s2 + $0x3c] sm:$0xf]
        %v553 = vld [vmem:[%s5] sm:$0x1]
        %v554 = vld [vmem:[%s5 + $0x1] sm:$0x1]
        %v555 = vld [vmem:[%s5 + $0x2] sm:$0x1]
        %v556 = vld [vmem:[%s5 + $0x3] sm:$0x1]
        %v561 = vlaneseq
        %v562 = vshrl.u32 %v561, 7
        %v563 = vsub.s32 0, %v562
        %v564 = vrot.slane %v553, %v563
        %v565 = vlaneseq
        %v566 = vshrl.u32 %v565, 7
        %v567 = vsub.s32 0, %v566
        %v568 = vrot.slane %v554, %v567
        %v569 = vlaneseq
        %v570 = vshrl.u32 %v569, 7
        %v571 = vsub.s32 0, %v570
        %v572 = vrot.slane %v555, %v571
        %v573 = vlaneseq
        %v574 = vshrl.u32 %v573, 7
        %v575 = vsub.s32 0, %v574
        %v576 = vrot.slane %v556, %v575
        %v585 = vunpack.c.l.b16 %v537
        %v586 = vunpack.c.l.b16 %v538
        %v587 = vunpack.c.l.b16 %v539
        %v588 = vunpack.c.l.b16 %v540
        %v589 = vpack.c.b16 %v586, %v585
        %v590 = vpack.c.b16 %v588, %v587
        %vm593 = vcmask 261120
        %v595 = vsel %vm593, %v536, 0
        %597 = vmatprep.subr.bf16.mxu0 0
        %598 = vmatpush1.bf16.msra.mxu0 %v589
        %599 = vmatprep.subr.bf16.mxu0 0
        %600 = vmatpush1.bf16.msra.mxu0 %v590
        %601 = vmatprep.subr.bf16.mxu0 0
        %602 = vmatpush1.bf16.msra.mxu0 0
        %603 = vmatprep.subr.bf16.mxu0 0
        %604 = vmatpush1.bf16.msra.mxu0 0
        %605 = vmatprep.subr.bf16.mxu0 0
        %606 = vmatpush1.bf16.msra.mxu0 0
        %607 = vmatprep.subr.bf16.mxu0 0
        %608 = vmatpush1.bf16.msra.mxu0 0
        %609 = vmatprep.subr.bf16.mxu0 0
        %610 = vmatpush1.bf16.msra.mxu0 0
        %611 = vmatprep.subr.bf16.mxu0 0
        %612 = vmatpush1.bf16.msra.mxu0 0
        %613 = vmatprep.subr.bf16.mxu0 0
        %614 = vmatpush1.bf16.msra.mxu0 0
        %615 = vmatprep.subr.bf16.mxu0 0
        %616 = vmatpush1.bf16.msra.mxu0 0
        %617 = vmatprep.subr.bf16.mxu0 0
        %618 = vmatpush1.bf16.msra.mxu0 0
        %619 = vmatprep.subr.bf16.mxu0 0
        %620 = vmatpush1.bf16.msra.mxu0 0
        %621 = vmatprep.subr.bf16.mxu0 0
        %622 = vmatpush1.bf16.msra.mxu0 0
        %623 = vmatprep.subr.bf16.mxu0 0
        %624 = vmatpush1.bf16.msra.mxu0 0
        %625 = vmatprep.subr.bf16.mxu0 0
        %626 = vmatpush1.bf16.msra.mxu0 0
        %627 = vmatprep.subr.bf16.mxu0 0
        %628 = vmatpush1.bf16.msra.mxu0 0
        %629 = vmatprep.mubr.bf16.mxu0 0
        %630 = vmatmul.mubr.bf16.gmra.mrb[0].mxu0 %v595
        %v631 = vpop.f32.mrb[0].mxu0
        %v632 = vadd.f32 %v564, %v631
        %v633 = vpop.f32.mrb[0].mxu0
        %v634 = vpop.f32.mrb[0].mxu0
        %v635 = vpop.f32.mrb[0].mxu0
        %636 = vdwg.mxu0
        %v641 = vunpack.c.l.b16 %v541
        %v642 = vunpack.c.l.b16 %v542
        %v643 = vunpack.c.l.b16 %v543
        %v644 = vunpack.c.l.b16 %v544
        %v645 = vpack.c.b16 %v642, %v641
        %v646 = vpack.c.b16 %v644, %v643
        %649 = vmatprep.subr.bf16.mxu0 0
        %650 = vmatpush1.bf16.msra.mxu0 %v645
        %651 = vmatprep.subr.bf16.mxu0 0
        %652 = vmatpush1.bf16.msra.mxu0 %v646
        %653 = vmatprep.subr.bf16.mxu0 0
        %654 = vmatpush1.bf16.msra.mxu0 0
        %655 = vmatprep.subr.bf16.mxu0 0
        %656 = vmatpush1.bf16.msra.mxu0 0
        %657 = vmatprep.subr.bf16.mxu0 0
        %658 = vmatpush1.bf16.msra.mxu0 0
        %659 = vmatprep.subr.bf16.mxu0 0
        %660 = vmatpush1.bf16.msra.mxu0 0
        %661 = vmatprep.subr.bf16.mxu0 0
        %662 = vmatpush1.bf16.msra.mxu0 0
        %663 = vmatprep.subr.bf16.mxu0 0
        %664 = vmatpush1.bf16.msra.mxu0 0
        %665 = vmatprep.subr.bf16.mxu0 0
        %666 = vmatpush1.bf16.msra.mxu0 0
        %667 = vmatprep.subr.bf16.mxu0 0
        %668 = vmatpush1.bf16.msra.mxu0 0
        %669 = vmatprep.subr.bf16.mxu0 0
        %670 = vmatpush1.bf16.msra.mxu0 0
        %671 = vmatprep.subr.bf16.mxu0 0
        %672 = vmatpush1.bf16.msra.mxu0 0
        %673 = vmatprep.subr.bf16.mxu0 0
        %674 = vmatpush1.bf16.msra.mxu0 0
        %675 = vmatprep.subr.bf16.mxu0 0
        %676 = vmatpush1.bf16.msra.mxu0 0
        %677 = vmatprep.subr.bf16.mxu0 0
        %678 = vmatpush1.bf16.msra.mxu0 0
        %679 = vmatprep.subr.bf16.mxu0 0
        %680 = vmatpush1.bf16.msra.mxu0 0
        %681 = vmatprep.mubr.bf16.mxu0 0
        %682 = vmatmul.mubr.bf16.gmra.mrb[0].mxu0 %v595
        %v683 = vpop.f32.mrb[0].mxu0
        %v684 = vadd.f32 %v568, %v683
        %v685 = vpop.f32.mrb[0].mxu0
        %v686 = vpop.f32.mrb[0].mxu0
        %v687 = vpop.f32.mrb[0].mxu0
        %688 = vdwg.mxu0
        %v693 = vunpack.c.l.b16 %v545
        %v694 = vunpack.c.l.b16 %v546
        %v695 = vunpack.c.l.b16 %v547
        %v696 = vunpack.c.l.b16 %v548
        %v697 = vpack.c.b16 %v694, %v693
        %v698 = vpack.c.b16 %v696, %v695
        %701 = vmatprep.subr.bf16.mxu0 0
        %702 = vmatpush1.bf16.msra.mxu0 %v697
        %703 = vmatprep.subr.bf16.mxu0 0
        %704 = vmatpush1.bf16.msra.mxu0 %v698
        %705 = vmatprep.subr.bf16.mxu0 0
        %706 = vmatpush1.bf16.msra.mxu0 0
        %707 = vmatprep.subr.bf16.mxu0 0
        %708 = vmatpush1.bf16.msra.mxu0 0
        %709 = vmatprep.subr.bf16.mxu0 0
        %710 = vmatpush1.bf16.msra.mxu0 0
        %711 = vmatprep.subr.bf16.mxu0 0
        %712 = vmatpush1.bf16.msra.mxu0 0
        %713 = vmatprep.subr.bf16.mxu0 0
        %714 = vmatpush1.bf16.msra.mxu0 0
        %715 = vmatprep.subr.bf16.mxu0 0
        %716 = vmatpush1.bf16.msra.mxu0 0
        %717 = vmatprep.subr.bf16.mxu0 0
        %718 = vmatpush1.bf16.msra.mxu0 0
        %719 = vmatprep.subr.bf16.mxu0 0
        %720 = vmatpush1.bf16.msra.mxu0 0
        %721 = vmatprep.subr.bf16.mxu0 0
        %722 = vmatpush1.bf16.msra.mxu0 0
        %723 = vmatprep.subr.bf16.mxu0 0
        %724 = vmatpush1.bf16.msra.mxu0 0
        %725 = vmatprep.subr.bf16.mxu0 0
        %726 = vmatpush1.bf16.msra.mxu0 0
        %727 = vmatprep.subr.bf16.mxu0 0
        %728 = vmatpush1.bf16.msra.mxu0 0
        %729 = vmatprep.subr.bf16.mxu0 0
        %730 = vmatpush1.bf16.msra.mxu0 0
        %731 = vmatprep.subr.bf16.mxu0 0
        %732 = vmatpush1.bf16.msra.mxu0 0
        %733 = vmatprep.mubr.bf16.mxu0 0
        %734 = vmatmul.mubr.bf16.gmra.mrb[0].mxu0 %v595
        %v735 = vpop.f32.mrb[0].mxu0
        %v736 = vadd.f32 %v572, %v735
        %v737 = vpop.f32.mrb[0].mxu0
        %v738 = vpop.f32.mrb[0].mxu0
        %v739 = vpop.f32.mrb[0].mxu0
        %740 = vdwg.mxu0
        %v745 = vunpack.c.l.b16 %v549
        %v746 = vunpack.c.l.b16 %v550
        %v747 = vunpack.c.l.b16 %v551
        %v748 = vunpack.c.l.b16 %v552
        %v749 = vpack.c.b16 %v746, %v745
        %v750 = vpack.c.b16 %v748, %v747
        %753 = vmatprep.subr.bf16.mxu0 0
        %754 = vmatpush1.bf16.msra.mxu0 %v749
        %755 = vmatprep.subr.bf16.mxu0 0
        %756 = vmatpush1.bf16.msra.mxu0 %v750
        %757 = vmatprep.subr.bf16.mxu0 0
        %758 = vmatpush1.bf16.msra.mxu0 0
        %759 = vmatprep.subr.bf16.mxu0 0
        %760 = vmatpush1.bf16.msra.mxu0 0
        %761 = vmatprep.subr.bf16.mxu0 0
        %762 = vmatpush1.bf16.msra.mxu0 0
        %763 = vmatprep.subr.bf16.mxu0 0
        %764 = vmatpush1.bf16.msra.mxu0 0
        %765 = vmatprep.subr.bf16.mxu0 0
        %766 = vmatpush1.bf16.msra.mxu0 0
        %767 = vmatprep.subr.bf16.mxu0 0
        %768 = vmatpush1.bf16.msra.mxu0 0
        %769 = vmatprep.subr.bf16.mxu0 0
        %770 = vmatpush1.bf16.msra.mxu0 0
        %771 = vmatprep.subr.bf16.mxu0 0
        %772 = vmatpush1.bf16.msra.mxu0 0
        %773 = vmatprep.subr.bf16.mxu0 0
        %774 = vmatpush1.bf16.msra.mxu0 0
        %775 = vmatprep.subr.bf16.mxu0 0
        %776 = vmatpush1.bf16.msra.mxu0 0
        %777 = vmatprep.subr.bf16.mxu0 0
        %778 = vmatpush1.bf16.msra.mxu0 0
        %779 = vmatprep.subr.bf16.mxu0 0
        %780 = vmatpush1.bf16.msra.mxu0 0
        %781 = vmatprep.subr.bf16.mxu0 0
        %782 = vmatpush1.bf16.msra.mxu0 0
        %783 = vmatprep.subr.bf16.mxu0 0
        %784 = vmatpush1.bf16.msra.mxu0 0
        %785 = vmatprep.mubr.bf16.mxu0 0
        %786 = vmatmul.mubr.bf16.gmra.mrb[0].mxu0 %v595
        %v787 = vpop.f32.mrb[0].mxu0
        %v788 = vadd.f32 %v576, %v787
        %v789 = vpop.f32.mrb[0].mxu0
        %v790 = vpop.f32.mrb[0].mxu0
        %v791 = vpop.f32.mrb[0].mxu0
        %792 = vdwg.mxu0
        %v793 = vld [vmem:[%s3] sm:$0xf]
        %v794 = vld [vmem:[%s3 + $0x4] sm:$0xf]
        %v795 = vld [vmem:[%s3 + $0x8] sm:$0xf]
        %v796 = vld [vmem:[%s3 + $0xc] sm:$0xf]
        %v797 = vld [vmem:[%s3 + $0x10] sm:$0xf]
        %v798 = vld [vmem:[%s3 + $0x14] sm:$0xf]
        %v799 = vld [vmem:[%s3 + $0x18] sm:$0xf]
        %v800 = vld [vmem:[%s3 + $0x1c] sm:$0xf]
        %v801 = vld [vmem:[%s3 + $0x20] sm:$0xf]
        %v802 = vld [vmem:[%s3 + $0x24] sm:$0xf]
        %v803 = vld [vmem:[%s3 + $0x28] sm:$0xf]
        %v804 = vld [vmem:[%s3 + $0x2c] sm:$0xf]
        %v805 = vld [vmem:[%s3 + $0x30] sm:$0xf]
        %v806 = vld [vmem:[%s3 + $0x34] sm:$0xf]
        %v807 = vld [vmem:[%s3 + $0x38] sm:$0xf]
        %v808 = vld [vmem:[%s3 + $0x3c] sm:$0xf]
        %v809 = vld [vmem:[%s6] sm:$0x1]
        %v810 = vld [vmem:[%s6 + $0x1] sm:$0x1]
        %v811 = vld [vmem:[%s6 + $0x2] sm:$0x1]
        %v812 = vld [vmem:[%s6 + $0x3] sm:$0x1]
        %v817 = vlaneseq
        %v818 = vshrl.u32 %v817, 7
        %v819 = vsub.s32 0, %v818
        %v820 = vrot.slane %v809, %v819
        %v821 = vlaneseq
        %v822 = vshrl.u32 %v821, 7
        %v823 = vsub.s32 0, %v822
        %v824 = vrot.slane %v810, %v823
        %v825 = vlaneseq
        %v826 = vshrl.u32 %v825, 7
        %v827 = vsub.s32 0, %v826
        %v828 = vrot.slane %v811, %v827
        %v829 = vlaneseq
        %v830 = vshrl.u32 %v829, 7
        %v831 = vsub.s32 0, %v830
        %v832 = vrot.slane %v812, %v831
        %v841 = vunpack.c.l.b16 %v793
        %v842 = vunpack.c.l.b16 %v794
        %v843 = vunpack.c.l.b16 %v795
        %v844 = vunpack.c.l.b16 %v796
        %v845 = vpack.c.b16 %v842, %v841
        %v846 = vpack.c.b16 %v844, %v843
        %849 = vmatprep.subr.bf16.mxu0 0
        %850 = vmatpush1.bf16.msra.mxu0 %v845
        %851 = vmatprep.subr.bf16.mxu0 0
        %852 = vmatpush1.bf16.msra.mxu0 %v846
        %853 = vmatprep.subr.bf16.mxu0 0
        %854 = vmatpush1.bf16.msra.mxu0 0
        %855 = vmatprep.subr.bf16.mxu0 0
        %856 = vmatpush1.bf16.msra.mxu0 0
        %857 = vmatprep.subr.bf16.mxu0 0
        %858 = vmatpush1.bf16.msra.mxu0 0
        %859 = vmatprep.subr.bf16.mxu0 0
        %860 = vmatpush1.bf16.msra.mxu0 0
        %861 = vmatprep.subr.bf16.mxu0 0
        %862 = vmatpush1.bf16.msra.mxu0 0
        %863 = vmatprep.subr.bf16.mxu0 0
        %864 = vmatpush1.bf16.msra.mxu0 0
        %865 = vmatprep.subr.bf16.mxu0 0
        %866 = vmatpush1.bf16.msra.mxu0 0
        %867 = vmatprep.subr.bf16.mxu0 0
        %868 = vmatpush1.bf16.msra.mxu0 0
        %869 = vmatprep.subr.bf16.mxu0 0
        %870 = vmatpush1.bf16.msra.mxu0 0
        %871 = vmatprep.subr.bf16.mxu0 0
        %872 = vmatpush1.bf16.msra.mxu0 0
        %873 = vmatprep.subr.bf16.mxu0 0
        %874 = vmatpush1.bf16.msra.mxu0 0
        %875 = vmatprep.subr.bf16.mxu0 0
        %876 = vmatpush1.bf16.msra.mxu0 0
        %877 = vmatprep.subr.bf16.mxu0 0
        %878 = vmatpush1.bf16.msra.mxu0 0
        %879 = vmatprep.subr.bf16.mxu0 0
        %880 = vmatpush1.bf16.msra.mxu0 0
        %881 = vmatprep.mubr.bf16.mxu0 0
        %882 = vmatmul.mubr.bf16.gmra.mrb[0].mxu0 %v595
        %v883 = vpop.f32.mrb[0].mxu0
        %v884 = vadd.f32 %v820, %v883
        %v885 = vpop.f32.mrb[0].mxu0
        %v886 = vpop.f32.mrb[0].mxu0
        %v887 = vpop.f32.mrb[0].mxu0
        %888 = vdwg.mxu0
        %v893 = vunpack.c.l.b16 %v797
        %v894 = vunpack.c.l.b16 %v798
        %v895 = vunpack.c.l.b16 %v799
        %v896 = vunpack.c.l.b16 %v800
        %v897 = vpack.c.b16 %v894, %v893
        %v898 = vpack.c.b16 %v896, %v895
        %901 = vmatprep.subr.bf16.mxu0 0
        %902 = vmatpush1.bf16.msra.mxu0 %v897
        %903 = vmatprep.subr.bf16.mxu0 0
        %904 = vmatpush1.bf16.msra.mxu0 %v898
        %905 = vmatprep.subr.bf16.mxu0 0
        %906 = vmatpush1.bf16.msra.mxu0 0
        %907 = vmatprep.subr.bf16.mxu0 0
        %908 = vmatpush1.bf16.msra.mxu0 0
        %909 = vmatprep.subr.bf16.mxu0 0
        %910 = vmatpush1.bf16.msra.mxu0 0
        %911 = vmatprep.subr.bf16.mxu0 0
        %912 = vmatpush1.bf16.msra.mxu0 0
        %913 = vmatprep.subr.bf16.mxu0 0
        %914 = vmatpush1.bf16.msra.mxu0 0
        %915 = vmatprep.subr.bf16.mxu0 0
        %916 = vmatpush1.bf16.msra.mxu0 0
        %917 = vmatprep.subr.bf16.mxu0 0
        %918 = vmatpush1.bf16.msra.mxu0 0
        %919 = vmatprep.subr.bf16.mxu0 0
        %920 = vmatpush1.bf16.msra.mxu0 0
        %921 = vmatprep.subr.bf16.mxu0 0
        %922 = vmatpush1.bf16.msra.mxu0 0
        %923 = vmatprep.subr.bf16.mxu0 0
        %924 = vmatpush1.bf16.msra.mxu0 0
        %925 = vmatprep.subr.bf16.mxu0 0
        %926 = vmatpush1.bf16.msra.mxu0 0
        %927 = vmatprep.subr.bf16.mxu0 0
        %928 = vmatpush1.bf16.msra.mxu0 0
        %929 = vmatprep.subr.bf16.mxu0 0
        %930 = vmatpush1.bf16.msra.mxu0 0
        %931 = vmatprep.subr.bf16.mxu0 0
        %932 = vmatpush1.bf16.msra.mxu0 0
        %933 = vmatprep.mubr.bf16.mxu0 0
        %934 = vmatmul.mubr.bf16.gmra.mrb[0].mxu0 %v595
        %v935 = vpop.f32.mrb[0].mxu0
        %v936 = vadd.f32 %v824, %v935
        %v937 = vpop.f32.mrb[0].mxu0
        %v938 = vpop.f32.mrb[0].mxu0
        %v939 = vpop.f32.mrb[0].mxu0
        %940 = vdwg.mxu0
        %v945 = vunpack.c.l.b16 %v801
        %v946 = vunpack.c.l.b16 %v802
        %v947 = vunpack.c.l.b16 %v803
        %v948 = vunpack.c.l.b16 %v804
        %v949 = vpack.c.b16 %v946, %v945
        %v950 = vpack.c.b16 %v948, %v947
        %953 = vmatprep.subr.bf16.mxu0 0
        %954 = vmatpush1.bf16.msra.mxu0 %v949
        %955 = vmatprep.subr.bf16.mxu0 0
        %956 = vmatpush1.bf16.msra.mxu0 %v950
        %957 = vmatprep.subr.bf16.mxu0 0
        %958 = vmatpush1.bf16.msra.mxu0 0
        %959 = vmatprep.subr.bf16.mxu0 0
        %960 = vmatpush1.bf16.msra.mxu0 0
        %961 = vmatprep.subr.bf16.mxu0 0
        %962 = vmatpush1.bf16.msra.mxu0 0
        %963 = vmatprep.subr.bf16.mxu0 0
        %964 = vmatpush1.bf16.msra.mxu0 0
        %965 = vmatprep.subr.bf16.mxu0 0
        %966 = vmatpush1.bf16.msra.mxu0 0
        %967 = vmatprep.subr.bf16.mxu0 0
        %968 = vmatpush1.bf16.msra.mxu0 0
        %969 = vmatprep.subr.bf16.mxu0 0
        %970 = vmatpush1.bf16.msra.mxu0 0
        %971 = vmatprep.subr.bf16.mxu0 0
        %972 = vmatpush1.bf16.msra.mxu0 0
        %973 = vmatprep.subr.bf16.mxu0 0
        %974 = vmatpush1.bf16.msra.mxu0 0
        %975 = vmatprep.subr.bf16.mxu0 0
        %976 = vmatpush1.bf16.msra.mxu0 0
        %977 = vmatprep.subr.bf16.mxu0 0
        %978 = vmatpush1.bf16.msra.mxu0 0
        %979 = vmatprep.subr.bf16.mxu0 0
        %980 = vmatpush1.bf16.msra.mxu0 0
        %981 = vmatprep.subr.bf16.mxu0 0
        %982 = vmatpush1.bf16.msra.mxu0 0
        %983 = vmatprep.subr.bf16.mxu0 0
        %984 = vmatpush1.bf16.msra.mxu0 0
        %985 = vmatprep.mubr.bf16.mxu0 0
        %986 = vmatmul.mubr.bf16.gmra.mrb[0].mxu0 %v595
        %v987 = vpop.f32.mrb[0].mxu0
        %v988 = vadd.f32 %v828, %v987
        %v989 = vpop.f32.mrb[0].mxu0
        %v990 = vpop.f32.mrb[0].mxu0
        %v991 = vpop.f32.mrb[0].mxu0
        %992 = vdwg.mxu0
        %v997 = vunpack.c.l.b16 %v805
        %v998 = vunpack.c.l.b16 %v806
        %v999 = vunpack.c.l.b16 %v807
        %v1000 = vunpack.c.l.b16 %v808
        %v1001 = vpack.c.b16 %v998, %v997
        %v1002 = vpack.c.b16 %v1000, %v999
        %1005 = vmatprep.subr.bf16.mxu0 0
        %1006 = vmatpush1.bf16.msra.mxu0 %v1001
        %1007 = vmatprep.subr.bf16.mxu0 0
        %1008 = vmatpush1.bf16.msra.mxu0 %v1002
        %1009 = vmatprep.subr.bf16.mxu0 0
        %1010 = vmatpush1.bf16.msra.mxu0 0
        %1011 = vmatprep.subr.bf16.mxu0 0
        %1012 = vmatpush1.bf16.msra.mxu0 0
        %1013 = vmatprep.subr.bf16.mxu0 0
        %1014 = vmatpush1.bf16.msra.mxu0 0
        %1015 = vmatprep.subr.bf16.mxu0 0
        %1016 = vmatpush1.bf16.msra.mxu0 0
        %1017 = vmatprep.subr.bf16.mxu0 0
        %1018 = vmatpush1.bf16.msra.mxu0 0
        %1019 = vmatprep.subr.bf16.mxu0 0
        %1020 = vmatpush1.bf16.msra.mxu0 0
        %1021 = vmatprep.subr.bf16.mxu0 0
        %1022 = vmatpush1.bf16.msra.mxu0 0
        %1023 = vmatprep.subr.bf16.mxu0 0
        %1024 = vmatpush1.bf16.msra.mxu0 0
        %1025 = vmatprep.subr.bf16.mxu0 0
        %1026 = vmatpush1.bf16.msra.mxu0 0
        %1027 = vmatprep.subr.bf16.mxu0 0
        %1028 = vmatpush1.bf16.msra.mxu0 0
        %1029 = vmatprep.subr.bf16.mxu0 0
        %1030 = vmatpush1.bf16.msra.mxu0 0
        %1031 = vmatprep.subr.bf16.mxu0 0
        %1032 = vmatpush1.bf16.msra.mxu0 0
        %1033 = vmatprep.subr.bf16.mxu0 0
        %1034 = vmatpush1.bf16.msra.mxu0 0
        %1035 = vmatprep.subr.bf16.mxu0 0
        %1036 = vmatpush1.bf16.msra.mxu0 0
        %1037 = vmatprep.mubr.bf16.mxu0 0
        %1038 = vmatmul.mubr.bf16.gmra.mrb[0].mxu0 %v595
        %v1039 = vpop.f32.mrb[0].mxu0
        %v1040 = vadd.f32 %v832, %v1039
        %v1041 = vpop.f32.mrb[0].mxu0
        %v1042 = vpop.f32.mrb[0].mxu0
        %v1043 = vpop.f32.mrb[0].mxu0
        %1044 = vdwg.mxu0
        %v1045 = vld [vmem:[%s4] sm:$0xf]
        %v1046 = vld [vmem:[%s4 + $0x4] sm:$0xf]
        %v1047 = vld [vmem:[%s4 + $0x8] sm:$0xf]
        %v1048 = vld [vmem:[%s4 + $0xc] sm:$0xf]
        %v1049 = vld [vmem:[%s4 + $0x10] sm:$0xf]
        %v1050 = vld [vmem:[%s4 + $0x14] sm:$0xf]
        %v1051 = vld [vmem:[%s4 + $0x18] sm:$0xf]
        %v1052 = vld [vmem:[%s4 + $0x1c] sm:$0xf]
        %v1053 = vld [vmem:[%s4 + $0x20] sm:$0xf]
        %v1054 = vld [vmem:[%s4 + $0x24] sm:$0xf]
        %v1055 = vld [vmem:[%s4 + $0x28] sm:$0xf]
        %v1056 = vld [vmem:[%s4 + $0x2c] sm:$0xf]
        %v1057 = vld [vmem:[%s4 + $0x30] sm:$0xf]
        %v1058 = vld [vmem:[%s4 + $0x34] sm:$0xf]
        %v1059 = vld [vmem:[%s4 + $0x38] sm:$0xf]
        %v1060 = vld [vmem:[%s4 + $0x3c] sm:$0xf]
        %v1061 = vld [vmem:[%s7] sm:$0x1]
        %v1062 = vld [vmem:[%s7 + $0x1] sm:$0x1]
        %v1063 = vld [vmem:[%s7 + $0x2] sm:$0x1]
        %v1064 = vld [vmem:[%s7 + $0x3] sm:$0x1]
        %v1069 = vlaneseq
        %v1070 = vshrl.u32 %v1069, 7
        %v1071 = vsub.s32 0, %v1070
        %v1072 = vrot.slane %v1061, %v1071
        %v1073 = vlaneseq
        %v1074 = vshrl.u32 %v1073, 7
        %v1075 = vsub.s32 0, %v1074
        %v1076 = vrot.slane %v1062, %v1075
        %v1077 = vlaneseq
        %v1078 = vshrl.u32 %v1077, 7
        %v1079 = vsub.s32 0, %v1078
        %v1080 = vrot.slane %v1063, %v1079
        %v1081 = vlaneseq
        %v1082 = vshrl.u32 %v1081, 7
        %v1083 = vsub.s32 0, %v1082
        %v1084 = vrot.slane %v1064, %v1083
        %v1093 = vunpack.c.l.b16 %v1045
        %v1094 = vunpack.c.l.b16 %v1046
        %v1095 = vunpack.c.l.b16 %v1047
        %v1096 = vunpack.c.l.b16 %v1048
        %v1097 = vpack.c.b16 %v1094, %v1093
        %v1098 = vpack.c.b16 %v1096, %v1095
        %1101 = vmatprep.subr.bf16.mxu0 0
        %1102 = vmatpush1.bf16.msra.mxu0 %v1097
        %1103 = vmatprep.subr.bf16.mxu0 0
        %1104 = vmatpush1.bf16.msra.mxu0 %v1098
        %1105 = vmatprep.subr.bf16.mxu0 0
        %1106 = vmatpush1.bf16.msra.mxu0 0
        %1107 = vmatprep.subr.bf16.mxu0 0
        %1108 = vmatpush1.bf16.msra.mxu0 0
        %1109 = vmatprep.subr.bf16.mxu0 0
        %1110 = vmatpush1.bf16.msra.mxu0 0
        %1111 = vmatprep.subr.bf16.mxu0 0
        %1112 = vmatpush1.bf16.msra.mxu0 0
        %1113 = vmatprep.subr.bf16.mxu0 0
        %1114 = vmatpush1.bf16.msra.mxu0 0
        %1115 = vmatprep.subr.bf16.mxu0 0
        %1116 = vmatpush1.bf16.msra.mxu0 0
        %1117 = vmatprep.subr.bf16.mxu0 0
        %1118 = vmatpush1.bf16.msra.mxu0 0
        %1119 = vmatprep.subr.bf16.mxu0 0
        %1120 = vmatpush1.bf16.msra.mxu0 0
        %1121 = vmatprep.subr.bf16.mxu0 0
        %1122 = vmatpush1.bf16.msra.mxu0 0
        %1123 = vmatprep.subr.bf16.mxu0 0
        %1124 = vmatpush1.bf16.msra.mxu0 0
        %1125 = vmatprep.subr.bf16.mxu0 0
        %1126 = vmatpush1.bf16.msra.mxu0 0
        %1127 = vmatprep.subr.bf16.mxu0 0
        %1128 = vmatpush1.bf16.msra.mxu0 0
        %1129 = vmatprep.subr.bf16.mxu0 0
        %1130 = vmatpush1.bf16.msra.mxu0 0
        %1131 = vmatprep.subr.bf16.mxu0 0
        %1132 = vmatpush1.bf16.msra.mxu0 0
        %1133 = vmatprep.mubr.bf16.mxu0 0
        %1134 = vmatmul.mubr.bf16.gmra.mrb[0].mxu0 %v595
        %v1135 = vpop.f32.mrb[0].mxu0
        %v1136 = vadd.f32 %v1072, %v1135
        %v1137 = vpop.f32.mrb[0].mxu0
        %v1138 = vpop.f32.mrb[0].mxu0
        %v1139 = vpop.f32.mrb[0].mxu0
        %1140 = vdwg.mxu0
        %v1145 = vunpack.c.l.b16 %v1049
        %v1146 = vunpack.c.l.b16 %v1050
        %v1147 = vunpack.c.l.b16 %v1051
        %v1148 = vunpack.c.l.b16 %v1052
        %v1149 = vpack.c.b16 %v1146, %v1145
        %v1150 = vpack.c.b16 %v1148, %v1147
        %1153 = vmatprep.subr.bf16.mxu0 0
        %1154 = vmatpush1.bf16.msra.mxu0 %v1149
        %1155 = vmatprep.subr.bf16.mxu0 0
        %1156 = vmatpush1.bf16.msra.mxu0 %v1150
        %1157 = vmatprep.subr.bf16.mxu0 0
        %1158 = vmatpush1.bf16.msra.mxu0 0
        %1159 = vmatprep.subr.bf16.mxu0 0
        %1160 = vmatpush1.bf16.msra.mxu0 0
        %1161 = vmatprep.subr.bf16.mxu0 0
        %1162 = vmatpush1.bf16.msra.mxu0 0
        %1163 = vmatprep.subr.bf16.mxu0 0
        %1164 = vmatpush1.bf16.msra.mxu0 0
        %1165 = vmatprep.subr.bf16.mxu0 0
        %1166 = vmatpush1.bf16.msra.mxu0 0
        %1167 = vmatprep.subr.bf16.mxu0 0
        %1168 = vmatpush1.bf16.msra.mxu0 0
        %1169 = vmatprep.subr.bf16.mxu0 0
        %1170 = vmatpush1.bf16.msra.mxu0 0
        %1171 = vmatprep.subr.bf16.mxu0 0
        %1172 = vmatpush1.bf16.msra.mxu0 0
        %1173 = vmatprep.subr.bf16.mxu0 0
        %1174 = vmatpush1.bf16.msra.mxu0 0
        %1175 = vmatprep.subr.bf16.mxu0 0
        %1176 = vmatpush1.bf16.msra.mxu0 0
        %1177 = vmatprep.subr.bf16.mxu0 0
        %1178 = vmatpush1.bf16.msra.mxu0 0
        %1179 = vmatprep.subr.bf16.mxu0 0
        %1180 = vmatpush1.bf16.msra.mxu0 0
        %1181 = vmatprep.subr.bf16.mxu0 0
        %1182 = vmatpush1.bf16.msra.mxu0 0
        %1183 = vmatprep.subr.bf16.mxu0 0
        %1184 = vmatpush1.bf16.msra.mxu0 0
        %1185 = vmatprep.mubr.bf16.mxu0 0
        %1186 = vmatmul.mubr.bf16.gmra.mrb[0].mxu0 %v595
        %v1187 = vpop.f32.mrb[0].mxu0
        %v1188 = vadd.f32 %v1076, %v1187
        %v1189 = vpop.f32.mrb[0].mxu0
        %v1190 = vpop.f32.mrb[0].mxu0
        %v1191 = vpop.f32.mrb[0].mxu0
        %1192 = vdwg.mxu0
        %v1197 = vunpack.c.l.b16 %v1053
        %v1198 = vunpack.c.l.b16 %v1054
        %v1199 = vunpack.c.l.b16 %v1055
        %v1200 = vunpack.c.l.b16 %v1056
        %v1201 = vpack.c.b16 %v1198, %v1197
        %v1202 = vpack.c.b16 %v1200, %v1199
        %1205 = vmatprep.subr.bf16.mxu0 0
        %1206 = vmatpush1.bf16.msra.mxu0 %v1201
        %1207 = vmatprep.subr.bf16.mxu0 0
        %1208 = vmatpush1.bf16.msra.mxu0 %v1202
        %1209 = vmatprep.subr.bf16.mxu0 0
        %1210 = vmatpush1.bf16.msra.mxu0 0
        %1211 = vmatprep.subr.bf16.mxu0 0
        %1212 = vmatpush1.bf16.msra.mxu0 0
        %1213 = vmatprep.subr.bf16.mxu0 0
        %1214 = vmatpush1.bf16.msra.mxu0 0
        %1215 = vmatprep.subr.bf16.mxu0 0
        %1216 = vmatpush1.bf16.msra.mxu0 0
        %1217 = vmatprep.subr.bf16.mxu0 0
        %1218 = vmatpush1.bf16.msra.mxu0 0
        %1219 = vmatprep.subr.bf16.mxu0 0
        %1220 = vmatpush1.bf16.msra.mxu0 0
        %1221 = vmatprep.subr.bf16.mxu0 0
        %1222 = vmatpush1.bf16.msra.mxu0 0
        %1223 = vmatprep.subr.bf16.mxu0 0
        %1224 = vmatpush1.bf16.msra.mxu0 0
        %1225 = vmatprep.subr.bf16.mxu0 0
        %1226 = vmatpush1.bf16.msra.mxu0 0
        %1227 = vmatprep.subr.bf16.mxu0 0
        %1228 = vmatpush1.bf16.msra.mxu0 0
        %1229 = vmatprep.subr.bf16.mxu0 0
        %1230 = vmatpush1.bf16.msra.mxu0 0
        %1231 = vmatprep.subr.bf16.mxu0 0
        %1232 = vmatpush1.bf16.msra.mxu0 0
        %1233 = vmatprep.subr.bf16.mxu0 0
        %1234 = vmatpush1.bf16.msra.mxu0 0
        %1235 = vmatprep.subr.bf16.mxu0 0
        %1236 = vmatpush1.bf16.msra.mxu0 0
        %1237 = vmatprep.mubr.bf16.mxu0 0
        %1238 = vmatmul.mubr.bf16.gmra.mrb[0].mxu0 %v595
        %v1239 = vpop.f32.mrb[0].mxu0
        %v1240 = vadd.f32 %v1080, %v1239
        %v1241 = vpop.f32.mrb[0].mxu0
        %v1242 = vpop.f32.mrb[0].mxu0
        %v1243 = vpop.f32.mrb[0].mxu0
        %1244 = vdwg.mxu0
        %v1249 = vunpack.c.l.b16 %v1057
        %v1250 = vunpack.c.l.b16 %v1058
        %v1251 = vunpack.c.l.b16 %v1059
        %v1252 = vunpack.c.l.b16 %v1060
        %v1253 = vpack.c.b16 %v1250, %v1249
        %v1254 = vpack.c.b16 %v1252, %v1251
        %1257 = vmatprep.subr.bf16.mxu0 0
        %1258 = vmatpush1.bf16.msra.mxu0 %v1253
        %1259 = vmatprep.subr.bf16.mxu0 0
        %1260 = vmatpush1.bf16.msra.mxu0 %v1254
        %1261 = vmatprep.subr.bf16.mxu0 0
        %1262 = vmatpush1.bf16.msra.mxu0 0
        %1263 = vmatprep.subr.bf16.mxu0 0
        %1264 = vmatpush1.bf16.msra.mxu0 0
        %1265 = vmatprep.subr.bf16.mxu0 0
        %1266 = vmatpush1.bf16.msra.mxu0 0
        %1267 = vmatprep.subr.bf16.mxu0 0
        %1268 = vmatpush1.bf16.msra.mxu0 0
        %1269 = vmatprep.subr.bf16.mxu0 0
        %1270 = vmatpush1.bf16.msra.mxu0 0
        %1271 = vmatprep.subr.bf16.mxu0 0
        %1272 = vmatpush1.bf16.msra.mxu0 0
        %1273 = vmatprep.subr.bf16.mxu0 0
        %1274 = vmatpush1.bf16.msra.mxu0 0
        %1275 = vmatprep.subr.bf16.mxu0 0
        %1276 = vmatpush1.bf16.msra.mxu0 0
        %1277 = vmatprep.subr.bf16.mxu0 0
        %1278 = vmatpush1.bf16.msra.mxu0 0
        %1279 = vmatprep.subr.bf16.mxu0 0
        %1280 = vmatpush1.bf16.msra.mxu0 0
        %1281 = vmatprep.subr.bf16.mxu0 0
        %1282 = vmatpush1.bf16.msra.mxu0 0
        %1283 = vmatprep.subr.bf16.mxu0 0
        %1284 = vmatpush1.bf16.msra.mxu0 0
        %1285 = vmatprep.subr.bf16.mxu0 0
        %1286 = vmatpush1.bf16.msra.mxu0 0
        %1287 = vmatprep.subr.bf16.mxu0 0
        %1288 = vmatpush1.bf16.msra.mxu0 0
        %1289 = vmatprep.mubr.bf16.mxu0 0
        %1290 = vmatmul.mubr.bf16.gmra.mrb[0].mxu0 %v595
        %v1291 = vpop.f32.mrb[0].mxu0
        %v1292 = vadd.f32 %v1084, %v1291
        %v1293 = vpop.f32.mrb[0].mxu0
        %v1294 = vpop.f32.mrb[0].mxu0
        %v1295 = vpop.f32.mrb[0].mxu0
        %1296 = vdwg.mxu0
        %v1297 = vpack.c.bf16 %v632, %v632
        %v1298 = vpack.c.bf16 %v684, %v684
        %v1299 = vpack.c.bf16 %v736, %v736
        %v1300 = vpack.c.bf16 %v788, %v788
        %v1301 = vpack.c.bf16 %v884, %v884
        %v1302 = vpack.c.bf16 %v936, %v936
        %v1303 = vpack.c.bf16 %v988, %v988
        %v1304 = vpack.c.bf16 %v1040, %v1040
        %vm1305 = vcmask 64512
        %v1307 = vsel %vm1305, %v1297, 0
        %v1310 = vsel %vm1305, %v1301, 0
        %1312 = vmatprep.subr.bf16.mxu0 0
        %1313 = vmatpush1.bf16.xpose.msra.mxu0 %v1310
        %1314 = vmatprep.subr.bf16.mxu0 0
        %1315 = vmatpush1.bf16.xpose.msra.mxu0 0
        %1316 = vmatprep.subr.bf16.mxu0 0
        %1317 = vmatpush1.bf16.xpose.msra.mxu0 0
        %1318 = vmatprep.subr.bf16.mxu0 0
        %1319 = vmatpush1.bf16.xpose.msra.mxu0 0
        %1320 = vmatprep.subr.bf16.mxu0 0
        %1321 = vmatpush1.bf16.xpose.msra.mxu0 0
        %1322 = vmatprep.subr.bf16.mxu0 0
        %1323 = vmatpush1.bf16.xpose.msra.mxu0 0
        %1324 = vmatprep.subr.bf16.mxu0 0
        %1325 = vmatpush1.bf16.xpose.msra.mxu0 0
        %1326 = vmatprep.subr.bf16.mxu0 0
        %1327 = vmatpush1.bf16.xpose.msra.mxu0 0
        %1328 = vmatprep.subr.bf16.mxu0 0
        %1329 = vmatpush1.bf16.xpose.msra.mxu0 0
        %1330 = vmatprep.subr.bf16.mxu0 0
        %1331 = vmatpush1.bf16.xpose.msra.mxu0 0
        %1332 = vmatprep.subr.bf16.mxu0 0
        %1333 = vmatpush1.bf16.xpose.msra.mxu0 0
        %1334 = vmatprep.subr.bf16.mxu0 0
        %1335 = vmatpush1.bf16.xpose.msra.mxu0 0
        %1336 = vmatprep.subr.bf16.mxu0 0
        %1337 = vmatpush1.bf16.xpose.msra.mxu0 0
        %1338 = vmatprep.subr.bf16.mxu0 0
        %1339 = vmatpush1.bf16.xpose.msra.mxu0 0
        %1340 = vmatprep.subr.bf16.mxu0 0
        %1341 = vmatpush1.bf16.xpose.msra.mxu0 0
        %1342 = vmatprep.subr.bf16.mxu0 0
        %1343 = vmatpush1.bf16.xpose.msra.mxu0 0
        %1344 = vmatprep.mubr.bf16.mxu0 0
        %1345 = vmatmul.mubr.bf16.gmra.mrb[0].mxu0 %v1307
        %v1346 = vpop.f32.mrb[0].mxu0
        %v1347 = vadd.f32 0.0, %v1346
        %v1348 = vpop.f32.mrb[0].mxu0
        %v1349 = vpop.f32.mrb[0].mxu0
        %v1350 = vpop.f32.mrb[0].mxu0
        %1351 = vdwg.mxu0
        %v1353 = vsel %vm1305, %v1298, 0
        %v1356 = vsel %vm1305, %v1302, 0
        %1358 = vmatprep.subr.bf16.mxu0 0
        %1359 = vmatpush1.bf16.xpose.msra.mxu0 %v1356
        %1360 = vmatprep.subr.bf16.mxu0 0
        %1361 = vmatpush1.bf16.xpose.msra.mxu0 0
        %1362 = vmatprep.subr.bf16.mxu0 0
        %1363 = vmatpush1.bf16.xpose.msra.mxu0 0
        %1364 = vmatprep.subr.bf16.mxu0 0
        %1365 = vmatpush1.bf16.xpose.msra.mxu0 0
        %1366 = vmatprep.subr.bf16.mxu0 0
        %1367 = vmatpush1.bf16.xpose.msra.mxu0 0
        %1368 = vmatprep.subr.bf16.mxu0 0
        %1369 = vmatpush1.bf16.xpose.msra.mxu0 0
        %1370 = vmatprep.subr.bf16.mxu0 0
        %1371 = vmatpush1.bf16.xpose.msra.mxu0 0
        %1372 = vmatprep.subr.bf16.mxu0 0
        %1373 = vmatpush1.bf16.xpose.msra.mxu0 0
        %1374 = vmatprep.subr.bf16.mxu0 0
        %1375 = vmatpush1.bf16.xpose.msra.mxu0 0
        %1376 = vmatprep.subr.bf16.mxu0 0
        %1377 = vmatpush1.bf16.xpose.msra.mxu0 0
        %1378 = vmatprep.subr.bf16.mxu0 0
        %1379 = vmatpush1.bf16.xpose.msra.mxu0 0
        %1380 = vmatprep.subr.bf16.mxu0 0
        %1381 = vmatpush1.bf16.xpose.msra.mxu0 0
        %1382 = vmatprep.subr.bf16.mxu0 0
        %1383 = vmatpush1.bf16.xpose.msra.mxu0 0
        %1384 = vmatprep.subr.bf16.mxu0 0
        %1385 = vmatpush1.bf16.xpose.msra.mxu0 0
        %1386 = vmatprep.subr.bf16.mxu0 0
        %1387 = vmatpush1.bf16.xpose.msra.mxu0 0
        %1388 = vmatprep.subr.bf16.mxu0 0
        %1389 = vmatpush1.bf16.xpose.msra.mxu0 0
        %1390 = vmatprep.mubr.bf16.mxu0 0
        %1391 = vmatmul.mubr.bf16.gmra.mrb[0].mxu0 %v1353
        %v1392 = vpop.f32.mrb[0].mxu0
        %v1393 = vadd.f32 0.0, %v1392
        %v1394 = vpop.f32.mrb[0].mxu0
        %v1395 = vpop.f32.mrb[0].mxu0
        %v1396 = vpop.f32.mrb[0].mxu0
        %1397 = vdwg.mxu0
        %v1399 = vsel %vm1305, %v1299, 0
        %v1402 = vsel %vm1305, %v1303, 0
        %1404 = vmatprep.subr.bf16.mxu0 0
        %1405 = vmatpush1.bf16.xpose.msra.mxu0 %v1402
        %1406 = vmatprep.subr.bf16.mxu0 0
        %1407 = vmatpush1.bf16.xpose.msra.mxu0 0
        %1408 = vmatprep.subr.bf16.mxu0 0
        %1409 = vmatpush1.bf16.xpose.msra.mxu0 0
        %1410 = vmatprep.subr.bf16.mxu0 0
        %1411 = vmatpush1.bf16.xpose.msra.mxu0 0
        %1412 = vmatprep.subr.bf16.mxu0 0
        %1413 = vmatpush1.bf16.xpose.msra.mxu0 0
        %1414 = vmatprep.subr.bf16.mxu0 0
        %1415 = vmatpush1.bf16.xpose.msra.mxu0 0
        %1416 = vmatprep.subr.bf16.mxu0 0
        %1417 = vmatpush1.bf16.xpose.msra.mxu0 0
        %1418 = vmatprep.subr.bf16.mxu0 0
        %1419 = vmatpush1.bf16.xpose.msra.mxu0 0
        %1420 = vmatprep.subr.bf16.mxu0 0
        %1421 = vmatpush1.bf16.xpose.msra.mxu0 0
        %1422 = vmatprep.subr.bf16.mxu0 0
        %1423 = vmatpush1.bf16.xpose.msra.mxu0 0
        %1424 = vmatprep.subr.bf16.mxu0 0
        %1425 = vmatpush1.bf16.xpose.msra.mxu0 0
        %1426 = vmatprep.subr.bf16.mxu0 0
        %1427 = vmatpush1.bf16.xpose.msra.mxu0 0
        %1428 = vmatprep.subr.bf16.mxu0 0
        %1429 = vmatpush1.bf16.xpose.msra.mxu0 0
        %1430 = vmatprep.subr.bf16.mxu0 0
        %1431 = vmatpush1.bf16.xpose.msra.mxu0 0
        %1432 = vmatprep.subr.bf16.mxu0 0
        %1433 = vmatpush1.bf16.xpose.msra.mxu0 0
        %1434 = vmatprep.subr.bf16.mxu0 0
        %1435 = vmatpush1.bf16.xpose.msra.mxu0 0
        %1436 = vmatprep.mubr.bf16.mxu0 0
        %1437 = vmatmul.mubr.bf16.gmra.mrb[0].mxu0 %v1399
        %v1438 = vpop.f32.mrb[0].mxu0
        %v1439 = vadd.f32 0.0, %v1438
        %v1440 = vpop.f32.mrb[0].mxu0
        %v1441 = vpop.f32.mrb[0].mxu0
        %v1442 = vpop.f32.mrb[0].mxu0
        %1443 = vdwg.mxu0
        %v1445 = vsel %vm1305, %v1300, 0
        %v1448 = vsel %vm1305, %v1304, 0
        %1450 = vmatprep.subr.bf16.mxu0 0
        %1451 = vmatpush1.bf16.xpose.msra.mxu0 %v1448
        %1452 = vmatprep.subr.bf16.mxu0 0
        %1453 = vmatpush1.bf16.xpose.msra.mxu0 0
        %1454 = vmatprep.subr.bf16.mxu0 0
        %1455 = vmatpush1.bf16.xpose.msra.mxu0 0
        %1456 = vmatprep.subr.bf16.mxu0 0
        %1457 = vmatpush1.bf16.xpose.msra.mxu0 0
        %1458 = vmatprep.subr.bf16.mxu0 0
        %1459 = vmatpush1.bf16.xpose.msra.mxu0 0
        %1460 = vmatprep.subr.bf16.mxu0 0
        %1461 = vmatpush1.bf16.xpose.msra.mxu0 0
        %1462 = vmatprep.subr.bf16.mxu0 0
        %1463 = vmatpush1.bf16.xpose.msra.mxu0 0
        %1464 = vmatprep.subr.bf16.mxu0 0
        %1465 = vmatpush1.bf16.xpose.msra.mxu0 0
        %1466 = vmatprep.subr.bf16.mxu0 0
        %1467 = vmatpush1.bf16.xpose.msra.mxu0 0
        %1468 = vmatprep.subr.bf16.mxu0 0
        %1469 = vmatpush1.bf16.xpose.msra.mxu0 0
        %1470 = vmatprep.subr.bf16.mxu0 0
        %1471 = vmatpush1.bf16.xpose.msra.mxu0 0
        %1472 = vmatprep.subr.bf16.mxu0 0
        %1473 = vmatpush1.bf16.xpose.msra.mxu0 0
        %1474 = vmatprep.subr.bf16.mxu0 0
        %1475 = vmatpush1.bf16.xpose.msra.mxu0 0
        %1476 = vmatprep.subr.bf16.mxu0 0
        %1477 = vmatpush1.bf16.xpose.msra.mxu0 0
        %1478 = vmatprep.subr.bf16.mxu0 0
        %1479 = vmatpush1.bf16.xpose.msra.mxu0 0
        %1480 = vmatprep.subr.bf16.mxu0 0
        %1481 = vmatpush1.bf16.xpose.msra.mxu0 0
        %1482 = vmatprep.mubr.bf16.mxu0 0
        %1483 = vmatmul.mubr.bf16.gmra.mrb[0].mxu0 %v1445
        %v1484 = vpop.f32.mrb[0].mxu0
        %v1485 = vadd.f32 0.0, %v1484
        %v1486 = vpop.f32.mrb[0].mxu0
        %v1487 = vpop.f32.mrb[0].mxu0
        %v1488 = vpop.f32.mrb[0].mxu0
        %1489 = vdwg.mxu0
        %v1490 = vmul.f32 %v1347, 0.35355338
        %v1491 = vmul.f32 %v1393, 0.35355338
        %v1492 = vmul.f32 %v1439, 0.35355338
        %v1493 = vmul.f32 %v1485, 0.35355338
        %v1494 = vsel %vm1305, %v1490, -inf
        %1495 = vmax.xlane.f32.xlu0 %v1494
        %v1496 = vpop.xlane.xlu0 %1495
        %v1497 = vsel %vm1305, %v1491, -inf
        %1498 = vmax.xlane.f32.xlu0 %v1497
        %v1499 = vpop.xlane.xlu0 %1498
        %v1500 = vsel %vm1305, %v1492, -inf
        %1501 = vmax.xlane.f32.xlu0 %v1500
        %v1502 = vpop.xlane.xlu0 %1501
        %v1503 = vsel %vm1305, %v1493, -inf
        %1504 = vmax.xlane.f32.xlu0 %v1503
        %v1505 = vpop.xlane.xlu0 %1504
        %v1506 = vsub.f32 %v1490, %v1496
        %v1507 = vsub.f32 %v1491, %v1499
        %v1508 = vsub.f32 %v1492, %v1502
        %v1509 = vsub.f32 %v1493, %v1505
        %v1510 = vmul.f32 %v1506, 1.442695
        %v1511 = vpow.pop %v1510
        %v1512 = vmul.f32 %v1507, 1.442695
        %v1513 = vpow.pop %v1512
        %v1514 = vmul.f32 %v1508, 1.442695
        %v1515 = vpow.pop %v1514
        %v1516 = vmul.f32 %v1509, 1.442695
        %v1517 = vpow.pop %v1516
        %v1518 = vsel %vm1305, %v1511, 0.0
        %1519 = vadd.xlane.f32.xlu0 %v1518
        %v1520 = vpop.xlane.xlu0 %1519
        %v1521 = vsel %vm1305, %v1513, 0.0
        %1522 = vadd.xlane.f32.xlu0 %v1521
        %v1523 = vpop.xlane.xlu0 %1522
        %v1524 = vsel %vm1305, %v1515, 0.0
        %1525 = vadd.xlane.f32.xlu0 %v1524
        %v1526 = vpop.xlane.xlu0 %1525
        %v1527 = vsel %vm1305, %v1517, 0.0
        %1528 = vadd.xlane.f32.xlu0 %v1527
        %v1529 = vpop.xlane.xlu0 %1528
        %v1530 = vrcp.pop %v1520
        %v1531 = vrcp.pop %v1523
        %v1532 = vrcp.pop %v1526
        %v1533 = vrcp.pop %v1529
        %v1534 = vmul.f32 %v1511, %v1530
        %v1535 = vmul.f32 %v1513, %v1531
        %v1536 = vmul.f32 %v1515, %v1532
        %v1537 = vmul.f32 %v1517, %v1533
        %v1538 = vpack.c.bf16 %v1534, %v1534
        %v1539 = vpack.c.bf16 %v1535, %v1535
        %v1540 = vpack.c.bf16 %v1536, %v1536
        %v1541 = vpack.c.bf16 %v1537, %v1537
        %v1542 = vpack.c.bf16 %v1136, %v1136
        %v1543 = vpack.c.bf16 %v1188, %v1188
        %v1544 = vpack.c.bf16 %v1240, %v1240
        %v1545 = vpack.c.bf16 %v1292, %v1292
        %v1547 = vsel %vm1305, %v1538, 0
        %vm1549 = vcmask 1043456
        %v1551 = vsel %vm1549, %v1542, 0
        %1553 = vmatprep.subr.bf16.mxu0 0
        %1554 = vmatpush1.bf16.msra.mxu0 %v1551
        %1555 = vmatprep.subr.bf16.mxu0 0
        %1556 = vmatpush1.bf16.msra.mxu0 0
        %1557 = vmatprep.subr.bf16.mxu0 0
        %1558 = vmatpush1.bf16.msra.mxu0 0
        %1559 = vmatprep.subr.bf16.mxu0 0
        %1560 = vmatpush1.bf16.msra.mxu0 0
        %1561 = vmatprep.subr.bf16.mxu0 0
        %1562 = vmatpush1.bf16.msra.mxu0 0
        %1563 = vmatprep.subr.bf16.mxu0 0
        %1564 = vmatpush1.bf16.msra.mxu0 0
        %1565 = vmatprep.subr.bf16.mxu0 0
        %1566 = vmatpush1.bf16.msra.mxu0 0
        %1567 = vmatprep.subr.bf16.mxu0 0
        %1568 = vmatpush1.bf16.msra.mxu0 0
        %1569 = vmatprep.subr.bf16.mxu0 0
        %1570 = vmatpush1.bf16.msra.mxu0 0
        %1571 = vmatprep.subr.bf16.mxu0 0
        %1572 = vmatpush1.bf16.msra.mxu0 0
        %1573 = vmatprep.subr.bf16.mxu0 0
        %1574 = vmatpush1.bf16.msra.mxu0 0
        %1575 = vmatprep.subr.bf16.mxu0 0
        %1576 = vmatpush1.bf16.msra.mxu0 0
        %1577 = vmatprep.subr.bf16.mxu0 0
        %1578 = vmatpush1.bf16.msra.mxu0 0
        %1579 = vmatprep.subr.bf16.mxu0 0
        %1580 = vmatpush1.bf16.msra.mxu0 0
        %1581 = vmatprep.subr.bf16.mxu0 0
        %1582 = vmatpush1.bf16.msra.mxu0 0
        %1583 = vmatprep.subr.bf16.mxu0 0
        %1584 = vmatpush1.bf16.msra.mxu0 0
        %1585 = vmatprep.mubr.bf16.mxu0 0
        %1586 = vmatmul.mubr.bf16.gmra.mrb[0].mxu0 %v1547
        %v1587 = vpop.f32.mrb[0].mxu0
        %v1588 = vadd.f32 0.0, %v1587
        %v1589 = vpop.f32.mrb[0].mxu0
        %v1590 = vpop.f32.mrb[0].mxu0
        %v1591 = vpop.f32.mrb[0].mxu0
        %1592 = vdwg.mxu0
        %v1594 = vsel %vm1305, %v1539, 0
        %v1597 = vsel %vm1549, %v1543, 0
        %1599 = vmatprep.subr.bf16.mxu0 0
        %1600 = vmatpush1.bf16.msra.mxu0 %v1597
        %1601 = vmatprep.subr.bf16.mxu0 0
        %1602 = vmatpush1.bf16.msra.mxu0 0
        %1603 = vmatprep.subr.bf16.mxu0 0
        %1604 = vmatpush1.bf16.msra.mxu0 0
        %1605 = vmatprep.subr.bf16.mxu0 0
        %1606 = vmatpush1.bf16.msra.mxu0 0
        %1607 = vmatprep.subr.bf16.mxu0 0
        %1608 = vmatpush1.bf16.msra.mxu0 0
        %1609 = vmatprep.subr.bf16.mxu0 0
        %1610 = vmatpush1.bf16.msra.mxu0 0
        %1611 = vmatprep.subr.bf16.mxu0 0
        %1612 = vmatpush1.bf16.msra.mxu0 0
        %1613 = vmatprep.subr.bf16.mxu0 0
        %1614 = vmatpush1.bf16.msra.mxu0 0
        %1615 = vmatprep.subr.bf16.mxu0 0
        %1616 = vmatpush1.bf16.msra.mxu0 0
        %1617 = vmatprep.subr.bf16.mxu0 0
        %1618 = vmatpush1.bf16.msra.mxu0 0
        %1619 = vmatprep.subr.bf16.mxu0 0
        %1620 = vmatpush1.bf16.msra.mxu0 0
        %1621 = vmatprep.subr.bf16.mxu0 0
        %1622 = vmatpush1.bf16.msra.mxu0 0
        %1623 = vmatprep.subr.bf16.mxu0 0
        %1624 = vmatpush1.bf16.msra.mxu0 0
        %1625 = vmatprep.subr.bf16.mxu0 0
        %1626 = vmatpush1.bf16.msra.mxu0 0
        %1627 = vmatprep.subr.bf16.mxu0 0
        %1628 = vmatpush1.bf16.msra.mxu0 0
        %1629 = vmatprep.subr.bf16.mxu0 0
        %1630 = vmatpush1.bf16.msra.mxu0 0
        %1631 = vmatprep.mubr.bf16.mxu0 0
        %1632 = vmatmul.mubr.bf16.gmra.mrb[0].mxu0 %v1594
        %v1633 = vpop.f32.mrb[0].mxu0
        %v1634 = vadd.f32 0.0, %v1633
        %v1635 = vpop.f32.mrb[0].mxu0
        %v1636 = vpop.f32.mrb[0].mxu0
        %v1637 = vpop.f32.mrb[0].mxu0
        %1638 = vdwg.mxu0
        %v1640 = vsel %vm1305, %v1540, 0
        %v1643 = vsel %vm1549, %v1544, 0
        %1645 = vmatprep.subr.bf16.mxu0 0
        %1646 = vmatpush1.bf16.msra.mxu0 %v1643
        %1647 = vmatprep.subr.bf16.mxu0 0
        %1648 = vmatpush1.bf16.msra.mxu0 0
        %1649 = vmatprep.subr.bf16.mxu0 0
        %1650 = vmatpush1.bf16.msra.mxu0 0
        %1651 = vmatprep.subr.bf16.mxu0 0
        %1652 = vmatpush1.bf16.msra.mxu0 0
        %1653 = vmatprep.subr.bf16.mxu0 0
        %1654 = vmatpush1.bf16.msra.mxu0 0
        %1655 = vmatprep.subr.bf16.mxu0 0
        %1656 = vmatpush1.bf16.msra.mxu0 0
        %1657 = vmatprep.subr.bf16.mxu0 0
        %1658 = vmatpush1.bf16.msra.mxu0 0
        %1659 = vmatprep.subr.bf16.mxu0 0
        %1660 = vmatpush1.bf16.msra.mxu0 0
        %1661 = vmatprep.subr.bf16.mxu0 0
        %1662 = vmatpush1.bf16.msra.mxu0 0
        %1663 = vmatprep.subr.bf16.mxu0 0
        %1664 = vmatpush1.bf16.msra.mxu0 0
        %1665 = vmatprep.subr.bf16.mxu0 0
        %1666 = vmatpush1.bf16.msra.mxu0 0
        %1667 = vmatprep.subr.bf16.mxu0 0
        %1668 = vmatpush1.bf16.msra.mxu0 0
        %1669 = vmatprep.subr.bf16.mxu0 0
        %1670 = vmatpush1.bf16.msra.mxu0 0
        %1671 = vmatprep.subr.bf16.mxu0 0
        %1672 = vmatpush1.bf16.msra.mxu0 0
        %1673 = vmatprep.subr.bf16.mxu0 0
        %1674 = vmatpush1.bf16.msra.mxu0 0
        %1675 = vmatprep.subr.bf16.mxu0 0
        %1676 = vmatpush1.bf16.msra.mxu0 0
        %1677 = vmatprep.mubr.bf16.mxu0 0
        %1678 = vmatmul.mubr.bf16.gmra.mrb[0].mxu0 %v1640
        %v1679 = vpop.f32.mrb[0].mxu0
        %v1680 = vadd.f32 0.0, %v1679
        %v1681 = vpop.f32.mrb[0].mxu0
        %v1682 = vpop.f32.mrb[0].mxu0
        %v1683 = vpop.f32.mrb[0].mxu0
        %1684 = vdwg.mxu0
        %v1686 = vsel %vm1305, %v1541, 0
        %v1689 = vsel %vm1549, %v1545, 0
        %1691 = vmatprep.subr.bf16.mxu0 0
        %1692 = vmatpush1.bf16.msra.mxu0 %v1689
        %1693 = vmatprep.subr.bf16.mxu0 0
        %1694 = vmatpush1.bf16.msra.mxu0 0
        %1695 = vmatprep.subr.bf16.mxu0 0
        %1696 = vmatpush1.bf16.msra.mxu0 0
        %1697 = vmatprep.subr.bf16.mxu0 0
        %1698 = vmatpush1.bf16.msra.mxu0 0
        %1699 = vmatprep.subr.bf16.mxu0 0
        %1700 = vmatpush1.bf16.msra.mxu0 0
        %1701 = vmatprep.subr.bf16.mxu0 0
        %1702 = vmatpush1.bf16.msra.mxu0 0
        %1703 = vmatprep.subr.bf16.mxu0 0
        %1704 = vmatpush1.bf16.msra.mxu0 0
        %1705 = vmatprep.subr.bf16.mxu0 0
        %1706 = vmatpush1.bf16.msra.mxu0 0
        %1707 = vmatprep.subr.bf16.mxu0 0
        %1708 = vmatpush1.bf16.msra.mxu0 0
        %1709 = vmatprep.subr.bf16.mxu0 0
        %1710 = vmatpush1.bf16.msra.mxu0 0
        %1711 = vmatprep.subr.bf16.mxu0 0
        %1712 = vmatpush1.bf16.msra.mxu0 0
        %1713 = vmatprep.subr.bf16.mxu0 0
        %1714 = vmatpush1.bf16.msra.mxu0 0
        %1715 = vmatprep.subr.bf16.mxu0 0
        %1716 = vmatpush1.bf16.msra.mxu0 0
        %1717 = vmatprep.subr.bf16.mxu0 0
        %1718 = vmatpush1.bf16.msra.mxu0 0
        %1719 = vmatprep.subr.bf16.mxu0 0
        %1720 = vmatpush1.bf16.msra.mxu0 0
        %1721 = vmatprep.subr.bf16.mxu0 0
        %1722 = vmatpush1.bf16.msra.mxu0 0
        %1723 = vmatprep.mubr.bf16.mxu0 0
        %1724 = vmatmul.mubr.bf16.gmra.mrb[0].mxu0 %v1686
        %v1725 = vpop.f32.mrb[0].mxu0
        %v1726 = vadd.f32 0.0, %v1725
        %v1727 = vpop.f32.mrb[0].mxu0
        %v1728 = vpop.f32.mrb[0].mxu0
        %v1729 = vpop.f32.mrb[0].mxu0
        %1730 = vdwg.mxu0
        %v1731 = vpack.c.bf16 %v1588, %v1588
        %v1732 = vpack.c.bf16 %v1634, %v1634
        %v1733 = vpack.c.bf16 %v1680, %v1680
        %v1734 = vpack.c.bf16 %v1726, %v1726
        %v1735 = vld [vmem:[%s8] sm:$0xf]
        %v1736 = vld [vmem:[%s8 + $0x4] sm:$0xf]
        %v1737 = vld [vmem:[%s8 + $0x8] sm:$0xf]
        %v1738 = vld [vmem:[%s8 + $0xc] sm:$0xf]
        %v1740 = vsel %vm1305, %v1731, 0
        %v1743 = vsel %vm1549, %v1735, 0
        %1745 = vmatprep.subr.bf16.mxu0 0
        %1746 = vmatpush1.bf16.msra.mxu0 %v1743
        %1747 = vmatprep.subr.bf16.mxu0 0
        %1748 = vmatpush1.bf16.msra.mxu0 0
        %1749 = vmatprep.subr.bf16.mxu0 0
        %1750 = vmatpush1.bf16.msra.mxu0 0
        %1751 = vmatprep.subr.bf16.mxu0 0
        %1752 = vmatpush1.bf16.msra.mxu0 0
        %1753 = vmatprep.subr.bf16.mxu0 0
        %1754 = vmatpush1.bf16.msra.mxu0 0
        %1755 = vmatprep.subr.bf16.mxu0 0
        %1756 = vmatpush1.bf16.msra.mxu0 0
        %1757 = vmatprep.subr.bf16.mxu0 0
        %1758 = vmatpush1.bf16.msra.mxu0 0
        %1759 = vmatprep.subr.bf16.mxu0 0
        %1760 = vmatpush1.bf16.msra.mxu0 0
        %1761 = vmatprep.subr.bf16.mxu0 0
        %1762 = vmatpush1.bf16.msra.mxu0 0
        %1763 = vmatprep.subr.bf16.mxu0 0
        %1764 = vmatpush1.bf16.msra.mxu0 0
        %1765 = vmatprep.subr.bf16.mxu0 0
        %1766 = vmatpush1.bf16.msra.mxu0 0
        %1767 = vmatprep.subr.bf16.mxu0 0
        %1768 = vmatpush1.bf16.msra.mxu0 0
        %1769 = vmatprep.subr.bf16.mxu0 0
        %1770 = vmatpush1.bf16.msra.mxu0 0
        %1771 = vmatprep.subr.bf16.mxu0 0
        %1772 = vmatpush1.bf16.msra.mxu0 0
        %1773 = vmatprep.subr.bf16.mxu0 0
        %1774 = vmatpush1.bf16.msra.mxu0 0
        %1775 = vmatprep.subr.bf16.mxu0 0
        %1776 = vmatpush1.bf16.msra.mxu0 0
        %1777 = vmatprep.mubr.bf16.mxu0 0
        %1778 = vmatmul.mubr.bf16.gmra.mrb[0].mxu0 %v1740
        %v1779 = vpop.f32.mrb[0].mxu0
        %v1780 = vadd.f32 0.0, %v1779
        %v1781 = vpop.f32.mrb[0].mxu0
        %v1782 = vpop.f32.mrb[0].mxu0
        %v1783 = vpop.f32.mrb[0].mxu0
        %1784 = vdwg.mxu0
        %v1786 = vsel %vm1305, %v1732, 0
        %v1789 = vsel %vm1549, %v1736, 0
        %1791 = vmatprep.subr.bf16.mxu0 0
        %1792 = vmatpush1.bf16.msra.mxu0 %v1789
        %1793 = vmatprep.subr.bf16.mxu0 0
        %1794 = vmatpush1.bf16.msra.mxu0 0
        %1795 = vmatprep.subr.bf16.mxu0 0
        %1796 = vmatpush1.bf16.msra.mxu0 0
        %1797 = vmatprep.subr.bf16.mxu0 0
        %1798 = vmatpush1.bf16.msra.mxu0 0
        %1799 = vmatprep.subr.bf16.mxu0 0
        %1800 = vmatpush1.bf16.msra.mxu0 0
        %1801 = vmatprep.subr.bf16.mxu0 0
        %1802 = vmatpush1.bf16.msra.mxu0 0
        %1803 = vmatprep.subr.bf16.mxu0 0
        %1804 = vmatpush1.bf16.msra.mxu0 0
        %1805 = vmatprep.subr.bf16.mxu0 0
        %1806 = vmatpush1.bf16.msra.mxu0 0
        %1807 = vmatprep.subr.bf16.mxu0 0
        %1808 = vmatpush1.bf16.msra.mxu0 0
        %1809 = vmatprep.subr.bf16.mxu0 0
        %1810 = vmatpush1.bf16.msra.mxu0 0
        %1811 = vmatprep.subr.bf16.mxu0 0
        %1812 = vmatpush1.bf16.msra.mxu0 0
        %1813 = vmatprep.subr.bf16.mxu0 0
        %1814 = vmatpush1.bf16.msra.mxu0 0
        %1815 = vmatprep.subr.bf16.mxu0 0
        %1816 = vmatpush1.bf16.msra.mxu0 0
        %1817 = vmatprep.subr.bf16.mxu0 0
        %1818 = vmatpush1.bf16.msra.mxu0 0
        %1819 = vmatprep.subr.bf16.mxu0 0
        %1820 = vmatpush1.bf16.msra.mxu0 0
        %1821 = vmatprep.subr.bf16.mxu0 0
        %1822 = vmatpush1.bf16.msra.mxu0 0
        %1823 = vmatprep.mubr.bf16.mxu0 0
        %1824 = vmatmul.mubr.bf16.gmra.mrb[0].mxu0 %v1786
        %v1825 = vpop.f32.mrb[0].mxu0
        %v1826 = vadd.f32 0.0, %v1825
        %v1827 = vpop.f32.mrb[0].mxu0
        %v1828 = vpop.f32.mrb[0].mxu0
        %v1829 = vpop.f32.mrb[0].mxu0
        %1830 = vdwg.mxu0
        %v1832 = vsel %vm1305, %v1733, 0
        %v1835 = vsel %vm1549, %v1737, 0
        %1837 = vmatprep.subr.bf16.mxu0 0
        %1838 = vmatpush1.bf16.msra.mxu0 %v1835
        %1839 = vmatprep.subr.bf16.mxu0 0
        %1840 = vmatpush1.bf16.msra.mxu0 0
        %1841 = vmatprep.subr.bf16.mxu0 0
        %1842 = vmatpush1.bf16.msra.mxu0 0
        %1843 = vmatprep.subr.bf16.mxu0 0
        %1844 = vmatpush1.bf16.msra.mxu0 0
        %1845 = vmatprep.subr.bf16.mxu0 0
        %1846 = vmatpush1.bf16.msra.mxu0 0
        %1847 = vmatprep.subr.bf16.mxu0 0
        %1848 = vmatpush1.bf16.msra.mxu0 0
        %1849 = vmatprep.subr.bf16.mxu0 0
        %1850 = vmatpush1.bf16.msra.mxu0 0
        %1851 = vmatprep.subr.bf16.mxu0 0
        %1852 = vmatpush1.bf16.msra.mxu0 0
        %1853 = vmatprep.subr.bf16.mxu0 0
        %1854 = vmatpush1.bf16.msra.mxu0 0
        %1855 = vmatprep.subr.bf16.mxu0 0
        %1856 = vmatpush1.bf16.msra.mxu0 0
        %1857 = vmatprep.subr.bf16.mxu0 0
        %1858 = vmatpush1.bf16.msra.mxu0 0
        %1859 = vmatprep.subr.bf16.mxu0 0
        %1860 = vmatpush1.bf16.msra.mxu0 0
        %1861 = vmatprep.subr.bf16.mxu0 0
        %1862 = vmatpush1.bf16.msra.mxu0 0
        %1863 = vmatprep.subr.bf16.mxu0 0
        %1864 = vmatpush1.bf16.msra.mxu0 0
        %1865 = vmatprep.subr.bf16.mxu0 0
        %1866 = vmatpush1.bf16.msra.mxu0 0
        %1867 = vmatprep.subr.bf16.mxu0 0
        %1868 = vmatpush1.bf16.msra.mxu0 0
        %1869 = vmatprep.mubr.bf16.mxu0 0
        %1870 = vmatmul.mubr.bf16.gmra.mrb[0].mxu0 %v1832
        %v1871 = vpop.f32.mrb[0].mxu0
        %v1872 = vadd.f32 0.0, %v1871
        %v1873 = vpop.f32.mrb[0].mxu0
        %v1874 = vpop.f32.mrb[0].mxu0
        %v1875 = vpop.f32.mrb[0].mxu0
        %1876 = vdwg.mxu0
        %v1878 = vsel %vm1305, %v1734, 0
        %v1881 = vsel %vm1549, %v1738, 0
        %1883 = vmatprep.subr.bf16.mxu0 0
        %1884 = vmatpush1.bf16.msra.mxu0 %v1881
        %1885 = vmatprep.subr.bf16.mxu0 0
        %1886 = vmatpush1.bf16.msra.mxu0 0
        %1887 = vmatprep.subr.bf16.mxu0 0
        %1888 = vmatpush1.bf16.msra.mxu0 0
        %1889 = vmatprep.subr.bf16.mxu0 0
        %1890 = vmatpush1.bf16.msra.mxu0 0
        %1891 = vmatprep.subr.bf16.mxu0 0
        %1892 = vmatpush1.bf16.msra.mxu0 0
        %1893 = vmatprep.subr.bf16.mxu0 0
        %1894 = vmatpush1.bf16.msra.mxu0 0
        %1895 = vmatprep.subr.bf16.mxu0 0
        %1896 = vmatpush1.bf16.msra.mxu0 0
        %1897 = vmatprep.subr.bf16.mxu0 0
        %1898 = vmatpush1.bf16.msra.mxu0 0
        %1899 = vmatprep.subr.bf16.mxu0 0
        %1900 = vmatpush1.bf16.msra.mxu0 0
        %1901 = vmatprep.subr.bf16.mxu0 0
        %1902 = vmatpush1.bf16.msra.mxu0 0
        %1903 = vmatprep.subr.bf16.mxu0 0
        %1904 = vmatpush1.bf16.msra.mxu0 0
        %1905 = vmatprep.subr.bf16.mxu0 0
        %1906 = vmatpush1.bf16.msra.mxu0 0
        %1907 = vmatprep.subr.bf16.mxu0 0
        %1908 = vmatpush1.bf16.msra.mxu0 0
        %1909 = vmatprep.subr.bf16.mxu0 0
        %1910 = vmatpush1.bf16.msra.mxu0 0
        %1911 = vmatprep.subr.bf16.mxu0 0
        %1912 = vmatpush1.bf16.msra.mxu0 0
        %1913 = vmatprep.subr.bf16.mxu0 0
        %1914 = vmatpush1.bf16.msra.mxu0 0
        %1915 = vmatprep.mubr.bf16.mxu0 0
        %1916 = vmatmul.mubr.bf16.gmra.mrb[0].mxu0 %v1878
        %v1917 = vpop.f32.mrb[0].mxu0
        %v1918 = vadd.f32 0.0, %v1917
        %v1919 = vpop.f32.mrb[0].mxu0
        %v1920 = vpop.f32.mrb[0].mxu0
        %v1921 = vpop.f32.mrb[0].mxu0
        %1922 = vdwg.mxu0
        %v1923 = vsel %vm593, %v1780, 0.0
        %v1924 = vsel %vm593, %v1826, 0.0
        %v1925 = vadd.f32 %v1923, %v1924
        %v1926 = vsel %vm593, %v1872, 0.0
        %v1927 = vadd.f32 %v1925, %v1926
        %v1928 = vsel %vm593, %v1918, 0.0
        %v1929 = vadd.f32 %v1927, %v1928
        %v1930 = vld [vmem:[%s9] sm:$0x1]
        %v1932 = vlaneseq
        %v1933 = vshrl.u32 %v1932, 7
        %v1934 = vsub.s32 0, %v1933
        %v1935 = vrot.slane %v1930, %v1934
        %v1937 = vadd.f32 %v1929, %v1935
        %v1938 = vadd.f32 %v1937, %v535
        %v1939 = vsel %vm593, %v1938, 0.0
        %1940 = vadd.xlane.f32.xlu0 %v1939
        %v1941 = vpop.xlane.xlu0 %1940
        %v1942 = vrcp.pop 32.0
        %v1943 = vmul.f32 %v1941, %v1942
        %v1944 = vsub.f32 %v1938, %v1943
        %v1945 = vmul.f32 %v1944, %v1944
        %v1946 = vsel %vm593, %v1945, 0.0
        %1947 = vadd.xlane.f32.xlu0 %v1946
        %v1948 = vpop.xlane.xlu0 %1947
        %v1949 = vmul.f32 %v1948, %v1942
        %v1950 = vadd.f32 %v1949, 1e-12
        %v1951 = vrsqrt.pop %v1950
        %v1952 = vmul.f32 %v1944, %v1951
        %v1953 = vld [vmem:[%s10] sm:$0x1]
        %v1955 = vlaneseq
        %v1956 = vshrl.u32 %v1955, 7
        %v1957 = vsub.s32 0, %v1956
        %v1958 = vrot.slane %v1953, %v1957
        %v1960 = vmul.f32 %v1952, %v1958
        %v1961 = vld [vmem:[%s11] sm:$0x1]
        %v1963 = vlaneseq
        %v1964 = vshrl.u32 %v1963, 7
        %v1965 = vsub.s32 0, %v1964
        %v1966 = vrot.slane %v1961, %v1965
        %v1968 = vadd.f32 %v1960, %v1966
        %v1969 = vpack.c.bf16 %v1968, %v1968
        %v1970 = vld [vmem:[%s12] sm:$0xf]
        %v1971 = vld [vmem:[%s12 + $0x4] sm:$0xf]
        %v1972 = vld [vmem:[%s12 + $0x8] sm:$0xf]
        %v1973 = vld [vmem:[%s12 + $0xc] sm:$0xf]
        %v1974 = vld [vmem:[%s13] sm:$0x1]
        %v1976 = vlaneseq
        %v1977 = vshrl.u32 %v1976, 7
        %v1978 = vsub.s32 0, %v1977
        %v1979 = vrot.slane %v1974, %v1978
        %v1985 = vunpack.c.l.b16 %v1970
        %v1986 = vunpack.c.l.b16 %v1971
        %v1987 = vunpack.c.l.b16 %v1972
        %v1988 = vunpack.c.l.b16 %v1973
        %v1989 = vpack.c.b16 %v1986, %v1985
        %v1990 = vpack.c.b16 %v1988, %v1987
        %v1994 = vsel %vm593, %v1969, 0
        %1996 = vmatprep.subr.bf16.mxu0 0
        %1997 = vmatpush1.bf16.msra.mxu0 %v1989
        %1998 = vmatprep.subr.bf16.mxu0 0
        %1999 = vmatpush1.bf16.msra.mxu0 %v1990
        %2000 = vmatprep.subr.bf16.mxu0 0
        %2001 = vmatpush1.bf16.msra.mxu0 0
        %2002 = vmatprep.subr.bf16.mxu0 0
        %2003 = vmatpush1.bf16.msra.mxu0 0
        %2004 = vmatprep.subr.bf16.mxu0 0
        %2005 = vmatpush1.bf16.msra.mxu0 0
        %2006 = vmatprep.subr.bf16.mxu0 0
        %2007 = vmatpush1.bf16.msra.mxu0 0
        %2008 = vmatprep.subr.bf16.mxu0 0
        %2009 = vmatpush1.bf16.msra.mxu0 0
        %2010 = vmatprep.subr.bf16.mxu0 0
        %2011 = vmatpush1.bf16.msra.mxu0 0
        %2012 = vmatprep.subr.bf16.mxu0 0
        %2013 = vmatpush1.bf16.msra.mxu0 0
        %2014 = vmatprep.subr.bf16.mxu0 0
        %2015 = vmatpush1.bf16.msra.mxu0 0
        %2016 = vmatprep.subr.bf16.mxu0 0
        %2017 = vmatpush1.bf16.msra.mxu0 0
        %2018 = vmatprep.subr.bf16.mxu0 0
        %2019 = vmatpush1.bf16.msra.mxu0 0
        %2020 = vmatprep.subr.bf16.mxu0 0
        %2021 = vmatpush1.bf16.msra.mxu0 0
        %2022 = vmatprep.subr.bf16.mxu0 0
        %2023 = vmatpush1.bf16.msra.mxu0 0
        %2024 = vmatprep.subr.bf16.mxu0 0
        %2025 = vmatpush1.bf16.msra.mxu0 0
        %2026 = vmatprep.subr.bf16.mxu0 0
        %2027 = vmatpush1.bf16.msra.mxu0 0
        %2028 = vmatprep.mubr.bf16.mxu0 0
        %2029 = vmatmul.mubr.bf16.gmra.mrb[0].mxu0 %v1994
        %v2030 = vpop.f32.mrb[0].mxu0
        %v2031 = vadd.f32 %v1979, %v2030
        %v2032 = vpop.f32.mrb[0].mxu0
        %v2033 = vpop.f32.mrb[0].mxu0
        %v2034 = vpop.f32.mrb[0].mxu0
        %2035 = vdwg.mxu0
        %v2036 = vmul.f32 %v2031, 0.5
        %v2037 = vmul.f32 %v2031, 0.70710677
        %vm2038 = vcmp.lt.f32.partialorder %v2037, 0.0
        %v2039 = vsel %vm2038, -1.0, 1.0
        %v2040 = vand.u32 2147483647, %v2037
        %v2041 = vmul.f32 %v2040, 0.3275911
        %v2042 = vadd.f32 %v2041, 1.0
        %v2043 = vrcp.pop %v2042
        %v2044 = vmul.f32 1.0, %v2043
        %v2045 = vmul.f32 %v2044, 1.0614054
        %v2046 = vadd.f32 %v2045, -1.4531521
        %v2047 = vmul.f32 %v2046, %v2044
        %v2048 = vadd.f32 %v2047, 1.4214138
        %v2049 = vmul.f32 %v2048, %v2044
        %v2050 = vadd.f32 %v2049, -0.28449672
        %v2051 = vmul.f32 %v2050, %v2044
        %v2052 = vadd.f32 %v2051, 0.2548296
        %v2053 = vmul.f32 %v2052, %v2044
        %v2054 = vsub.f32 0.0, %v2040
        %v2055 = vmul.f32 %v2054, %v2040
        %v2056 = vmul.f32 %v2055, 1.442695
        %v2057 = vpow.pop %v2056
        %v2058 = vmul.f32 %v2053, %v2057
        %v2059 = vsub.f32 1.0, %v2058
        %v2060 = vmul.f32 %v2039, %v2059
        %v2061 = vadd.f32 %v2060, 1.0
        %v2062 = vmul.f32 %v2036, %v2061
        %2063 = vadd.xlane.f32.xlu0 %v2062
        %v2064 = vpop.xlane.xlu0 %2063
        %v2065 = vrcp.pop 128.0
        %v2066 = vmul.f32 %v2064, %v2065
        %v2067 = vsub.f32 %v2062, %v2066
        %v2068 = vmul.f32 %v2067, %v2067
        %2069 = vadd.xlane.f32.xlu0 %v2068
        %v2070 = vpop.xlane.xlu0 %2069
        %v2071 = vmul.f32 %v2070, %v2065
        %v2072 = vadd.f32 %v2071, 1e-05
        %v2073 = vrsqrt.pop %v2072
        %v2074 = vmul.f32 %v2067, %v2073
        %v2075 = vpack.c.bf16 %v2074, %v2074
        %v2076 = vld [vmem:[%s14] sm:$0xf]
        %v2077 = vld [vmem:[%s14 + $0x4] sm:$0xf]
        %v2078 = vld [vmem:[%s14 + $0x8] sm:$0xf]
        %v2079 = vld [vmem:[%s14 + $0xc] sm:$0xf]
        %v2080 = vld [vmem:[%s14 + $0x10] sm:$0xf]
        %v2081 = vld [vmem:[%s14 + $0x14] sm:$0xf]
        %v2082 = vld [vmem:[%s14 + $0x18] sm:$0xf]
        %v2083 = vld [vmem:[%s14 + $0x1c] sm:$0xf]
        %v2084 = vld [vmem:[%s14 + $0x20] sm:$0xf]
        %v2085 = vld [vmem:[%s14 + $0x24] sm:$0xf]
        %v2086 = vld [vmem:[%s14 + $0x28] sm:$0xf]
        %v2087 = vld [vmem:[%s14 + $0x2c] sm:$0xf]
        %v2088 = vld [vmem:[%s14 + $0x30] sm:$0xf]
        %v2089 = vld [vmem:[%s14 + $0x34] sm:$0xf]
        %v2090 = vld [vmem:[%s14 + $0x38] sm:$0xf]
        %v2091 = vld [vmem:[%s14 + $0x3c] sm:$0xf]
        %v2092 = vld [vmem:[%s15] sm:$0x1]
        %v2094 = vlaneseq
        %v2095 = vshrl.u32 %v2094, 7
        %v2096 = vsub.s32 0, %v2095
        %v2097 = vrot.slane %v2092, %v2096
        %v2115 = vunpack.c.l.b16 %v2076
        %v2116 = vunpack.c.l.b16 %v2077
        %v2117 = vunpack.c.l.b16 %v2078
        %v2118 = vunpack.c.l.b16 %v2079
        %v2119 = vunpack.c.l.b16 %v2080
        %v2120 = vunpack.c.l.b16 %v2081
        %v2121 = vunpack.c.l.b16 %v2082
        %v2122 = vunpack.c.l.b16 %v2083
        %v2123 = vunpack.c.l.b16 %v2084
        %v2124 = vunpack.c.l.b16 %v2085
        %v2125 = vunpack.c.l.b16 %v2086
        %v2126 = vunpack.c.l.b16 %v2087
        %v2127 = vunpack.c.l.b16 %v2088
        %v2128 = vunpack.c.l.b16 %v2089
        %v2129 = vunpack.c.l.b16 %v2090
        %v2130 = vunpack.c.l.b16 %v2091
        %v2131 = vpack.c.b16 %v2116, %v2115
        %v2132 = vpack.c.b16 %v2118, %v2117
        %v2133 = vpack.c.b16 %v2120, %v2119
        %v2134 = vpack.c.b16 %v2122, %v2121
        %v2135 = vpack.c.b16 %v2124, %v2123
        %v2136 = vpack.c.b16 %v2126, %v2125
        %v2137 = vpack.c.b16 %v2128, %v2127
        %v2138 = vpack.c.b16 %v2130, %v2129
        %2147 = vmatprep.subr.bf16.mxu0 0
        %2148 = vmatpush1.bf16.msra.mxu0 %v2131
        %2149 = vmatprep.subr.bf16.mxu0 0
        %2150 = vmatpush1.bf16.msra.mxu0 %v2132
        %2151 = vmatprep.subr.bf16.mxu0 0
        %2152 = vmatpush1.bf16.msra.mxu0 %v2133
        %2153 = vmatprep.subr.bf16.mxu0 0
        %2154 = vmatpush1.bf16.msra.mxu0 %v2134
        %2155 = vmatprep.subr.bf16.mxu0 0
        %2156 = vmatpush1.bf16.msra.mxu0 %v2135
        %2157 = vmatprep.subr.bf16.mxu0 0
        %2158 = vmatpush1.bf16.msra.mxu0 %v2136
        %2159 = vmatprep.subr.bf16.mxu0 0
        %2160 = vmatpush1.bf16.msra.mxu0 %v2137
        %2161 = vmatprep.subr.bf16.mxu0 0
        %2162 = vmatpush1.bf16.msra.mxu0 %v2138
        %2163 = vmatprep.subr.bf16.mxu0 0
        %2164 = vmatpush1.bf16.msra.mxu0 0
        %2165 = vmatprep.subr.bf16.mxu0 0
        %2166 = vmatpush1.bf16.msra.mxu0 0
        %2167 = vmatprep.subr.bf16.mxu0 0
        %2168 = vmatpush1.bf16.msra.mxu0 0
        %2169 = vmatprep.subr.bf16.mxu0 0
        %2170 = vmatpush1.bf16.msra.mxu0 0
        %2171 = vmatprep.subr.bf16.mxu0 0
        %2172 = vmatpush1.bf16.msra.mxu0 0
        %2173 = vmatprep.subr.bf16.mxu0 0
        %2174 = vmatpush1.bf16.msra.mxu0 0
        %2175 = vmatprep.subr.bf16.mxu0 0
        %2176 = vmatpush1.bf16.msra.mxu0 0
        %2177 = vmatprep.subr.bf16.mxu0 0
        %2178 = vmatpush1.bf16.msra.mxu0 0
        %2179 = vmatprep.mubr.bf16.mxu0 0
        %2180 = vmatmul.mubr.bf16.gmra.mrb[0].mxu0 %v2075
        %v2181 = vpop.f32.mrb[0].mxu0
        %v2182 = vadd.f32 %v2097, %v2181
        %v2183 = vpop.f32.mrb[0].mxu0
        %v2184 = vpop.f32.mrb[0].mxu0
        %v2185 = vpop.f32.mrb[0].mxu0
        %2186 = vdwg.mxu0
        %v2187 = vld [vmem:[%s529] sm:$0xff]
        %v2188 = vadd.f32 %v2187, %v2182
        %vm2189 = vcmask 523264
        %2190 = vst.msk [vmem:[%s525] sm:$0xff] %vm2189, %v2188
        %s2191 = sand.u32 %s384, 1
        %s2192 = scalar_lea.sflag [#allocation3], %s2191
        %s2193 = sand.u32 %s384, 1
        %s2194 = smul.addr %s2193, 8
        %s2195 = scalar_lea.vmem [#allocation2], %s2194
        // Predicated region
        $region85: #{pallas_forward.5} parent=83 // pred_check
          %p2196 = pneg %p394
        $region86: #{pallas_forward.5} parent=83 // pred_check_branch
          %2198 = sbr.rel (%p2196) target = $region88
        $region87: #{pallas_forward.5} parent=83 // pred_region
          %s2200 = ssub.s32 128, 128
          %2201 = vsyncadd %s2192, %s2200
          %s2202 = smul.addr %s30, 128
          %s2203 = scalar_lea.hbm %s16, %s2202
          %s2205 = sshll.u32 %s2195, 4
          %s2206 = int_to_ptr.vmem [resolvable:$true] %s2205
          %2208 = dma.vmem_to_hbm [thread:$0]  %s2206, 128, %s2203, %s2192
        $region88: #{pallas_forward.5} parent=83 // pred_fallthru
          _
      $region84: #{pallas_forward.5} parent=5 // pred_fallthru
        _
      %p2209 = scmp.le.s32.totalorder 2, %s25
      // Predicated region
      $region89: #{pallas_forward.5} parent=5 // pred_check
        %p2210 = pneg %p2209
      $region90: #{pallas_forward.5} parent=5 // pred_check_branch
        %2212 = sbr.rel (%p2210) target = $region92
      $region91: #{pallas_forward.5} parent=5 // pred_region
        %s2213 = ssub.s32 %s25, 2
        // Predicated region
        $region93: #{pallas_forward.5} parent=91 // pred_check
          %p2214 = pneg %p400
        $region94: #{pallas_forward.5} parent=91 // pred_check_branch
          %2216 = sbr.rel (%p2214) target = $region96
        $region95: #{pallas_forward.5} parent=91 // pred_region
          %s2217 = sand.u32 %s385, 1
          %s2218 = scalar_lea.sflag [#allocation3], %s2217
          %s2219 = sand.u32 %s385, 1
          %s2220 = smul.addr %s2219, 8
          %s2221 = scalar_lea.vmem [#allocation2], %s2220
          %2222 = dma.done %s2218, 128
        $region96: #{pallas_forward.5} parent=91 // pred_fallthru
          _
      $region92: #{pallas_forward.5} parent=5 // pred_fallthru
        _
    $region6: #{pallas_forward.5} parent=1 // loop_footer
      %s29 = sadd.s32 1, %s25
    $region7: #{pallas_forward.5} parent=1 // loop_footer_branch
      %24 = sbr.rel target = $region3
    $region8: #{pallas_forward.5} parent=1 // loop_exit
      _
    %2223 = vsyncpa [#allocation3], 1
    %s2224 = scalar_lea.sflag [#allocation3], 1
    %2225 = vsyncpa %s2224, 1

// kernel: pallas_forward.4
$region0: #{pallas_forward.4}
  #allocation0 [shape = 'u32[]', space=smem, size = 0x4, offset = 0x4, fixed_abs, tag = 'smem constant byte address 0x4 - core index']
  #allocation1 [shape = 'u32[144,128]{1,0:T(1,128)}', space=vmem, size = 0x12000, scoped, tag = 'internal scratch']
  %s0 = inlined_call_operand.vmem [shape: f32[2,8,64], index: 0, kind: input, shape index: {}]
  %s1 = inlined_call_operand.vmem [shape: f32[2,8,32], index: 1, kind: input, shape index: {}]
  %s2 = inlined_call_operand.vmem [shape: bf16[4,32,8], index: 2, kind: input, shape index: {}]
  %s3 = inlined_call_operand.vmem [shape: bf16[4,32,8], index: 3, kind: input, shape index: {}]
  %s4 = inlined_call_operand.vmem [shape: bf16[4,32,8], index: 4, kind: input, shape index: {}]
  %s5 = inlined_call_operand.vmem [shape: f32[4,1,8], index: 5, kind: input, shape index: {}]
  %s6 = inlined_call_operand.vmem [shape: f32[4,1,8], index: 6, kind: input, shape index: {}]
  %s7 = inlined_call_operand.vmem [shape: f32[4,1,8], index: 7, kind: input, shape index: {}]
  %s8 = inlined_call_operand.vmem [shape: bf16[4,8,32], index: 8, kind: input, shape index: {}]
  %s9 = inlined_call_operand.vmem [shape: f32[1,32], index: 9, kind: input, shape index: {}]
  %s10 = inlined_call_operand.vmem [shape: f32[1,32], index: 10, kind: input, shape index: {}]
  %s11 = inlined_call_operand.vmem [shape: f32[1,32], index: 11, kind: input, shape index: {}]
  %s12 = inlined_call_operand.vmem [shape: bf16[32,128], index: 12, kind: input, shape index: {}]
  %s13 = inlined_call_operand.vmem [shape: f32[1,128], index: 13, kind: input, shape index: {}]
  %s14 = inlined_call_operand.vmem [shape: bf16[128,64], index: 14, kind: input, shape index: {}]
  %s15 = inlined_call_operand.vmem [shape: f32[1,64], index: 15, kind: input, shape index: {}]
  %s16 = inlined_call_operand.vmem [shape: bf16[64,32], index: 16, kind: input, shape index: {}]
  %s17 = inlined_call_operand.vmem [shape: f32[1,32], index: 17, kind: input, shape index: {}]
  %s18 = inlined_call_operand.vmem [shape: f32[2,8,64], index: 18, kind: output, shape index: {0}]
  %s19 = inlined_call_operand.vmem [shape: f32[2,8,32], index: 19, kind: output, shape index: {1}]
  %20 = xla_tuple %s18, %s19
  %s21 = sld [smem:[#allocation0]]
  $region113: #{pallas_forward.4} parent=0
    _
  %s23 = ssub.s32 1, %s21
  %s24 = scalar_select 0, %s23, %s21
  loop: start=0, step=1, limit=4
  $region2: #{pallas_forward.4} parent=0 // loop_pre_header
    _
  $region3: #{pallas_forward.4} parent=0 // loop_header
    %s26 = sphi 0, %s30
    %p27 = scmp.ge.s32.totalorder %s26, 4
    %s36 = sphi 0, %s38
    %s39 = sphi 0, %s36
    %s40 = sphi 0, %s39
    %s56 = sphi 0, %s40
    %s62 = sphi 0, %s64
    %s65 = sphi 0, %s62
    %s66 = sphi 0, %s65
    %s82 = sphi 0, %s66
    %s86 = sphi 0, %s86
    %s88 = sphi 0, %s86
    %s89 = sphi 0, %s88
    %s103 = sphi 0, %s89
    %s107 = sphi 0, %s107
    %s109 = sphi 0, %s107
    %s110 = sphi 0, %s109
    %s124 = sphi 0, %s110
    %s128 = sphi 0, %s128
    %s130 = sphi 0, %s128
    %s131 = sphi 0, %s130
    %s145 = sphi 0, %s131
    %s149 = sphi 0, %s149
    %s151 = sphi 0, %s149
    %s152 = sphi 0, %s151
    %s166 = sphi 0, %s152
    %s170 = sphi 0, %s170
    %s172 = sphi 0, %s170
    %s173 = sphi 0, %s172
    %s187 = sphi 0, %s173
    %s191 = sphi 0, %s191
    %s193 = sphi 0, %s191
    %s194 = sphi 0, %s193
    %s208 = sphi 0, %s194
    %s212 = sphi 0, %s212
    %s214 = sphi 0, %s212
    %s215 = sphi 0, %s214
    %s229 = sphi 0, %s215
    %s233 = sphi 0, %s233
    %s235 = sphi 0, %s233
    %s236 = sphi 0, %s235
    %s250 = sphi 0, %s236
    %s254 = sphi 0, %s254
    %s256 = sphi 0, %s254
    %s257 = sphi 0, %s256
    %s271 = sphi 0, %s257
    %s275 = sphi 0, %s275
    %s277 = sphi 0, %s275
    %s278 = sphi 0, %s277
    %s292 = sphi 0, %s278
    %s296 = sphi 0, %s296
    %s298 = sphi 0, %s296
    %s299 = sphi 0, %s298
    %s313 = sphi 0, %s299
    %s317 = sphi 0, %s317
    %s319 = sphi 0, %s317
    %s320 = sphi 0, %s319
    %s334 = sphi 0, %s320
    %s338 = sphi 0, %s338
    %s340 = sphi 0, %s338
    %s341 = sphi 0, %s340
    %s355 = sphi 0, %s341
    %s359 = sphi 0, %s359
    %s361 = sphi 0, %s359
    %s362 = sphi 0, %s361
    %s376 = sphi 0, %s362
    %s380 = sphi 0, %s380
    %s382 = sphi 0, %s380
    %s383 = sphi 0, %s382
    %s397 = sphi 0, %s383
    %s401 = sphi 0, %s401
    %s403 = sphi 0, %s401
    %s404 = sphi 0, %s403
    %s418 = sphi 0, %s404
    %s424 = sphi 0, %s426
    %s427 = sphi 0, %s424
    %s428 = sphi 0, %s427
    %s444 = sphi 0, %s428
    %s450 = sphi 0, %s452
    %s453 = sphi 0, %s450
    %s454 = sphi 0, %s453
    %s470 = sphi 0, %s454
  $region4: #{pallas_forward.4} parent=0 // loop_header_branch
    %29 = sbr.rel (%p27) target = $region8
  $region5: #{pallas_forward.4} parent=0 // loop_body
    %s31 = ssub.s32 %s26, 1
    %s32 = ssub.s32 %s26, 2
    %s33 = sadd.s32 %s26, 1
    %s34 = ssub.s32 %s26, %s33
    %p35 = scmp.eq.s32.totalorder %s34, 0
    %s37 = sadd.s32 %s36, 1
    %s38 = scalar_select %p35, %s36, %s37
    %p41 = pneg %p35
    %p42 = scmp.eq.s32.totalorder %s26, 1
    %p43 = por %p41, %p42
    %p44 = scmp.ne.s32.totalorder %s36, %s39
    %p45 = scmp.eq.s32.totalorder %s26, 0
    %p46 = por %p44, %p45
    %p47 = scmp.ne.s32.totalorder %s36, %s39
    %p48 = scmp.eq.s32.totalorder %s31, 1
    %p49 = por %p47, %p48
    %p50 = scmp.ne.s32.totalorder %s39, %s40
    %p51 = scmp.eq.s32.totalorder %s31, 0
    %p52 = por %p50, %p51
    %p53 = scmp.ne.s32.totalorder %s39, %s40
    %p54 = scmp.eq.s32.totalorder %s32, 1
    %p55 = por %p53, %p54
    %p57 = scmp.ne.s32.totalorder %s40, %s56
    %p58 = scmp.eq.s32.totalorder %s32, 0
    %p59 = por %p57, %p58
    %s60 = ssub.s32 %s26, %s33
    %p61 = scmp.eq.s32.totalorder %s60, 0
    %s63 = sadd.s32 %s62, 1
    %s64 = scalar_select %p61, %s62, %s63
    %p67 = pneg %p61
    %p68 = scmp.eq.s32.totalorder %s26, 1
    %p69 = por %p67, %p68
    %p70 = scmp.ne.s32.totalorder %s62, %s65
    %p71 = scmp.eq.s32.totalorder %s26, 0
    %p72 = por %p70, %p71
    %p73 = scmp.ne.s32.totalorder %s62, %s65
    %p74 = scmp.eq.s32.totalorder %s31, 1
    %p75 = por %p73, %p74
    %p76 = scmp.ne.s32.totalorder %s65, %s66
    %p77 = scmp.eq.s32.totalorder %s31, 0
    %p78 = por %p76, %p77
    %p79 = scmp.ne.s32.totalorder %s65, %s66
    %p80 = scmp.eq.s32.totalorder %s32, 1
    %p81 = por %p79, %p80
    %p83 = scmp.ne.s32.totalorder %s66, %s82
    %p84 = scmp.eq.s32.totalorder %s32, 0
    %p85 = por %p83, %p84
    %s87 = sadd.s32 %s86, 1
    %p90 = scmp.eq.s32.totalorder %s26, 1
    %p91 = scmp.ne.s32.totalorder %s86, %s88
    %p92 = scmp.eq.s32.totalorder %s26, 0
    %p93 = por %p91, %p92
    %p94 = scmp.ne.s32.totalorder %s86, %s88
    %p95 = scmp.eq.s32.totalorder %s31, 1
    %p96 = por %p94, %p95
    %p97 = scmp.ne.s32.totalorder %s88, %s89
    %p98 = scmp.eq.s32.totalorder %s31, 0
    %p99 = por %p97, %p98
    %p100 = scmp.ne.s32.totalorder %s88, %s89
    %p101 = scmp.eq.s32.totalorder %s32, 1
    %p102 = por %p100, %p101
    %p104 = scmp.ne.s32.totalorder %s89, %s103
    %p105 = scmp.eq.s32.totalorder %s32, 0
    %p106 = por %p104, %p105
    %s108 = sadd.s32 %s107, 1
    %p111 = scmp.eq.s32.totalorder %s26, 1
    %p112 = scmp.ne.s32.totalorder %s107, %s109
    %p113 = scmp.eq.s32.totalorder %s26, 0
    %p114 = por %p112, %p113
    %p115 = scmp.ne.s32.totalorder %s107, %s109
    %p116 = scmp.eq.s32.totalorder %s31, 1
    %p117 = por %p115, %p116
    %p118 = scmp.ne.s32.totalorder %s109, %s110
    %p119 = scmp.eq.s32.totalorder %s31, 0
    %p120 = por %p118, %p119
    %p121 = scmp.ne.s32.totalorder %s109, %s110
    %p122 = scmp.eq.s32.totalorder %s32, 1
    %p123 = por %p121, %p122
    %p125 = scmp.ne.s32.totalorder %s110, %s124
    %p126 = scmp.eq.s32.totalorder %s32, 0
    %p127 = por %p125, %p126
    %s129 = sadd.s32 %s128, 1
    %p132 = scmp.eq.s32.totalorder %s26, 1
    %p133 = scmp.ne.s32.totalorder %s128, %s130
    %p134 = scmp.eq.s32.totalorder %s26, 0
    %p135 = por %p133, %p134
    %p136 = scmp.ne.s32.totalorder %s128, %s130
    %p137 = scmp.eq.s32.totalorder %s31, 1
    %p138 = por %p136, %p137
    %p139 = scmp.ne.s32.totalorder %s130, %s131
    %p140 = scmp.eq.s32.totalorder %s31, 0
    %p141 = por %p139, %p140
    %p142 = scmp.ne.s32.totalorder %s130, %s131
    %p143 = scmp.eq.s32.totalorder %s32, 1
    %p144 = por %p142, %p143
    %p146 = scmp.ne.s32.totalorder %s131, %s145
    %p147 = scmp.eq.s32.totalorder %s32, 0
    %p148 = por %p146, %p147
    %s150 = sadd.s32 %s149, 1
    %p153 = scmp.eq.s32.totalorder %s26, 1
    %p154 = scmp.ne.s32.totalorder %s149, %s151
    %p155 = scmp.eq.s32.totalorder %s26, 0
    %p156 = por %p154, %p155
    %p157 = scmp.ne.s32.totalorder %s149, %s151
    %p158 = scmp.eq.s32.totalorder %s31, 1
    %p159 = por %p157, %p158
    %p160 = scmp.ne.s32.totalorder %s151, %s152
    %p161 = scmp.eq.s32.totalorder %s31, 0
    %p162 = por %p160, %p161
    %p163 = scmp.ne.s32.totalorder %s151, %s152
    %p164 = scmp.eq.s32.totalorder %s32, 1
    %p165 = por %p163, %p164
    %p167 = scmp.ne.s32.totalorder %s152, %s166
    %p168 = scmp.eq.s32.totalorder %s32, 0
    %p169 = por %p167, %p168
    %s171 = sadd.s32 %s170, 1
    %p174 = scmp.eq.s32.totalorder %s26, 1
    %p175 = scmp.ne.s32.totalorder %s170, %s172
    %p176 = scmp.eq.s32.totalorder %s26, 0
    %p177 = por %p175, %p176
    %p178 = scmp.ne.s32.totalorder %s170, %s172
    %p179 = scmp.eq.s32.totalorder %s31, 1
    %p180 = por %p178, %p179
    %p181 = scmp.ne.s32.totalorder %s172, %s173
    %p182 = scmp.eq.s32.totalorder %s31, 0
    %p183 = por %p181, %p182
    %p184 = scmp.ne.s32.totalorder %s172, %s173
    %p185 = scmp.eq.s32.totalorder %s32, 1
    %p186 = por %p184, %p185
    %p188 = scmp.ne.s32.totalorder %s173, %s187
    %p189 = scmp.eq.s32.totalorder %s32, 0
    %p190 = por %p188, %p189
    %s192 = sadd.s32 %s191, 1
    %p195 = scmp.eq.s32.totalorder %s26, 1
    %p196 = scmp.ne.s32.totalorder %s191, %s193
    %p197 = scmp.eq.s32.totalorder %s26, 0
    %p198 = por %p196, %p197
    %p199 = scmp.ne.s32.totalorder %s191, %s193
    %p200 = scmp.eq.s32.totalorder %s31, 1
    %p201 = por %p199, %p200
    %p202 = scmp.ne.s32.totalorder %s193, %s194
    %p203 = scmp.eq.s32.totalorder %s31, 0
    %p204 = por %p202, %p203
    %p205 = scmp.ne.s32.totalorder %s193, %s194
    %p206 = scmp.eq.s32.totalorder %s32, 1
    %p207 = por %p205, %p206
    %p209 = scmp.ne.s32.totalorder %s194, %s208
    %p210 = scmp.eq.s32.totalorder %s32, 0
    %p211 = por %p209, %p210
    %s213 = sadd.s32 %s212, 1
    %p216 = scmp.eq.s32.totalorder %s26, 1
    %p217 = scmp.ne.s32.totalorder %s212, %s214
    %p218 = scmp.eq.s32.totalorder %s26, 0
    %p219 = por %p217, %p218
    %p220 = scmp.ne.s32.totalorder %s212, %s214
    %p221 = scmp.eq.s32.totalorder %s31, 1
    %p222 = por %p220, %p221
    %p223 = scmp.ne.s32.totalorder %s214, %s215
    %p224 = scmp.eq.s32.totalorder %s31, 0
    %p225 = por %p223, %p224
    %p226 = scmp.ne.s32.totalorder %s214, %s215
    %p227 = scmp.eq.s32.totalorder %s32, 1
    %p228 = por %p226, %p227
    %p230 = scmp.ne.s32.totalorder %s215, %s229
    %p231 = scmp.eq.s32.totalorder %s32, 0
    %p232 = por %p230, %p231
    %s234 = sadd.s32 %s233, 1
    %p237 = scmp.eq.s32.totalorder %s26, 1
    %p238 = scmp.ne.s32.totalorder %s233, %s235
    %p239 = scmp.eq.s32.totalorder %s26, 0
    %p240 = por %p238, %p239
    %p241 = scmp.ne.s32.totalorder %s233, %s235
    %p242 = scmp.eq.s32.totalorder %s31, 1
    %p243 = por %p241, %p242
    %p244 = scmp.ne.s32.totalorder %s235, %s236
    %p245 = scmp.eq.s32.totalorder %s31, 0
    %p246 = por %p244, %p245
    %p247 = scmp.ne.s32.totalorder %s235, %s236
    %p248 = scmp.eq.s32.totalorder %s32, 1
    %p249 = por %p247, %p248
    %p251 = scmp.ne.s32.totalorder %s236, %s250
    %p252 = scmp.eq.s32.totalorder %s32, 0
    %p253 = por %p251, %p252
    %s255 = sadd.s32 %s254, 1
    %p258 = scmp.eq.s32.totalorder %s26, 1
    %p259 = scmp.ne.s32.totalorder %s254, %s256
    %p260 = scmp.eq.s32.totalorder %s26, 0
    %p261 = por %p259, %p260
    %p262 = scmp.ne.s32.totalorder %s254, %s256
    %p263 = scmp.eq.s32.totalorder %s31, 1
    %p264 = por %p262, %p263
    %p265 = scmp.ne.s32.totalorder %s256, %s257
    %p266 = scmp.eq.s32.totalorder %s31, 0
    %p267 = por %p265, %p266
    %p268 = scmp.ne.s32.totalorder %s256, %s257
    %p269 = scmp.eq.s32.totalorder %s32, 1
    %p270 = por %p268, %p269
    %p272 = scmp.ne.s32.totalorder %s257, %s271
    %p273 = scmp.eq.s32.totalorder %s32, 0
    %p274 = por %p272, %p273
    %s276 = sadd.s32 %s275, 1
    %p279 = scmp.eq.s32.totalorder %s26, 1
    %p280 = scmp.ne.s32.totalorder %s275, %s277
    %p281 = scmp.eq.s32.totalorder %s26, 0
    %p282 = por %p280, %p281
    %p283 = scmp.ne.s32.totalorder %s275, %s277
    %p284 = scmp.eq.s32.totalorder %s31, 1
    %p285 = por %p283, %p284
    %p286 = scmp.ne.s32.totalorder %s277, %s278
    %p287 = scmp.eq.s32.totalorder %s31, 0
    %p288 = por %p286, %p287
    %p289 = scmp.ne.s32.totalorder %s277, %s278
    %p290 = scmp.eq.s32.totalorder %s32, 1
    %p291 = por %p289, %p290
    %p293 = scmp.ne.s32.totalorder %s278, %s292
    %p294 = scmp.eq.s32.totalorder %s32, 0
    %p295 = por %p293, %p294
    %s297 = sadd.s32 %s296, 1
    %p300 = scmp.eq.s32.totalorder %s26, 1
    %p301 = scmp.ne.s32.totalorder %s296, %s298
    %p302 = scmp.eq.s32.totalorder %s26, 0
    %p303 = por %p301, %p302
    %p304 = scmp.ne.s32.totalorder %s296, %s298
    %p305 = scmp.eq.s32.totalorder %s31, 1
    %p306 = por %p304, %p305
    %p307 = scmp.ne.s32.totalorder %s298, %s299
    %p308 = scmp.eq.s32.totalorder %s31, 0
    %p309 = por %p307, %p308
    %p310 = scmp.ne.s32.totalorder %s298, %s299
    %p311 = scmp.eq.s32.totalorder %s32, 1
    %p312 = por %p310, %p311
    %p314 = scmp.ne.s32.totalorder %s299, %s313
    %p315 = scmp.eq.s32.totalorder %s32, 0
    %p316 = por %p314, %p315
    %s318 = sadd.s32 %s317, 1
    %p321 = scmp.eq.s32.totalorder %s26, 1
    %p322 = scmp.ne.s32.totalorder %s317, %s319
    %p323 = scmp.eq.s32.totalorder %s26, 0
    %p324 = por %p322, %p323
    %p325 = scmp.ne.s32.totalorder %s317, %s319
    %p326 = scmp.eq.s32.totalorder %s31, 1
    %p327 = por %p325, %p326
    %p328 = scmp.ne.s32.totalorder %s319, %s320
    %p329 = scmp.eq.s32.totalorder %s31, 0
    %p330 = por %p328, %p329
    %p331 = scmp.ne.s32.totalorder %s319, %s320
    %p332 = scmp.eq.s32.totalorder %s32, 1
    %p333 = por %p331, %p332
    %p335 = scmp.ne.s32.totalorder %s320, %s334
    %p336 = scmp.eq.s32.totalorder %s32, 0
    %p337 = por %p335, %p336
    %s339 = sadd.s32 %s338, 1
    %p342 = scmp.eq.s32.totalorder %s26, 1
    %p343 = scmp.ne.s32.totalorder %s338, %s340
    %p344 = scmp.eq.s32.totalorder %s26, 0
    %p345 = por %p343, %p344
    %p346 = scmp.ne.s32.totalorder %s338, %s340
    %p347 = scmp.eq.s32.totalorder %s31, 1
    %p348 = por %p346, %p347
    %p349 = scmp.ne.s32.totalorder %s340, %s341
    %p350 = scmp.eq.s32.totalorder %s31, 0
    %p351 = por %p349, %p350
    %p352 = scmp.ne.s32.totalorder %s340, %s341
    %p353 = scmp.eq.s32.totalorder %s32, 1
    %p354 = por %p352, %p353
    %p356 = scmp.ne.s32.totalorder %s341, %s355
    %p357 = scmp.eq.s32.totalorder %s32, 0
    %p358 = por %p356, %p357
    %s360 = sadd.s32 %s359, 1
    %p363 = scmp.eq.s32.totalorder %s26, 1
    %p364 = scmp.ne.s32.totalorder %s359, %s361
    %p365 = scmp.eq.s32.totalorder %s26, 0
    %p366 = por %p364, %p365
    %p367 = scmp.ne.s32.totalorder %s359, %s361
    %p368 = scmp.eq.s32.totalorder %s31, 1
    %p369 = por %p367, %p368
    %p370 = scmp.ne.s32.totalorder %s361, %s362
    %p371 = scmp.eq.s32.totalorder %s31, 0
    %p372 = por %p370, %p371
    %p373 = scmp.ne.s32.totalorder %s361, %s362
    %p374 = scmp.eq.s32.totalorder %s32, 1
    %p375 = por %p373, %p374
    %p377 = scmp.ne.s32.totalorder %s362, %s376
    %p378 = scmp.eq.s32.totalorder %s32, 0
    %p379 = por %p377, %p378
    %s381 = sadd.s32 %s380, 1
    %p384 = scmp.eq.s32.totalorder %s26, 1
    %p385 = scmp.ne.s32.totalorder %s380, %s382
    %p386 = scmp.eq.s32.totalorder %s26, 0
    %p387 = por %p385, %p386
    %p388 = scmp.ne.s32.totalorder %s380, %s382
    %p389 = scmp.eq.s32.totalorder %s31, 1
    %p390 = por %p388, %p389
    %p391 = scmp.ne.s32.totalorder %s382, %s383
    %p392 = scmp.eq.s32.totalorder %s31, 0
    %p393 = por %p391, %p392
    %p394 = scmp.ne.s32.totalorder %s382, %s383
    %p395 = scmp.eq.s32.totalorder %s32, 1
    %p396 = por %p394, %p395
    %p398 = scmp.ne.s32.totalorder %s383, %s397
    %p399 = scmp.eq.s32.totalorder %s32, 0
    %p400 = por %p398, %p399
    %s402 = sadd.s32 %s401, 1
    %p405 = scmp.eq.s32.totalorder %s26, 1
    %p406 = scmp.ne.s32.totalorder %s401, %s403
    %p407 = scmp.eq.s32.totalorder %s26, 0
    %p408 = por %p406, %p407
    %p409 = scmp.ne.s32.totalorder %s401, %s403
    %p410 = scmp.eq.s32.totalorder %s31, 1
    %p411 = por %p409, %p410
    %p412 = scmp.ne.s32.totalorder %s403, %s404
    %p413 = scmp.eq.s32.totalorder %s31, 0
    %p414 = por %p412, %p413
    %p415 = scmp.ne.s32.totalorder %s403, %s404
    %p416 = scmp.eq.s32.totalorder %s32, 1
    %p417 = por %p415, %p416
    %p419 = scmp.ne.s32.totalorder %s404, %s418
    %p420 = scmp.eq.s32.totalorder %s32, 0
    %p421 = por %p419, %p420
    %s422 = ssub.s32 %s26, %s33
    %p423 = scmp.eq.s32.totalorder %s422, 0
    %s425 = sadd.s32 %s424, 1
    %s426 = scalar_select %p423, %s424, %s425
    %p429 = pneg %p423
    %p430 = scmp.eq.s32.totalorder %s26, 1
    %p431 = por %p429, %p430
    %p432 = scmp.ne.s32.totalorder %s424, %s427
    %p433 = scmp.eq.s32.totalorder %s26, 0
    %p434 = por %p432, %p433
    %p435 = scmp.ne.s32.totalorder %s424, %s427
    %p436 = scmp.eq.s32.totalorder %s31, 1
    %p437 = por %p435, %p436
    %p438 = scmp.ne.s32.totalorder %s427, %s428
    %p439 = scmp.eq.s32.totalorder %s31, 0
    %p440 = por %p438, %p439
    %p441 = scmp.ne.s32.totalorder %s427, %s428
    %p442 = scmp.eq.s32.totalorder %s32, 1
    %p443 = por %p441, %p442
    %p445 = scmp.ne.s32.totalorder %s428, %s444
    %p446 = scmp.eq.s32.totalorder %s32, 0
    %p447 = por %p445, %p446
    %s448 = ssub.s32 %s26, %s33
    %p449 = scmp.eq.s32.totalorder %s448, 0
    %s451 = sadd.s32 %s450, 1
    %s452 = scalar_select %p449, %s450, %s451
    %p455 = pneg %p449
    %p456 = scmp.eq.s32.totalorder %s26, 1
    %p457 = por %p455, %p456
    %p458 = scmp.ne.s32.totalorder %s450, %s453
    %p459 = scmp.eq.s32.totalorder %s26, 0
    %p460 = por %p458, %p459
    %p461 = scmp.ne.s32.totalorder %s450, %s453
    %p462 = scmp.eq.s32.totalorder %s31, 1
    %p463 = por %p461, %p462
    %p464 = scmp.ne.s32.totalorder %s453, %s454
    %p465 = scmp.eq.s32.totalorder %s31, 0
    %p466 = por %p464, %p465
    %p467 = scmp.ne.s32.totalorder %s453, %s454
    %p468 = scmp.eq.s32.totalorder %s32, 1
    %p469 = por %p467, %p468
    %p471 = scmp.ne.s32.totalorder %s454, %s470
    %p472 = scmp.eq.s32.totalorder %s32, 0
    %p473 = por %p471, %p472
    %p474 = scmp.le.s32.totalorder 1, %s26
    %p475 = scmp.lt.s32.totalorder %s26, 3
    %p476 = pnand %p474, %p475
    %p477 = pneg %p476
    // Predicated region
    $region9: #{pallas_forward.4} parent=5 // pred_check
      _
    $region10: #{pallas_forward.4} parent=5 // pred_check_branch
      %479 = sbr.rel (%p476) target = $region12
    $region11: #{pallas_forward.4} parent=5 // pred_region
      %s480 = ssub.s32 %s26, 1
      // Predicated region
      $region13: #{pallas_forward.4} parent=11 // pred_check
        %p481 = pneg %p99
      $region14: #{pallas_forward.4} parent=11 // pred_check_branch
        %483 = sbr.rel (%p481) target = $region16
      $region15: #{pallas_forward.4} parent=11 // pred_region
        _
      $region16: #{pallas_forward.4} parent=11 // pred_fallthru
        _
      // Predicated region
      $region17: #{pallas_forward.4} parent=11 // pred_check
        %p484 = pneg %p120
      $region18: #{pallas_forward.4} parent=11 // pred_check_branch
        %486 = sbr.rel (%p484) target = $region20
      $region19: #{pallas_forward.4} parent=11 // pred_region
        _
      $region20: #{pallas_forward.4} parent=11 // pred_fallthru
        _
      // Predicated region
      $region21: #{pallas_forward.4} parent=11 // pred_check
        %p487 = pneg %p141
      $region22: #{pallas_forward.4} parent=11 // pred_check_branch
        %489 = sbr.rel (%p487) target = $region24
      $region23: #{pallas_forward.4} parent=11 // pred_region
        _
      $region24: #{pallas_forward.4} parent=11 // pred_fallthru
        _
      // Predicated region
      $region25: #{pallas_forward.4} parent=11 // pred_check
        %p490 = pneg %p162
      $region26: #{pallas_forward.4} parent=11 // pred_check_branch
        %492 = sbr.rel (%p490) target = $region28
      $region27: #{pallas_forward.4} parent=11 // pred_region
        _
      $region28: #{pallas_forward.4} parent=11 // pred_fallthru
        _
      // Predicated region
      $region29: #{pallas_forward.4} parent=11 // pred_check
        %p493 = pneg %p183
      $region30: #{pallas_forward.4} parent=11 // pred_check_branch
        %495 = sbr.rel (%p493) target = $region32
      $region31: #{pallas_forward.4} parent=11 // pred_region
        _
      $region32: #{pallas_forward.4} parent=11 // pred_fallthru
        _
      // Predicated region
      $region33: #{pallas_forward.4} parent=11 // pred_check
        %p496 = pneg %p204
      $region34: #{pallas_forward.4} parent=11 // pred_check_branch
        %498 = sbr.rel (%p496) target = $region36
      $region35: #{pallas_forward.4} parent=11 // pred_region
        _
      $region36: #{pallas_forward.4} parent=11 // pred_fallthru
        _
      // Predicated region
      $region37: #{pallas_forward.4} parent=11 // pred_check
        %p499 = pneg %p225
      $region38: #{pallas_forward.4} parent=11 // pred_check_branch
        %501 = sbr.rel (%p499) target = $region40
      $region39: #{pallas_forward.4} parent=11 // pred_region
        _
      $region40: #{pallas_forward.4} parent=11 // pred_fallthru
        _
      // Predicated region
      $region41: #{pallas_forward.4} parent=11 // pred_check
        %p502 = pneg %p246
      $region42: #{pallas_forward.4} parent=11 // pred_check_branch
        %504 = sbr.rel (%p502) target = $region44
      $region43: #{pallas_forward.4} parent=11 // pred_region
        _
      $region44: #{pallas_forward.4} parent=11 // pred_fallthru
        _
      // Predicated region
      $region45: #{pallas_forward.4} parent=11 // pred_check
        %p505 = pneg %p267
      $region46: #{pallas_forward.4} parent=11 // pred_check_branch
        %507 = sbr.rel (%p505) target = $region48
      $region47: #{pallas_forward.4} parent=11 // pred_region
        _
      $region48: #{pallas_forward.4} parent=11 // pred_fallthru
        _
      // Predicated region
      $region49: #{pallas_forward.4} parent=11 // pred_check
        %p508 = pneg %p288
      $region50: #{pallas_forward.4} parent=11 // pred_check_branch
        %510 = sbr.rel (%p508) target = $region52
      $region51: #{pallas_forward.4} parent=11 // pred_region
        _
      $region52: #{pallas_forward.4} parent=11 // pred_fallthru
        _
      // Predicated region
      $region53: #{pallas_forward.4} parent=11 // pred_check
        %p511 = pneg %p309
      $region54: #{pallas_forward.4} parent=11 // pred_check_branch
        %513 = sbr.rel (%p511) target = $region56
      $region55: #{pallas_forward.4} parent=11 // pred_region
        _
      $region56: #{pallas_forward.4} parent=11 // pred_fallthru
        _
      // Predicated region
      $region57: #{pallas_forward.4} parent=11 // pred_check
        %p514 = pneg %p330
      $region58: #{pallas_forward.4} parent=11 // pred_check_branch
        %516 = sbr.rel (%p514) target = $region60
      $region59: #{pallas_forward.4} parent=11 // pred_region
        _
      $region60: #{pallas_forward.4} parent=11 // pred_fallthru
        _
      // Predicated region
      $region61: #{pallas_forward.4} parent=11 // pred_check
        %p517 = pneg %p351
      $region62: #{pallas_forward.4} parent=11 // pred_check_branch
        %519 = sbr.rel (%p517) target = $region64
      $region63: #{pallas_forward.4} parent=11 // pred_region
        _
      $region64: #{pallas_forward.4} parent=11 // pred_fallthru
        _
      // Predicated region
      $region65: #{pallas_forward.4} parent=11 // pred_check
        %p520 = pneg %p372
      $region66: #{pallas_forward.4} parent=11 // pred_check_branch
        %522 = sbr.rel (%p520) target = $region68
      $region67: #{pallas_forward.4} parent=11 // pred_region
        _
      $region68: #{pallas_forward.4} parent=11 // pred_fallthru
        _
      // Predicated region
      $region69: #{pallas_forward.4} parent=11 // pred_check
        %p523 = pneg %p393
      $region70: #{pallas_forward.4} parent=11 // pred_check_branch
        %525 = sbr.rel (%p523) target = $region72
      $region71: #{pallas_forward.4} parent=11 // pred_region
        _
      $region72: #{pallas_forward.4} parent=11 // pred_fallthru
        _
      // Predicated region
      $region73: #{pallas_forward.4} parent=11 // pred_check
        %p526 = pneg %p414
      $region74: #{pallas_forward.4} parent=11 // pred_check_branch
        %528 = sbr.rel (%p526) target = $region76
      $region75: #{pallas_forward.4} parent=11 // pred_region
        _
      $region76: #{pallas_forward.4} parent=11 // pred_fallthru
        _
    $region12: #{pallas_forward.4} parent=5 // pred_fallthru
      _
    %p529 = scmp.lt.s32.totalorder %s26, 2
    // Predicated region
    $region77: #{pallas_forward.4} parent=5 // pred_check
      %p530 = pneg %p529
    $region78: #{pallas_forward.4} parent=5 // pred_check_branch
      %532 = sbr.rel (%p530) target = $region80
    $region79: #{pallas_forward.4} parent=5 // pred_region
      // Predicated region
      $region81: #{pallas_forward.4} parent=79 // pred_check
        %p533 = pneg %p46
      $region82: #{pallas_forward.4} parent=79 // pred_check_branch
        %535 = sbr.rel (%p533) target = $region84
      $region83: #{pallas_forward.4} parent=79 // pred_region
        %p536 = scmp.lt.s32.totalorder %s26, 1
        %s537 = scalar_select %p536, %s26, 1
        %s538 = smul.addr %s537, 8
        %s539 = scalar_lea.vmem %s0, %s538
      $region84: #{pallas_forward.4} parent=79 // pred_fallthru
        _
      // Predicated region
      $region85: #{pallas_forward.4} parent=79 // pred_check
        %p540 = pneg %p72
      $region86: #{pallas_forward.4} parent=79 // pred_check_branch
        %542 = sbr.rel (%p540) target = $region88
      $region87: #{pallas_forward.4} parent=79 // pred_region
        %p543 = scmp.lt.s32.totalorder %s26, 1
        %s544 = scalar_select %p543, %s26, 1
        %s545 = smul.addr %s544, 8
        %s546 = scalar_lea.vmem %s1, %s545
      $region88: #{pallas_forward.4} parent=79 // pred_fallthru
        _
    $region80: #{pallas_forward.4} parent=5 // pred_fallthru
      _
    %p547 = scmp.le.s32.totalorder 1, %s26
    %p548 = scmp.lt.s32.totalorder %s26, 3
    %p549 = pnand %p547, %p548
    %p550 = pneg %p549
    // Predicated region
    $region89: #{pallas_forward.4} parent=5 // pred_check
      _
    $region90: #{pallas_forward.4} parent=5 // pred_check_branch
      %552 = sbr.rel (%p549) target = $region92
    $region91: #{pallas_forward.4} parent=5 // pred_region
      %s553 = ssub.s32 %s26, 1
      %p554 = scmp.lt.s32.totalorder %s31, 1
      %s555 = scalar_select %p554, %s31, 1
      %s556 = smul.addr %s555, 8
      %s557 = scalar_lea.vmem %s0, %s556
      %p558 = pneg %p52
      %p559 = pneg %p49
      %p560 = scmp.lt.s32.totalorder %s31, 1
      %s561 = scalar_select %p560, %s31, 1
      %s562 = smul.addr %s561, 8
      %s563 = scalar_lea.vmem %s1, %s562
      %p564 = pneg %p78
      %p565 = pneg %p75
      %p566 = pneg %p99
      %p567 = pneg %p96
      %p568 = pneg %p120
      %p569 = pneg %p117
      %p570 = pneg %p141
      %p571 = pneg %p138
      %p572 = pneg %p162
      %p573 = pneg %p159
      %p574 = pneg %p183
      %p575 = pneg %p180
      %p576 = pneg %p204
      %p577 = pneg %p201
      %p578 = pneg %p225
      %p579 = pneg %p222
      %p580 = pneg %p246
      %p581 = pneg %p243
      %p582 = pneg %p267
      %p583 = pneg %p264
      %p584 = pneg %p288
      %p585 = pneg %p285
      %p586 = pneg %p309
      %p587 = pneg %p306
      %p588 = pneg %p330
      %p589 = pneg %p327
      %p590 = pneg %p351
      %p591 = pneg %p348
      %p592 = pneg %p372
      %p593 = pneg %p369
      %p594 = pneg %p393
      %p595 = pneg %p390
      %p596 = pneg %p414
      %p597 = pneg %p411
      %p598 = pneg %p440
      %p599 = pneg %p437
      %p600 = scmp.lt.s32.totalorder %s31, 1
      %s601 = scalar_select %p600, %s31, 1
      %s602 = smul.addr %s601, 8
      %s603 = scalar_lea.vmem %s18, %s602
      %p604 = pneg %p466
      %p605 = pneg %p463
      %p606 = scmp.lt.s32.totalorder %s31, 1
      %s607 = scalar_select %p606, %s31, 1
      %s608 = smul.addr %s607, 8
      %s609 = scalar_lea.vmem %s19, %s608
      %p610 = scmp.lt.s32.totalorder %s31, 1
      %s611 = scalar_select %p610, %s31, 1
      %s612 = smul.addr %s611, 8
      %s613 = scalar_lea.vmem %s0, %s612
      %p614 = scmp.lt.s32.totalorder %s31, 1
      %s615 = scalar_select %p614, %s31, 1
      %s616 = smul.addr %s615, 8
      %s617 = scalar_lea.vmem %s1, %s616
      %p618 = scmp.lt.s32.totalorder %s31, 1
      %s619 = scalar_select %p618, %s31, 1
      %s620 = smul.addr %s619, 8
      %s621 = scalar_lea.vmem %s18, %s620
      %p622 = scmp.lt.s32.totalorder %s31, 1
      %s623 = scalar_select %p622, %s31, 1
      %s624 = smul.addr %s623, 8
      %s625 = scalar_lea.vmem %s19, %s624
      %v627 = vld [vmem:[%s617] sm:$0xff]
      %v628 = vpack.c.bf16 %v627, %v627
      %v629 = vld [vmem:[%s2] sm:$0xf]
      %v630 = vld [vmem:[%s2 + $0x4] sm:$0xf]
      %v631 = vld [vmem:[%s2 + $0x8] sm:$0xf]
      %v632 = vld [vmem:[%s2 + $0xc] sm:$0xf]
      %v633 = vld [vmem:[%s2 + $0x10] sm:$0xf]
      %v634 = vld [vmem:[%s2 + $0x14] sm:$0xf]
      %v635 = vld [vmem:[%s2 + $0x18] sm:$0xf]
      %v636 = vld [vmem:[%s2 + $0x1c] sm:$0xf]
      %v637 = vld [vmem:[%s2 + $0x20] sm:$0xf]
      %v638 = vld [vmem:[%s2 + $0x24] sm:$0xf]
      %v639 = vld [vmem:[%s2 + $0x28] sm:$0xf]
      %v640 = vld [vmem:[%s2 + $0x2c] sm:$0xf]
      %v641 = vld [vmem:[%s2 + $0x30] sm:$0xf]
      %v642 = vld [vmem:[%s2 + $0x34] sm:$0xf]
      %v643 = vld [vmem:[%s2 + $0x38] sm:$0xf]
      %v644 = vld [vmem:[%s2 + $0x3c] sm:$0xf]
      %v645 = vld [vmem:[%s5] sm:$0x1]
      %v646 = vld [vmem:[%s5 + $0x1] sm:$0x1]
      %v647 = vld [vmem:[%s5 + $0x2] sm:$0x1]
      %v648 = vld [vmem:[%s5 + $0x3] sm:$0x1]
      %v653 = vlaneseq
      %v654 = vshrl.u32 %v653, 7
      %v655 = vsub.s32 0, %v654
      %v656 = vrot.slane %v645, %v655
      %v657 = vlaneseq
      %v658 = vshrl.u32 %v657, 7
      %v659 = vsub.s32 0, %v658
      %v660 = vrot.slane %v646, %v659
      %v661 = vlaneseq
      %v662 = vshrl.u32 %v661, 7
      %v663 = vsub.s32 0, %v662
      %v664 = vrot.slane %v647, %v663
      %v665 = vlaneseq
      %v666 = vshrl.u32 %v665, 7
      %v667 = vsub.s32 0, %v666
      %v668 = vrot.slane %v648, %v667
      %v677 = vunpack.c.l.b16 %v629
      %v678 = vunpack.c.l.b16 %v630
      %v679 = vunpack.c.l.b16 %v631
      %v680 = vunpack.c.l.b16 %v632
      %v681 = vpack.c.b16 %v678, %v677
      %v682 = vpack.c.b16 %v680, %v679
      %vm685 = vcmask 261120
      %v687 = vsel %vm685, %v628, 0
      %689 = vmatprep.subr.bf16.mxu0 0
      %690 = vmatpush1.bf16.msra.mxu0 %v681
      %691 = vmatprep.subr.bf16.mxu0 0
      %692 = vmatpush1.bf16.msra.mxu0 %v682
      %693 = vmatprep.subr.bf16.mxu0 0
      %694 = vmatpush1.bf16.msra.mxu0 0
      %695 = vmatprep.subr.bf16.mxu0 0
      %696 = vmatpush1.bf16.msra.mxu0 0
      %697 = vmatprep.subr.bf16.mxu0 0
      %698 = vmatpush1.bf16.msra.mxu0 0
      %699 = vmatprep.subr.bf16.mxu0 0
      %700 = vmatpush1.bf16.msra.mxu0 0
      %701 = vmatprep.subr.bf16.mxu0 0
      %702 = vmatpush1.bf16.msra.mxu0 0
      %703 = vmatprep.subr.bf16.mxu0 0
      %704 = vmatpush1.bf16.msra.mxu0 0
      %705 = vmatprep.subr.bf16.mxu0 0
      %706 = vmatpush1.bf16.msra.mxu0 0
      %707 = vmatprep.subr.bf16.mxu0 0
      %708 = vmatpush1.bf16.msra.mxu0 0
      %709 = vmatprep.subr.bf16.mxu0 0
      %710 = vmatpush1.bf16.msra.mxu0 0
      %711 = vmatprep.subr.bf16.mxu0 0
      %712 = vmatpush1.bf16.msra.mxu0 0
      %713 = vmatprep.subr.bf16.mxu0 0
      %714 = vmatpush1.bf16.msra.mxu0 0
      %715 = vmatprep.subr.bf16.mxu0 0
      %716 = vmatpush1.bf16.msra.mxu0 0
      %717 = vmatprep.subr.bf16.mxu0 0
      %718 = vmatpush1.bf16.msra.mxu0 0
      %719 = vmatprep.subr.bf16.mxu0 0
      %720 = vmatpush1.bf16.msra.mxu0 0
      %721 = vmatprep.mubr.bf16.mxu0 0
      %722 = vmatmul.mubr.bf16.gmra.mrb[0].mxu0 %v687
      %v723 = vpop.f32.mrb[0].mxu0
      %v724 = vadd.f32 %v656, %v723
      %v725 = vpop.f32.mrb[0].mxu0
      %v726 = vpop.f32.mrb[0].mxu0
      %v727 = vpop.f32.mrb[0].mxu0
      %728 = vdwg.mxu0
      %v733 = vunpack.c.l.b16 %v633
      %v734 = vunpack.c.l.b16 %v634
      %v735 = vunpack.c.l.b16 %v635
      %v736 = vunpack.c.l.b16 %v636
      %v737 = vpack.c.b16 %v734, %v733
      %v738 = vpack.c.b16 %v736, %v735
      %741 = vmatprep.subr.bf16.mxu0 0
      %742 = vmatpush1.bf16.msra.mxu0 %v737
      %743 = vmatprep.subr.bf16.mxu0 0
      %744 = vmatpush1.bf16.msra.mxu0 %v738
      %745 = vmatprep.subr.bf16.mxu0 0
      %746 = vmatpush1.bf16.msra.mxu0 0
      %747 = vmatprep.subr.bf16.mxu0 0
      %748 = vmatpush1.bf16.msra.mxu0 0
      %749 = vmatprep.subr.bf16.mxu0 0
      %750 = vmatpush1.bf16.msra.mxu0 0
      %751 = vmatprep.subr.bf16.mxu0 0
      %752 = vmatpush1.bf16.msra.mxu0 0
      %753 = vmatprep.subr.bf16.mxu0 0
      %754 = vmatpush1.bf16.msra.mxu0 0
      %755 = vmatprep.subr.bf16.mxu0 0
      %756 = vmatpush1.bf16.msra.mxu0 0
      %757 = vmatprep.subr.bf16.mxu0 0
      %758 = vmatpush1.bf16.msra.mxu0 0
      %759 = vmatprep.subr.bf16.mxu0 0
      %760 = vmatpush1.bf16.msra.mxu0 0
      %761 = vmatprep.subr.bf16.mxu0 0
      %762 = vmatpush1.bf16.msra.mxu0 0
      %763 = vmatprep.subr.bf16.mxu0 0
      %764 = vmatpush1.bf16.msra.mxu0 0
      %765 = vmatprep.subr.bf16.mxu0 0
      %766 = vmatpush1.bf16.msra.mxu0 0
      %767 = vmatprep.subr.bf16.mxu0 0
      %768 = vmatpush1.bf16.msra.mxu0 0
      %769 = vmatprep.subr.bf16.mxu0 0
      %770 = vmatpush1.bf16.msra.mxu0 0
      %771 = vmatprep.subr.bf16.mxu0 0
      %772 = vmatpush1.bf16.msra.mxu0 0
      %773 = vmatprep.mubr.bf16.mxu0 0
      %774 = vmatmul.mubr.bf16.gmra.mrb[0].mxu0 %v687
      %v775 = vpop.f32.mrb[0].mxu0
      %v776 = vadd.f32 %v660, %v775
      %v777 = vpop.f32.mrb[0].mxu0
      %v778 = vpop.f32.mrb[0].mxu0
      %v779 = vpop.f32.mrb[0].mxu0
      %780 = vdwg.mxu0
      %v785 = vunpack.c.l.b16 %v637
      %v786 = vunpack.c.l.b16 %v638
      %v787 = vunpack.c.l.b16 %v639
      %v788 = vunpack.c.l.b16 %v640
      %v789 = vpack.c.b16 %v786, %v785
      %v790 = vpack.c.b16 %v788, %v787
      %793 = vmatprep.subr.bf16.mxu0 0
      %794 = vmatpush1.bf16.msra.mxu0 %v789
      %795 = vmatprep.subr.bf16.mxu0 0
      %796 = vmatpush1.bf16.msra.mxu0 %v790
      %797 = vmatprep.subr.bf16.mxu0 0
      %798 = vmatpush1.bf16.msra.mxu0 0
      %799 = vmatprep.subr.bf16.mxu0 0
      %800 = vmatpush1.bf16.msra.mxu0 0
      %801 = vmatprep.subr.bf16.mxu0 0
      %802 = vmatpush1.bf16.msra.mxu0 0
      %803 = vmatprep.subr.bf16.mxu0 0
      %804 = vmatpush1.bf16.msra.mxu0 0
      %805 = vmatprep.subr.bf16.mxu0 0
      %806 = vmatpush1.bf16.msra.mxu0 0
      %807 = vmatprep.subr.bf16.mxu0 0
      %808 = vmatpush1.bf16.msra.mxu0 0
      %809 = vmatprep.subr.bf16.mxu0 0
      %810 = vmatpush1.bf16.msra.mxu0 0
      %811 = vmatprep.subr.bf16.mxu0 0
      %812 = vmatpush1.bf16.msra.mxu0 0
      %813 = vmatprep.subr.bf16.mxu0 0
      %814 = vmatpush1.bf16.msra.mxu0 0
      %815 = vmatprep.subr.bf16.mxu0 0
      %816 = vmatpush1.bf16.msra.mxu0 0
      %817 = vmatprep.subr.bf16.mxu0 0
      %818 = vmatpush1.bf16.msra.mxu0 0
      %819 = vmatprep.subr.bf16.mxu0 0
      %820 = vmatpush1.bf16.msra.mxu0 0
      %821 = vmatprep.subr.bf16.mxu0 0
      %822 = vmatpush1.bf16.msra.mxu0 0
      %823 = vmatprep.subr.bf16.mxu0 0
      %824 = vmatpush1.bf16.msra.mxu0 0
      %825 = vmatprep.mubr.bf16.mxu0 0
      %826 = vmatmul.mubr.bf16.gmra.mrb[0].mxu0 %v687
      %v827 = vpop.f32.mrb[0].mxu0
      %v828 = vadd.f32 %v664, %v827
      %v829 = vpop.f32.mrb[0].mxu0
      %v830 = vpop.f32.mrb[0].mxu0
      %v831 = vpop.f32.mrb[0].mxu0
      %832 = vdwg.mxu0
      %v837 = vunpack.c.l.b16 %v641
      %v838 = vunpack.c.l.b16 %v642
      %v839 = vunpack.c.l.b16 %v643
      %v840 = vunpack.c.l.b16 %v644
      %v841 = vpack.c.b16 %v838, %v837
      %v842 = vpack.c.b16 %v840, %v839
      %845 = vmatprep.subr.bf16.mxu0 0
      %846 = vmatpush1.bf16.msra.mxu0 %v841
      %847 = vmatprep.subr.bf16.mxu0 0
      %848 = vmatpush1.bf16.msra.mxu0 %v842
      %849 = vmatprep.subr.bf16.mxu0 0
      %850 = vmatpush1.bf16.msra.mxu0 0
      %851 = vmatprep.subr.bf16.mxu0 0
      %852 = vmatpush1.bf16.msra.mxu0 0
      %853 = vmatprep.subr.bf16.mxu0 0
      %854 = vmatpush1.bf16.msra.mxu0 0
      %855 = vmatprep.subr.bf16.mxu0 0
      %856 = vmatpush1.bf16.msra.mxu0 0
      %857 = vmatprep.subr.bf16.mxu0 0
      %858 = vmatpush1.bf16.msra.mxu0 0
      %859 = vmatprep.subr.bf16.mxu0 0
      %860 = vmatpush1.bf16.msra.mxu0 0
      %861 = vmatprep.subr.bf16.mxu0 0
      %862 = vmatpush1.bf16.msra.mxu0 0
      %863 = vmatprep.subr.bf16.mxu0 0
      %864 = vmatpush1.bf16.msra.mxu0 0
      %865 = vmatprep.subr.bf16.mxu0 0
      %866 = vmatpush1.bf16.msra.mxu0 0
      %867 = vmatprep.subr.bf16.mxu0 0
      %868 = vmatpush1.bf16.msra.mxu0 0
      %869 = vmatprep.subr.bf16.mxu0 0
      %870 = vmatpush1.bf16.msra.mxu0 0
      %871 = vmatprep.subr.bf16.mxu0 0
      %872 = vmatpush1.bf16.msra.mxu0 0
      %873 = vmatprep.subr.bf16.mxu0 0
      %874 = vmatpush1.bf16.msra.mxu0 0
      %875 = vmatprep.subr.bf16.mxu0 0
      %876 = vmatpush1.bf16.msra.mxu0 0
      %877 = vmatprep.mubr.bf16.mxu0 0
      %878 = vmatmul.mubr.bf16.gmra.mrb[0].mxu0 %v687
      %v879 = vpop.f32.mrb[0].mxu0
      %v880 = vadd.f32 %v668, %v879
      %v881 = vpop.f32.mrb[0].mxu0
      %v882 = vpop.f32.mrb[0].mxu0
      %v883 = vpop.f32.mrb[0].mxu0
      %884 = vdwg.mxu0
      %v885 = vld [vmem:[%s3] sm:$0xf]
      %v886 = vld [vmem:[%s3 + $0x4] sm:$0xf]
      %v887 = vld [vmem:[%s3 + $0x8] sm:$0xf]
      %v888 = vld [vmem:[%s3 + $0xc] sm:$0xf]
      %v889 = vld [vmem:[%s3 + $0x10] sm:$0xf]
      %v890 = vld [vmem:[%s3 + $0x14] sm:$0xf]
      %v891 = vld [vmem:[%s3 + $0x18] sm:$0xf]
      %v892 = vld [vmem:[%s3 + $0x1c] sm:$0xf]
      %v893 = vld [vmem:[%s3 + $0x20] sm:$0xf]
      %v894 = vld [vmem:[%s3 + $0x24] sm:$0xf]
      %v895 = vld [vmem:[%s3 + $0x28] sm:$0xf]
      %v896 = vld [vmem:[%s3 + $0x2c] sm:$0xf]
      %v897 = vld [vmem:[%s3 + $0x30] sm:$0xf]
      %v898 = vld [vmem:[%s3 + $0x34] sm:$0xf]
      %v899 = vld [vmem:[%s3 + $0x38] sm:$0xf]
      %v900 = vld [vmem:[%s3 + $0x3c] sm:$0xf]
      %v901 = vld [vmem:[%s6] sm:$0x1]
      %v902 = vld [vmem:[%s6 + $0x1] sm:$0x1]
      %v903 = vld [vmem:[%s6 + $0x2] sm:$0x1]
      %v904 = vld [vmem:[%s6 + $0x3] sm:$0x1]
      %v909 = vlaneseq
      %v910 = vshrl.u32 %v909, 7
      %v911 = vsub.s32 0, %v910
      %v912 = vrot.slane %v901, %v911
      %v913 = vlaneseq
      %v914 = vshrl.u32 %v913, 7
      %v915 = vsub.s32 0, %v914
      %v916 = vrot.slane %v902, %v915
      %v917 = vlaneseq
      %v918 = vshrl.u32 %v917, 7
      %v919 = vsub.s32 0, %v918
      %v920 = vrot.slane %v903, %v919
      %v921 = vlaneseq
      %v922 = vshrl.u32 %v921, 7
      %v923 = vsub.s32 0, %v922
      %v924 = vrot.slane %v904, %v923
      %v933 = vunpack.c.l.b16 %v885
      %v934 = vunpack.c.l.b16 %v886
      %v935 = vunpack.c.l.b16 %v887
      %v936 = vunpack.c.l.b16 %v888
      %v937 = vpack.c.b16 %v934, %v933
      %v938 = vpack.c.b16 %v936, %v935
      %941 = vmatprep.subr.bf16.mxu0 0
      %942 = vmatpush1.bf16.msra.mxu0 %v937
      %943 = vmatprep.subr.bf16.mxu0 0
      %944 = vmatpush1.bf16.msra.mxu0 %v938
      %945 = vmatprep.subr.bf16.mxu0 0
      %946 = vmatpush1.bf16.msra.mxu0 0
      %947 = vmatprep.subr.bf16.mxu0 0
      %948 = vmatpush1.bf16.msra.mxu0 0
      %949 = vmatprep.subr.bf16.mxu0 0
      %950 = vmatpush1.bf16.msra.mxu0 0
      %951 = vmatprep.subr.bf16.mxu0 0
      %952 = vmatpush1.bf16.msra.mxu0 0
      %953 = vmatprep.subr.bf16.mxu0 0
      %954 = vmatpush1.bf16.msra.mxu0 0
      %955 = vmatprep.subr.bf16.mxu0 0
      %956 = vmatpush1.bf16.msra.mxu0 0
      %957 = vmatprep.subr.bf16.mxu0 0
      %958 = vmatpush1.bf16.msra.mxu0 0
      %959 = vmatprep.subr.bf16.mxu0 0
      %960 = vmatpush1.bf16.msra.mxu0 0
      %961 = vmatprep.subr.bf16.mxu0 0
      %962 = vmatpush1.bf16.msra.mxu0 0
      %963 = vmatprep.subr.bf16.mxu0 0
      %964 = vmatpush1.bf16.msra.mxu0 0
      %965 = vmatprep.subr.bf16.mxu0 0
      %966 = vmatpush1.bf16.msra.mxu0 0
      %967 = vmatprep.subr.bf16.mxu0 0
      %968 = vmatpush1.bf16.msra.mxu0 0
      %969 = vmatprep.subr.bf16.mxu0 0
      %970 = vmatpush1.bf16.msra.mxu0 0
      %971 = vmatprep.subr.bf16.mxu0 0
      %972 = vmatpush1.bf16.msra.mxu0 0
      %973 = vmatprep.mubr.bf16.mxu0 0
      %974 = vmatmul.mubr.bf16.gmra.mrb[0].mxu0 %v687
      %v975 = vpop.f32.mrb[0].mxu0
      %v976 = vadd.f32 %v912, %v975
      %v977 = vpop.f32.mrb[0].mxu0
      %v978 = vpop.f32.mrb[0].mxu0
      %v979 = vpop.f32.mrb[0].mxu0
      %980 = vdwg.mxu0
      %v985 = vunpack.c.l.b16 %v889
      %v986 = vunpack.c.l.b16 %v890
      %v987 = vunpack.c.l.b16 %v891
      %v988 = vunpack.c.l.b16 %v892
      %v989 = vpack.c.b16 %v986, %v985
      %v990 = vpack.c.b16 %v988, %v987
      %993 = vmatprep.subr.bf16.mxu0 0
      %994 = vmatpush1.bf16.msra.mxu0 %v989
      %995 = vmatprep.subr.bf16.mxu0 0
      %996 = vmatpush1.bf16.msra.mxu0 %v990
      %997 = vmatprep.subr.bf16.mxu0 0
      %998 = vmatpush1.bf16.msra.mxu0 0
      %999 = vmatprep.subr.bf16.mxu0 0
      %1000 = vmatpush1.bf16.msra.mxu0 0
      %1001 = vmatprep.subr.bf16.mxu0 0
      %1002 = vmatpush1.bf16.msra.mxu0 0
      %1003 = vmatprep.subr.bf16.mxu0 0
      %1004 = vmatpush1.bf16.msra.mxu0 0
      %1005 = vmatprep.subr.bf16.mxu0 0
      %1006 = vmatpush1.bf16.msra.mxu0 0
      %1007 = vmatprep.subr.bf16.mxu0 0
      %1008 = vmatpush1.bf16.msra.mxu0 0
      %1009 = vmatprep.subr.bf16.mxu0 0
      %1010 = vmatpush1.bf16.msra.mxu0 0
      %1011 = vmatprep.subr.bf16.mxu0 0
      %1012 = vmatpush1.bf16.msra.mxu0 0
      %1013 = vmatprep.subr.bf16.mxu0 0
      %1014 = vmatpush1.bf16.msra.mxu0 0
      %1015 = vmatprep.subr.bf16.mxu0 0
      %1016 = vmatpush1.bf16.msra.mxu0 0
      %1017 = vmatprep.subr.bf16.mxu0 0
      %1018 = vmatpush1.bf16.msra.mxu0 0
      %1019 = vmatprep.subr.bf16.mxu0 0
      %1020 = vmatpush1.bf16.msra.mxu0 0
      %1021 = vmatprep.subr.bf16.mxu0 0
      %1022 = vmatpush1.bf16.msra.mxu0 0
      %1023 = vmatprep.subr.bf16.mxu0 0
      %1024 = vmatpush1.bf16.msra.mxu0 0
      %1025 = vmatprep.mubr.bf16.mxu0 0
      %1026 = vmatmul.mubr.bf16.gmra.mrb[0].mxu0 %v687
      %v1027 = vpop.f32.mrb[0].mxu0
      %v1028 = vadd.f32 %v916, %v1027
      %v1029 = vpop.f32.mrb[0].mxu0
      %v1030 = vpop.f32.mrb[0].mxu0
      %v1031 = vpop.f32.mrb[0].mxu0
      %1032 = vdwg.mxu0
      %v1037 = vunpack.c.l.b16 %v893
      %v1038 = vunpack.c.l.b16 %v894
      %v1039 = vunpack.c.l.b16 %v895
      %v1040 = vunpack.c.l.b16 %v896
      %v1041 = vpack.c.b16 %v1038, %v1037
      %v1042 = vpack.c.b16 %v1040, %v1039
      %1045 = vmatprep.subr.bf16.mxu0 0
      %1046 = vmatpush1.bf16.msra.mxu0 %v1041
      %1047 = vmatprep.subr.bf16.mxu0 0
      %1048 = vmatpush1.bf16.msra.mxu0 %v1042
      %1049 = vmatprep.subr.bf16.mxu0 0
      %1050 = vmatpush1.bf16.msra.mxu0 0
      %1051 = vmatprep.subr.bf16.mxu0 0
      %1052 = vmatpush1.bf16.msra.mxu0 0
      %1053 = vmatprep.subr.bf16.mxu0 0
      %1054 = vmatpush1.bf16.msra.mxu0 0
      %1055 = vmatprep.subr.bf16.mxu0 0
      %1056 = vmatpush1.bf16.msra.mxu0 0
      %1057 = vmatprep.subr.bf16.mxu0 0
      %1058 = vmatpush1.bf16.msra.mxu0 0
      %1059 = vmatprep.subr.bf16.mxu0 0
      %1060 = vmatpush1.bf16.msra.mxu0 0
      %1061 = vmatprep.subr.bf16.mxu0 0
      %1062 = vmatpush1.bf16.msra.mxu0 0
      %1063 = vmatprep.subr.bf16.mxu0 0
      %1064 = vmatpush1.bf16.msra.mxu0 0
      %1065 = vmatprep.subr.bf16.mxu0 0
      %1066 = vmatpush1.bf16.msra.mxu0 0
      %1067 = vmatprep.subr.bf16.mxu0 0
      %1068 = vmatpush1.bf16.msra.mxu0 0
      %1069 = vmatprep.subr.bf16.mxu0 0
      %1070 = vmatpush1.bf16.msra.mxu0 0
      %1071 = vmatprep.subr.bf16.mxu0 0
      %1072 = vmatpush1.bf16.msra.mxu0 0
      %1073 = vmatprep.subr.bf16.mxu0 0
      %1074 = vmatpush1.bf16.msra.mxu0 0
      %1075 = vmatprep.subr.bf16.mxu0 0
      %1076 = vmatpush1.bf16.msra.mxu0 0
      %1077 = vmatprep.mubr.bf16.mxu0 0
      %1078 = vmatmul.mubr.bf16.gmra.mrb[0].mxu0 %v687
      %v1079 = vpop.f32.mrb[0].mxu0
      %v1080 = vadd.f32 %v920, %v1079
      %v1081 = vpop.f32.mrb[0].mxu0
      %v1082 = vpop.f32.mrb[0].mxu0
      %v1083 = vpop.f32.mrb[0].mxu0
      %1084 = vdwg.mxu0
      %v1089 = vunpack.c.l.b16 %v897
      %v1090 = vunpack.c.l.b16 %v898
      %v1091 = vunpack.c.l.b16 %v899
      %v1092 = vunpack.c.l.b16 %v900
      %v1093 = vpack.c.b16 %v1090, %v1089
      %v1094 = vpack.c.b16 %v1092, %v1091
      %1097 = vmatprep.subr.bf16.mxu0 0
      %1098 = vmatpush1.bf16.msra.mxu0 %v1093
      %1099 = vmatprep.subr.bf16.mxu0 0
      %1100 = vmatpush1.bf16.msra.mxu0 %v1094
      %1101 = vmatprep.subr.bf16.mxu0 0
      %1102 = vmatpush1.bf16.msra.mxu0 0
      %1103 = vmatprep.subr.bf16.mxu0 0
      %1104 = vmatpush1.bf16.msra.mxu0 0
      %1105 = vmatprep.subr.bf16.mxu0 0
      %1106 = vmatpush1.bf16.msra.mxu0 0
      %1107 = vmatprep.subr.bf16.mxu0 0
      %1108 = vmatpush1.bf16.msra.mxu0 0
      %1109 = vmatprep.subr.bf16.mxu0 0
      %1110 = vmatpush1.bf16.msra.mxu0 0
      %1111 = vmatprep.subr.bf16.mxu0 0
      %1112 = vmatpush1.bf16.msra.mxu0 0
      %1113 = vmatprep.subr.bf16.mxu0 0
      %1114 = vmatpush1.bf16.msra.mxu0 0
      %1115 = vmatprep.subr.bf16.mxu0 0
      %1116 = vmatpush1.bf16.msra.mxu0 0
      %1117 = vmatprep.subr.bf16.mxu0 0
      %1118 = vmatpush1.bf16.msra.mxu0 0
      %1119 = vmatprep.subr.bf16.mxu0 0
      %1120 = vmatpush1.bf16.msra.mxu0 0
      %1121 = vmatprep.subr.bf16.mxu0 0
      %1122 = vmatpush1.bf16.msra.mxu0 0
      %1123 = vmatprep.subr.bf16.mxu0 0
      %1124 = vmatpush1.bf16.msra.mxu0 0
      %1125 = vmatprep.subr.bf16.mxu0 0
      %1126 = vmatpush1.bf16.msra.mxu0 0
      %1127 = vmatprep.subr.bf16.mxu0 0
      %1128 = vmatpush1.bf16.msra.mxu0 0
      %1129 = vmatprep.mubr.bf16.mxu0 0
      %1130 = vmatmul.mubr.bf16.gmra.mrb[0].mxu0 %v687
      %v1131 = vpop.f32.mrb[0].mxu0
      %v1132 = vadd.f32 %v924, %v1131
      %v1133 = vpop.f32.mrb[0].mxu0
      %v1134 = vpop.f32.mrb[0].mxu0
      %v1135 = vpop.f32.mrb[0].mxu0
      %1136 = vdwg.mxu0
      %v1137 = vld [vmem:[%s4] sm:$0xf]
      %v1138 = vld [vmem:[%s4 + $0x4] sm:$0xf]
      %v1139 = vld [vmem:[%s4 + $0x8] sm:$0xf]
      %v1140 = vld [vmem:[%s4 + $0xc] sm:$0xf]
      %v1141 = vld [vmem:[%s4 + $0x10] sm:$0xf]
      %v1142 = vld [vmem:[%s4 + $0x14] sm:$0xf]
      %v1143 = vld [vmem:[%s4 + $0x18] sm:$0xf]
      %v1144 = vld [vmem:[%s4 + $0x1c] sm:$0xf]
      %v1145 = vld [vmem:[%s4 + $0x20] sm:$0xf]
      %v1146 = vld [vmem:[%s4 + $0x24] sm:$0xf]
      %v1147 = vld [vmem:[%s4 + $0x28] sm:$0xf]
      %v1148 = vld [vmem:[%s4 + $0x2c] sm:$0xf]
      %v1149 = vld [vmem:[%s4 + $0x30] sm:$0xf]
      %v1150 = vld [vmem:[%s4 + $0x34] sm:$0xf]
      %v1151 = vld [vmem:[%s4 + $0x38] sm:$0xf]
      %v1152 = vld [vmem:[%s4 + $0x3c] sm:$0xf]
      %v1153 = vld [vmem:[%s7] sm:$0x1]
      %v1154 = vld [vmem:[%s7 + $0x1] sm:$0x1]
      %v1155 = vld [vmem:[%s7 + $0x2] sm:$0x1]
      %v1156 = vld [vmem:[%s7 + $0x3] sm:$0x1]
      %v1161 = vlaneseq
      %v1162 = vshrl.u32 %v1161, 7
      %v1163 = vsub.s32 0, %v1162
      %v1164 = vrot.slane %v1153, %v1163
      %v1165 = vlaneseq
      %v1166 = vshrl.u32 %v1165, 7
      %v1167 = vsub.s32 0, %v1166
      %v1168 = vrot.slane %v1154, %v1167
      %v1169 = vlaneseq
      %v1170 = vshrl.u32 %v1169, 7
      %v1171 = vsub.s32 0, %v1170
      %v1172 = vrot.slane %v1155, %v1171
      %v1173 = vlaneseq
      %v1174 = vshrl.u32 %v1173, 7
      %v1175 = vsub.s32 0, %v1174
      %v1176 = vrot.slane %v1156, %v1175
      %v1185 = vunpack.c.l.b16 %v1137
      %v1186 = vunpack.c.l.b16 %v1138
      %v1187 = vunpack.c.l.b16 %v1139
      %v1188 = vunpack.c.l.b16 %v1140
      %v1189 = vpack.c.b16 %v1186, %v1185
      %v1190 = vpack.c.b16 %v1188, %v1187
      %1193 = vmatprep.subr.bf16.mxu0 0
      %1194 = vmatpush1.bf16.msra.mxu0 %v1189
      %1195 = vmatprep.subr.bf16.mxu0 0
      %1196 = vmatpush1.bf16.msra.mxu0 %v1190
      %1197 = vmatprep.subr.bf16.mxu0 0
      %1198 = vmatpush1.bf16.msra.mxu0 0
      %1199 = vmatprep.subr.bf16.mxu0 0
      %1200 = vmatpush1.bf16.msra.mxu0 0
      %1201 = vmatprep.subr.bf16.mxu0 0
      %1202 = vmatpush1.bf16.msra.mxu0 0
      %1203 = vmatprep.subr.bf16.mxu0 0
      %1204 = vmatpush1.bf16.msra.mxu0 0
      %1205 = vmatprep.subr.bf16.mxu0 0
      %1206 = vmatpush1.bf16.msra.mxu0 0
      %1207 = vmatprep.subr.bf16.mxu0 0
      %1208 = vmatpush1.bf16.msra.mxu0 0
      %1209 = vmatprep.subr.bf16.mxu0 0
      %1210 = vmatpush1.bf16.msra.mxu0 0
      %1211 = vmatprep.subr.bf16.mxu0 0
      %1212 = vmatpush1.bf16.msra.mxu0 0
      %1213 = vmatprep.subr.bf16.mxu0 0
      %1214 = vmatpush1.bf16.msra.mxu0 0
      %1215 = vmatprep.subr.bf16.mxu0 0
      %1216 = vmatpush1.bf16.msra.mxu0 0
      %1217 = vmatprep.subr.bf16.mxu0 0
      %1218 = vmatpush1.bf16.msra.mxu0 0
      %1219 = vmatprep.subr.bf16.mxu0 0
      %1220 = vmatpush1.bf16.msra.mxu0 0
      %1221 = vmatprep.subr.bf16.mxu0 0
      %1222 = vmatpush1.bf16.msra.mxu0 0
      %1223 = vmatprep.subr.bf16.mxu0 0
      %1224 = vmatpush1.bf16.msra.mxu0 0
      %1225 = vmatprep.mubr.bf16.mxu0 0
      %1226 = vmatmul.mubr.bf16.gmra.mrb[0].mxu0 %v687
      %v1227 = vpop.f32.mrb[0].mxu0
      %v1228 = vadd.f32 %v1164, %v1227
      %v1229 = vpop.f32.mrb[0].mxu0
      %v1230 = vpop.f32.mrb[0].mxu0
      %v1231 = vpop.f32.mrb[0].mxu0
      %1232 = vdwg.mxu0
      %v1237 = vunpack.c.l.b16 %v1141
      %v1238 = vunpack.c.l.b16 %v1142
      %v1239 = vunpack.c.l.b16 %v1143
      %v1240 = vunpack.c.l.b16 %v1144
      %v1241 = vpack.c.b16 %v1238, %v1237
      %v1242 = vpack.c.b16 %v1240, %v1239
      %1245 = vmatprep.subr.bf16.mxu0 0
      %1246 = vmatpush1.bf16.msra.mxu0 %v1241
      %1247 = vmatprep.subr.bf16.mxu0 0
      %1248 = vmatpush1.bf16.msra.mxu0 %v1242
      %1249 = vmatprep.subr.bf16.mxu0 0
      %1250 = vmatpush1.bf16.msra.mxu0 0
      %1251 = vmatprep.subr.bf16.mxu0 0
      %1252 = vmatpush1.bf16.msra.mxu0 0
      %1253 = vmatprep.subr.bf16.mxu0 0
      %1254 = vmatpush1.bf16.msra.mxu0 0
      %1255 = vmatprep.subr.bf16.mxu0 0
      %1256 = vmatpush1.bf16.msra.mxu0 0
      %1257 = vmatprep.subr.bf16.mxu0 0
      %1258 = vmatpush1.bf16.msra.mxu0 0
      %1259 = vmatprep.subr.bf16.mxu0 0
      %1260 = vmatpush1.bf16.msra.mxu0 0
      %1261 = vmatprep.subr.bf16.mxu0 0
      %1262 = vmatpush1.bf16.msra.mxu0 0
      %1263 = vmatprep.subr.bf16.mxu0 0
      %1264 = vmatpush1.bf16.msra.mxu0 0
      %1265 = vmatprep.subr.bf16.mxu0 0
      %1266 = vmatpush1.bf16.msra.mxu0 0
      %1267 = vmatprep.subr.bf16.mxu0 0
      %1268 = vmatpush1.bf16.msra.mxu0 0
      %1269 = vmatprep.subr.bf16.mxu0 0
      %1270 = vmatpush1.bf16.msra.mxu0 0
      %1271 = vmatprep.subr.bf16.mxu0 0
      %1272 = vmatpush1.bf16.msra.mxu0 0
      %1273 = vmatprep.subr.bf16.mxu0 0
      %1274 = vmatpush1.bf16.msra.mxu0 0
      %1275 = vmatprep.subr.bf16.mxu0 0
      %1276 = vmatpush1.bf16.msra.mxu0 0
      %1277 = vmatprep.mubr.bf16.mxu0 0
      %1278 = vmatmul.mubr.bf16.gmra.mrb[0].mxu0 %v687
      %v1279 = vpop.f32.mrb[0].mxu0
      %v1280 = vadd.f32 %v1168, %v1279
      %v1281 = vpop.f32.mrb[0].mxu0
      %v1282 = vpop.f32.mrb[0].mxu0
      %v1283 = vpop.f32.mrb[0].mxu0
      %1284 = vdwg.mxu0
      %v1289 = vunpack.c.l.b16 %v1145
      %v1290 = vunpack.c.l.b16 %v1146
      %v1291 = vunpack.c.l.b16 %v1147
      %v1292 = vunpack.c.l.b16 %v1148
      %v1293 = vpack.c.b16 %v1290, %v1289
      %v1294 = vpack.c.b16 %v1292, %v1291
      %1297 = vmatprep.subr.bf16.mxu0 0
      %1298 = vmatpush1.bf16.msra.mxu0 %v1293
      %1299 = vmatprep.subr.bf16.mxu0 0
      %1300 = vmatpush1.bf16.msra.mxu0 %v1294
      %1301 = vmatprep.subr.bf16.mxu0 0
      %1302 = vmatpush1.bf16.msra.mxu0 0
      %1303 = vmatprep.subr.bf16.mxu0 0
      %1304 = vmatpush1.bf16.msra.mxu0 0
      %1305 = vmatprep.subr.bf16.mxu0 0
      %1306 = vmatpush1.bf16.msra.mxu0 0
      %1307 = vmatprep.subr.bf16.mxu0 0
      %1308 = vmatpush1.bf16.msra.mxu0 0
      %1309 = vmatprep.subr.bf16.mxu0 0
      %1310 = vmatpush1.bf16.msra.mxu0 0
      %1311 = vmatprep.subr.bf16.mxu0 0
      %1312 = vmatpush1.bf16.msra.mxu0 0
      %1313 = vmatprep.subr.bf16.mxu0 0
      %1314 = vmatpush1.bf16.msra.mxu0 0
      %1315 = vmatprep.subr.bf16.mxu0 0
      %1316 = vmatpush1.bf16.msra.mxu0 0
      %1317 = vmatprep.subr.bf16.mxu0 0
      %1318 = vmatpush1.bf16.msra.mxu0 0
      %1319 = vmatprep.subr.bf16.mxu0 0
      %1320 = vmatpush1.bf16.msra.mxu0 0
      %1321 = vmatprep.subr.bf16.mxu0 0
      %1322 = vmatpush1.bf16.msra.mxu0 0
      %1323 = vmatprep.subr.bf16.mxu0 0
      %1324 = vmatpush1.bf16.msra.mxu0 0
      %1325 = vmatprep.subr.bf16.mxu0 0
      %1326 = vmatpush1.bf16.msra.mxu0 0
      %1327 = vmatprep.subr.bf16.mxu0 0
      %1328 = vmatpush1.bf16.msra.mxu0 0
      %1329 = vmatprep.mubr.bf16.mxu0 0
      %1330 = vmatmul.mubr.bf16.gmra.mrb[0].mxu0 %v687
      %v1331 = vpop.f32.mrb[0].mxu0
      %v1332 = vadd.f32 %v1172, %v1331
      %v1333 = vpop.f32.mrb[0].mxu0
      %v1334 = vpop.f32.mrb[0].mxu0
      %v1335 = vpop.f32.mrb[0].mxu0
      %1336 = vdwg.mxu0
      %v1341 = vunpack.c.l.b16 %v1149
      %v1342 = vunpack.c.l.b16 %v1150
      %v1343 = vunpack.c.l.b16 %v1151
      %v1344 = vunpack.c.l.b16 %v1152
      %v1345 = vpack.c.b16 %v1342, %v1341
      %v1346 = vpack.c.b16 %v1344, %v1343
      %1349 = vmatprep.subr.bf16.mxu0 0
      %1350 = vmatpush1.bf16.msra.mxu0 %v1345
      %1351 = vmatprep.subr.bf16.mxu0 0
      %1352 = vmatpush1.bf16.msra.mxu0 %v1346
      %1353 = vmatprep.subr.bf16.mxu0 0
      %1354 = vmatpush1.bf16.msra.mxu0 0
      %1355 = vmatprep.subr.bf16.mxu0 0
      %1356 = vmatpush1.bf16.msra.mxu0 0
      %1357 = vmatprep.subr.bf16.mxu0 0
      %1358 = vmatpush1.bf16.msra.mxu0 0
      %1359 = vmatprep.subr.bf16.mxu0 0
      %1360 = vmatpush1.bf16.msra.mxu0 0
      %1361 = vmatprep.subr.bf16.mxu0 0
      %1362 = vmatpush1.bf16.msra.mxu0 0
      %1363 = vmatprep.subr.bf16.mxu0 0
      %1364 = vmatpush1.bf16.msra.mxu0 0
      %1365 = vmatprep.subr.bf16.mxu0 0
      %1366 = vmatpush1.bf16.msra.mxu0 0
      %1367 = vmatprep.subr.bf16.mxu0 0
      %1368 = vmatpush1.bf16.msra.mxu0 0
      %1369 = vmatprep.subr.bf16.mxu0 0
      %1370 = vmatpush1.bf16.msra.mxu0 0
      %1371 = vmatprep.subr.bf16.mxu0 0
      %1372 = vmatpush1.bf16.msra.mxu0 0
      %1373 = vmatprep.subr.bf16.mxu0 0
      %1374 = vmatpush1.bf16.msra.mxu0 0
      %1375 = vmatprep.subr.bf16.mxu0 0
      %1376 = vmatpush1.bf16.msra.mxu0 0
      %1377 = vmatprep.subr.bf16.mxu0 0
      %1378 = vmatpush1.bf16.msra.mxu0 0
      %1379 = vmatprep.subr.bf16.mxu0 0
      %1380 = vmatpush1.bf16.msra.mxu0 0
      %1381 = vmatprep.mubr.bf16.mxu0 0
      %1382 = vmatmul.mubr.bf16.gmra.mrb[0].mxu0 %v687
      %v1383 = vpop.f32.mrb[0].mxu0
      %v1384 = vadd.f32 %v1176, %v1383
      %v1385 = vpop.f32.mrb[0].mxu0
      %v1386 = vpop.f32.mrb[0].mxu0
      %v1387 = vpop.f32.mrb[0].mxu0
      %1388 = vdwg.mxu0
      %v1389 = vpack.c.bf16 %v724, %v724
      %v1390 = vpack.c.bf16 %v776, %v776
      %v1391 = vpack.c.bf16 %v828, %v828
      %v1392 = vpack.c.bf16 %v880, %v880
      %v1393 = vpack.c.bf16 %v976, %v976
      %v1394 = vpack.c.bf16 %v1028, %v1028
      %v1395 = vpack.c.bf16 %v1080, %v1080
      %v1396 = vpack.c.bf16 %v1132, %v1132
      %vm1397 = vcmask 64512
      %v1399 = vsel %vm1397, %v1389, 0
      %v1402 = vsel %vm1397, %v1393, 0
      %1404 = vmatprep.subr.bf16.mxu0 0
      %1405 = vmatpush1.bf16.xpose.msra.mxu0 %v1402
      %1406 = vmatprep.subr.bf16.mxu0 0
      %1407 = vmatpush1.bf16.xpose.msra.mxu0 0
      %1408 = vmatprep.subr.bf16.mxu0 0
      %1409 = vmatpush1.bf16.xpose.msra.mxu0 0
      %1410 = vmatprep.subr.bf16.mxu0 0
      %1411 = vmatpush1.bf16.xpose.msra.mxu0 0
      %1412 = vmatprep.subr.bf16.mxu0 0
      %1413 = vmatpush1.bf16.xpose.msra.mxu0 0
      %1414 = vmatprep.subr.bf16.mxu0 0
      %1415 = vmatpush1.bf16.xpose.msra.mxu0 0
      %1416 = vmatprep.subr.bf16.mxu0 0
      %1417 = vmatpush1.bf16.xpose.msra.mxu0 0
      %1418 = vmatprep.subr.bf16.mxu0 0
      %1419 = vmatpush1.bf16.xpose.msra.mxu0 0
      %1420 = vmatprep.subr.bf16.mxu0 0
      %1421 = vmatpush1.bf16.xpose.msra.mxu0 0
      %1422 = vmatprep.subr.bf16.mxu0 0
      %1423 = vmatpush1.bf16.xpose.msra.mxu0 0
      %1424 = vmatprep.subr.bf16.mxu0 0
      %1425 = vmatpush1.bf16.xpose.msra.mxu0 0
      %1426 = vmatprep.subr.bf16.mxu0 0
      %1427 = vmatpush1.bf16.xpose.msra.mxu0 0
      %1428 = vmatprep.subr.bf16.mxu0 0
      %1429 = vmatpush1.bf16.xpose.msra.mxu0 0
      %1430 = vmatprep.subr.bf16.mxu0 0
      %1431 = vmatpush1.bf16.xpose.msra.mxu0 0
      %1432 = vmatprep.subr.bf16.mxu0 0
      %1433 = vmatpush1.bf16.xpose.msra.mxu0 0
      %1434 = vmatprep.subr.bf16.mxu0 0
      %1435 = vmatpush1.bf16.xpose.msra.mxu0 0
      %1436 = vmatprep.mubr.bf16.mxu0 0
      %1437 = vmatmul.mubr.bf16.gmra.mrb[0].mxu0 %v1399
      %v1438 = vpop.f32.mrb[0].mxu0
      %v1439 = vadd.f32 0.0, %v1438
      %v1440 = vpop.f32.mrb[0].mxu0
      %v1441 = vpop.f32.mrb[0].mxu0
      %v1442 = vpop.f32.mrb[0].mxu0
      %1443 = vdwg.mxu0
      %v1445 = vsel %vm1397, %v1390, 0
      %v1448 = vsel %vm1397, %v1394, 0
      %1450 = vmatprep.subr.bf16.mxu0 0
      %1451 = vmatpush1.bf16.xpose.msra.mxu0 %v1448
      %1452 = vmatprep.subr.bf16.mxu0 0
      %1453 = vmatpush1.bf16.xpose.msra.mxu0 0
      %1454 = vmatprep.subr.bf16.mxu0 0
      %1455 = vmatpush1.bf16.xpose.msra.mxu0 0
      %1456 = vmatprep.subr.bf16.mxu0 0
      %1457 = vmatpush1.bf16.xpose.msra.mxu0 0
      %1458 = vmatprep.subr.bf16.mxu0 0
      %1459 = vmatpush1.bf16.xpose.msra.mxu0 0
      %1460 = vmatprep.subr.bf16.mxu0 0
      %1461 = vmatpush1.bf16.xpose.msra.mxu0 0
      %1462 = vmatprep.subr.bf16.mxu0 0
      %1463 = vmatpush1.bf16.xpose.msra.mxu0 0
      %1464 = vmatprep.subr.bf16.mxu0 0
      %1465 = vmatpush1.bf16.xpose.msra.mxu0 0
      %1466 = vmatprep.subr.bf16.mxu0 0
      %1467 = vmatpush1.bf16.xpose.msra.mxu0 0
      %1468 = vmatprep.subr.bf16.mxu0 0
      %1469 = vmatpush1.bf16.xpose.msra.mxu0 0
      %1470 = vmatprep.subr.bf16.mxu0 0
      %1471 = vmatpush1.bf16.xpose.msra.mxu0 0
      %1472 = vmatprep.subr.bf16.mxu0 0
      %1473 = vmatpush1.bf16.xpose.msra.mxu0 0
      %1474 = vmatprep.subr.bf16.mxu0 0
      %1475 = vmatpush1.bf16.xpose.msra.mxu0 0
      %1476 = vmatprep.subr.bf16.mxu0 0
      %1477 = vmatpush1.bf16.xpose.msra.mxu0 0
      %1478 = vmatprep.subr.bf16.mxu0 0
      %1479 = vmatpush1.bf16.xpose.msra.mxu0 0
      %1480 = vmatprep.subr.bf16.mxu0 0
      %1481 = vmatpush1.bf16.xpose.msra.mxu0 0
      %1482 = vmatprep.mubr.bf16.mxu0 0
      %1483 = vmatmul.mubr.bf16.gmra.mrb[0].mxu0 %v1445
      %v1484 = vpop.f32.mrb[0].mxu0
      %v1485 = vadd.f32 0.0, %v1484
      %v1486 = vpop.f32.mrb[0].mxu0
      %v1487 = vpop.f32.mrb[0].mxu0
      %v1488 = vpop.f32.mrb[0].mxu0
      %1489 = vdwg.mxu0
      %v1491 = vsel %vm1397, %v1391, 0
      %v1494 = vsel %vm1397, %v1395, 0
      %1496 = vmatprep.subr.bf16.mxu0 0
      %1497 = vmatpush1.bf16.xpose.msra.mxu0 %v1494
      %1498 = vmatprep.subr.bf16.mxu0 0
      %1499 = vmatpush1.bf16.xpose.msra.mxu0 0
      %1500 = vmatprep.subr.bf16.mxu0 0
      %1501 = vmatpush1.bf16.xpose.msra.mxu0 0
      %1502 = vmatprep.subr.bf16.mxu0 0
      %1503 = vmatpush1.bf16.xpose.msra.mxu0 0
      %1504 = vmatprep.subr.bf16.mxu0 0
      %1505 = vmatpush1.bf16.xpose.msra.mxu0 0
      %1506 = vmatprep.subr.bf16.mxu0 0
      %1507 = vmatpush1.bf16.xpose.msra.mxu0 0
      %1508 = vmatprep.subr.bf16.mxu0 0
      %1509 = vmatpush1.bf16.xpose.msra.mxu0 0
      %1510 = vmatprep.subr.bf16.mxu0 0
      %1511 = vmatpush1.bf16.xpose.msra.mxu0 0
      %1512 = vmatprep.subr.bf16.mxu0 0
      %1513 = vmatpush1.bf16.xpose.msra.mxu0 0
      %1514 = vmatprep.subr.bf16.mxu0 0
      %1515 = vmatpush1.bf16.xpose.msra.mxu0 0
      %1516 = vmatprep.subr.bf16.mxu0 0
      %1517 = vmatpush1.bf16.xpose.msra.mxu0 0
      %1518 = vmatprep.subr.bf16.mxu0 0
      %1519 = vmatpush1.bf16.xpose.msra.mxu0 0
      %1520 = vmatprep.subr.bf16.mxu0 0
      %1521 = vmatpush1.bf16.xpose.msra.mxu0 0
      %1522 = vmatprep.subr.bf16.mxu0 0
      %1523 = vmatpush1.bf16.xpose.msra.mxu0 0
      %1524 = vmatprep.subr.bf16.mxu0 0
      %1525 = vmatpush1.bf16.xpose.msra.mxu0 0
      %1526 = vmatprep.subr.bf16.mxu0 0
      %1527 = vmatpush1.bf16.xpose.msra.mxu0 0
      %1528 = vmatprep.mubr.bf16.mxu0 0
      %1529 = vmatmul.mubr.bf16.gmra.mrb[0].mxu0 %v1491
      %v1530 = vpop.f32.mrb[0].mxu0
      %v1531 = vadd.f32 0.0, %v1530
      %v1532 = vpop.f32.mrb[0].mxu0
      %v1533 = vpop.f32.mrb[0].mxu0
      %v1534 = vpop.f32.mrb[0].mxu0
      %1535 = vdwg.mxu0
      %v1537 = vsel %vm1397, %v1392, 0
      %v1540 = vsel %vm1397, %v1396, 0
      %1542 = vmatprep.subr.bf16.mxu0 0
      %1543 = vmatpush1.bf16.xpose.msra.mxu0 %v1540
      %1544 = vmatprep.subr.bf16.mxu0 0
      %1545 = vmatpush1.bf16.xpose.msra.mxu0 0
      %1546 = vmatprep.subr.bf16.mxu0 0
      %1547 = vmatpush1.bf16.xpose.msra.mxu0 0
      %1548 = vmatprep.subr.bf16.mxu0 0
      %1549 = vmatpush1.bf16.xpose.msra.mxu0 0
      %1550 = vmatprep.subr.bf16.mxu0 0
      %1551 = vmatpush1.bf16.xpose.msra.mxu0 0
      %1552 = vmatprep.subr.bf16.mxu0 0
      %1553 = vmatpush1.bf16.xpose.msra.mxu0 0
      %1554 = vmatprep.subr.bf16.mxu0 0
      %1555 = vmatpush1.bf16.xpose.msra.mxu0 0
      %1556 = vmatprep.subr.bf16.mxu0 0
      %1557 = vmatpush1.bf16.xpose.msra.mxu0 0
      %1558 = vmatprep.subr.bf16.mxu0 0
      %1559 = vmatpush1.bf16.xpose.msra.mxu0 0
      %1560 = vmatprep.subr.bf16.mxu0 0
      %1561 = vmatpush1.bf16.xpose.msra.mxu0 0
      %1562 = vmatprep.subr.bf16.mxu0 0
      %1563 = vmatpush1.bf16.xpose.msra.mxu0 0
      %1564 = vmatprep.subr.bf16.mxu0 0
      %1565 = vmatpush1.bf16.xpose.msra.mxu0 0
      %1566 = vmatprep.subr.bf16.mxu0 0
      %1567 = vmatpush1.bf16.xpose.msra.mxu0 0
      %1568 = vmatprep.subr.bf16.mxu0 0
      %1569 = vmatpush1.bf16.xpose.msra.mxu0 0
      %1570 = vmatprep.subr.bf16.mxu0 0
      %1571 = vmatpush1.bf16.xpose.msra.mxu0 0
      %1572 = vmatprep.subr.bf16.mxu0 0
      %1573 = vmatpush1.bf16.xpose.msra.mxu0 0
      %1574 = vmatprep.mubr.bf16.mxu0 0
      %1575 = vmatmul.mubr.bf16.gmra.mrb[0].mxu0 %v1537
      %v1576 = vpop.f32.mrb[0].mxu0
      %v1577 = vadd.f32 0.0, %v1576
      %v1578 = vpop.f32.mrb[0].mxu0
      %v1579 = vpop.f32.mrb[0].mxu0
      %v1580 = vpop.f32.mrb[0].mxu0
      %1581 = vdwg.mxu0
      %v1582 = vmul.f32 %v1439, 0.35355338
      %v1583 = vmul.f32 %v1485, 0.35355338
      %v1584 = vmul.f32 %v1531, 0.35355338
      %v1585 = vmul.f32 %v1577, 0.35355338
      %v1586 = vsel %vm1397, %v1582, -inf
      %1587 = vmax.xlane.f32.xlu0 %v1586
      %v1588 = vpop.xlane.xlu0 %1587
      %v1589 = vsel %vm1397, %v1583, -inf
      %1590 = vmax.xlane.f32.xlu0 %v1589
      %v1591 = vpop.xlane.xlu0 %1590
      %v1592 = vsel %vm1397, %v1584, -inf
      %1593 = vmax.xlane.f32.xlu0 %v1592
      %v1594 = vpop.xlane.xlu0 %1593
      %v1595 = vsel %vm1397, %v1585, -inf
      %1596 = vmax.xlane.f32.xlu0 %v1595
      %v1597 = vpop.xlane.xlu0 %1596
      %v1598 = vsub.f32 %v1582, %v1588
      %v1599 = vsub.f32 %v1583, %v1591
      %v1600 = vsub.f32 %v1584, %v1594
      %v1601 = vsub.f32 %v1585, %v1597
      %v1602 = vmul.f32 %v1598, 1.442695
      %v1603 = vpow.pop %v1602
      %v1604 = vmul.f32 %v1599, 1.442695
      %v1605 = vpow.pop %v1604
      %v1606 = vmul.f32 %v1600, 1.442695
      %v1607 = vpow.pop %v1606
      %v1608 = vmul.f32 %v1601, 1.442695
      %v1609 = vpow.pop %v1608
      %v1610 = vsel %vm1397, %v1603, 0.0
      %1611 = vadd.xlane.f32.xlu0 %v1610
      %v1612 = vpop.xlane.xlu0 %1611
      %v1613 = vsel %vm1397, %v1605, 0.0
      %1614 = vadd.xlane.f32.xlu0 %v1613
      %v1615 = vpop.xlane.xlu0 %1614
      %v1616 = vsel %vm1397, %v1607, 0.0
      %1617 = vadd.xlane.f32.xlu0 %v1616
      %v1618 = vpop.xlane.xlu0 %1617
      %v1619 = vsel %vm1397, %v1609, 0.0
      %1620 = vadd.xlane.f32.xlu0 %v1619
      %v1621 = vpop.xlane.xlu0 %1620
      %v1622 = vrcp.pop %v1612
      %v1623 = vrcp.pop %v1615
      %v1624 = vrcp.pop %v1618
      %v1625 = vrcp.pop %v1621
      %v1626 = vmul.f32 %v1603, %v1622
      %v1627 = vmul.f32 %v1605, %v1623
      %v1628 = vmul.f32 %v1607, %v1624
      %v1629 = vmul.f32 %v1609, %v1625
      %v1630 = vpack.c.bf16 %v1626, %v1626
      %v1631 = vpack.c.bf16 %v1627, %v1627
      %v1632 = vpack.c.bf16 %v1628, %v1628
      %v1633 = vpack.c.bf16 %v1629, %v1629
      %v1634 = vpack.c.bf16 %v1228, %v1228
      %v1635 = vpack.c.bf16 %v1280, %v1280
      %v1636 = vpack.c.bf16 %v1332, %v1332
      %v1637 = vpack.c.bf16 %v1384, %v1384
      %v1639 = vsel %vm1397, %v1630, 0
      %vm1641 = vcmask 1043456
      %v1643 = vsel %vm1641, %v1634, 0
      %1645 = vmatprep.subr.bf16.mxu0 0
      %1646 = vmatpush1.bf16.msra.mxu0 %v1643
      %1647 = vmatprep.subr.bf16.mxu0 0
      %1648 = vmatpush1.bf16.msra.mxu0 0
      %1649 = vmatprep.subr.bf16.mxu0 0
      %1650 = vmatpush1.bf16.msra.mxu0 0
      %1651 = vmatprep.subr.bf16.mxu0 0
      %1652 = vmatpush1.bf16.msra.mxu0 0
      %1653 = vmatprep.subr.bf16.mxu0 0
      %1654 = vmatpush1.bf16.msra.mxu0 0
      %1655 = vmatprep.subr.bf16.mxu0 0
      %1656 = vmatpush1.bf16.msra.mxu0 0
      %1657 = vmatprep.subr.bf16.mxu0 0
      %1658 = vmatpush1.bf16.msra.mxu0 0
      %1659 = vmatprep.subr.bf16.mxu0 0
      %1660 = vmatpush1.bf16.msra.mxu0 0
      %1661 = vmatprep.subr.bf16.mxu0 0
      %1662 = vmatpush1.bf16.msra.mxu0 0
      %1663 = vmatprep.subr.bf16.mxu0 0
      %1664 = vmatpush1.bf16.msra.mxu0 0
      %1665 = vmatprep.subr.bf16.mxu0 0
      %1666 = vmatpush1.bf16.msra.mxu0 0
      %1667 = vmatprep.subr.bf16.mxu0 0
      %1668 = vmatpush1.bf16.msra.mxu0 0
      %1669 = vmatprep.subr.bf16.mxu0 0
      %1670 = vmatpush1.bf16.msra.mxu0 0
      %1671 = vmatprep.subr.bf16.mxu0 0
      %1672 = vmatpush1.bf16.msra.mxu0 0
      %1673 = vmatprep.subr.bf16.mxu0 0
      %1674 = vmatpush1.bf16.msra.mxu0 0
      %1675 = vmatprep.subr.bf16.mxu0 0
      %1676 = vmatpush1.bf16.msra.mxu0 0
      %1677 = vmatprep.mubr.bf16.mxu0 0
      %1678 = vmatmul.mubr.bf16.gmra.mrb[0].mxu0 %v1639
      %v1679 = vpop.f32.mrb[0].mxu0
      %v1680 = vadd.f32 0.0, %v1679
      %v1681 = vpop.f32.mrb[0].mxu0
      %v1682 = vpop.f32.mrb[0].mxu0
      %v1683 = vpop.f32.mrb[0].mxu0
      %1684 = vdwg.mxu0
      %v1686 = vsel %vm1397, %v1631, 0
      %v1689 = vsel %vm1641, %v1635, 0
      %1691 = vmatprep.subr.bf16.mxu0 0
      %1692 = vmatpush1.bf16.msra.mxu0 %v1689
      %1693 = vmatprep.subr.bf16.mxu0 0
      %1694 = vmatpush1.bf16.msra.mxu0 0
      %1695 = vmatprep.subr.bf16.mxu0 0
      %1696 = vmatpush1.bf16.msra.mxu0 0
      %1697 = vmatprep.subr.bf16.mxu0 0
      %1698 = vmatpush1.bf16.msra.mxu0 0
      %1699 = vmatprep.subr.bf16.mxu0 0
      %1700 = vmatpush1.bf16.msra.mxu0 0
      %1701 = vmatprep.subr.bf16.mxu0 0
      %1702 = vmatpush1.bf16.msra.mxu0 0
      %1703 = vmatprep.subr.bf16.mxu0 0
      %1704 = vmatpush1.bf16.msra.mxu0 0
      %1705 = vmatprep.subr.bf16.mxu0 0
      %1706 = vmatpush1.bf16.msra.mxu0 0
      %1707 = vmatprep.subr.bf16.mxu0 0
      %1708 = vmatpush1.bf16.msra.mxu0 0
      %1709 = vmatprep.subr.bf16.mxu0 0
      %1710 = vmatpush1.bf16.msra.mxu0 0
      %1711 = vmatprep.subr.bf16.mxu0 0
      %1712 = vmatpush1.bf16.msra.mxu0 0
      %1713 = vmatprep.subr.bf16.mxu0 0
      %1714 = vmatpush1.bf16.msra.mxu0 0
      %1715 = vmatprep.subr.bf16.mxu0 0
      %1716 = vmatpush1.bf16.msra.mxu0 0
      %1717 = vmatprep.subr.bf16.mxu0 0
      %1718 = vmatpush1.bf16.msra.mxu0 0
      %1719 = vmatprep.subr.bf16.mxu0 0
      %1720 = vmatpush1.bf16.msra.mxu0 0
      %1721 = vmatprep.subr.bf16.mxu0 0
      %1722 = vmatpush1.bf16.msra.mxu0 0
      %1723 = vmatprep.mubr.bf16.mxu0 0
      %1724 = vmatmul.mubr.bf16.gmra.mrb[0].mxu0 %v1686
      %v1725 = vpop.f32.mrb[0].mxu0
      %v1726 = vadd.f32 0.0, %v1725
      %v1727 = vpop.f32.mrb[0].mxu0
      %v1728 = vpop.f32.mrb[0].mxu0
      %v1729 = vpop.f32.mrb[0].mxu0
      %1730 = vdwg.mxu0
      %v1732 = vsel %vm1397, %v1632, 0
      %v1735 = vsel %vm1641, %v1636, 0
      %1737 = vmatprep.subr.bf16.mxu0 0
      %1738 = vmatpush1.bf16.msra.mxu0 %v1735
      %1739 = vmatprep.subr.bf16.mxu0 0
      %1740 = vmatpush1.bf16.msra.mxu0 0
      %1741 = vmatprep.subr.bf16.mxu0 0
      %1742 = vmatpush1.bf16.msra.mxu0 0
      %1743 = vmatprep.subr.bf16.mxu0 0
      %1744 = vmatpush1.bf16.msra.mxu0 0
      %1745 = vmatprep.subr.bf16.mxu0 0
      %1746 = vmatpush1.bf16.msra.mxu0 0
      %1747 = vmatprep.subr.bf16.mxu0 0
      %1748 = vmatpush1.bf16.msra.mxu0 0
      %1749 = vmatprep.subr.bf16.mxu0 0
      %1750 = vmatpush1.bf16.msra.mxu0 0
      %1751 = vmatprep.subr.bf16.mxu0 0
      %1752 = vmatpush1.bf16.msra.mxu0 0
      %1753 = vmatprep.subr.bf16.mxu0 0
      %1754 = vmatpush1.bf16.msra.mxu0 0
      %1755 = vmatprep.subr.bf16.mxu0 0
      %1756 = vmatpush1.bf16.msra.mxu0 0
      %1757 = vmatprep.subr.bf16.mxu0 0
      %1758 = vmatpush1.bf16.msra.mxu0 0
      %1759 = vmatprep.subr.bf16.mxu0 0
      %1760 = vmatpush1.bf16.msra.mxu0 0
      %1761 = vmatprep.subr.bf16.mxu0 0
      %1762 = vmatpush1.bf16.msra.mxu0 0
      %1763 = vmatprep.subr.bf16.mxu0 0
      %1764 = vmatpush1.bf16.msra.mxu0 0
      %1765 = vmatprep.subr.bf16.mxu0 0
      %1766 = vmatpush1.bf16.msra.mxu0 0
      %1767 = vmatprep.subr.bf16.mxu0 0
      %1768 = vmatpush1.bf16.msra.mxu0 0
      %1769 = vmatprep.mubr.bf16.mxu0 0
      %1770 = vmatmul.mubr.bf16.gmra.mrb[0].mxu0 %v1732
      %v1771 = vpop.f32.mrb[0].mxu0
      %v1772 = vadd.f32 0.0, %v1771
      %v1773 = vpop.f32.mrb[0].mxu0
      %v1774 = vpop.f32.mrb[0].mxu0
      %v1775 = vpop.f32.mrb[0].mxu0
      %1776 = vdwg.mxu0
      %v1778 = vsel %vm1397, %v1633, 0
      %v1781 = vsel %vm1641, %v1637, 0
      %1783 = vmatprep.subr.bf16.mxu0 0
      %1784 = vmatpush1.bf16.msra.mxu0 %v1781
      %1785 = vmatprep.subr.bf16.mxu0 0
      %1786 = vmatpush1.bf16.msra.mxu0 0
      %1787 = vmatprep.subr.bf16.mxu0 0
      %1788 = vmatpush1.bf16.msra.mxu0 0
      %1789 = vmatprep.subr.bf16.mxu0 0
      %1790 = vmatpush1.bf16.msra.mxu0 0
      %1791 = vmatprep.subr.bf16.mxu0 0
      %1792 = vmatpush1.bf16.msra.mxu0 0
      %1793 = vmatprep.subr.bf16.mxu0 0
      %1794 = vmatpush1.bf16.msra.mxu0 0
      %1795 = vmatprep.subr.bf16.mxu0 0
      %1796 = vmatpush1.bf16.msra.mxu0 0
      %1797 = vmatprep.subr.bf16.mxu0 0
      %1798 = vmatpush1.bf16.msra.mxu0 0
      %1799 = vmatprep.subr.bf16.mxu0 0
      %1800 = vmatpush1.bf16.msra.mxu0 0
      %1801 = vmatprep.subr.bf16.mxu0 0
      %1802 = vmatpush1.bf16.msra.mxu0 0
      %1803 = vmatprep.subr.bf16.mxu0 0
      %1804 = vmatpush1.bf16.msra.mxu0 0
      %1805 = vmatprep.subr.bf16.mxu0 0
      %1806 = vmatpush1.bf16.msra.mxu0 0
      %1807 = vmatprep.subr.bf16.mxu0 0
      %1808 = vmatpush1.bf16.msra.mxu0 0
      %1809 = vmatprep.subr.bf16.mxu0 0
      %1810 = vmatpush1.bf16.msra.mxu0 0
      %1811 = vmatprep.subr.bf16.mxu0 0
      %1812 = vmatpush1.bf16.msra.mxu0 0
      %1813 = vmatprep.subr.bf16.mxu0 0
      %1814 = vmatpush1.bf16.msra.mxu0 0
      %1815 = vmatprep.mubr.bf16.mxu0 0
      %1816 = vmatmul.mubr.bf16.gmra.mrb[0].mxu0 %v1778
      %v1817 = vpop.f32.mrb[0].mxu0
      %v1818 = vadd.f32 0.0, %v1817
      %v1819 = vpop.f32.mrb[0].mxu0
      %v1820 = vpop.f32.mrb[0].mxu0
      %v1821 = vpop.f32.mrb[0].mxu0
      %1822 = vdwg.mxu0
      %v1823 = vpack.c.bf16 %v1680, %v1680
      %v1824 = vpack.c.bf16 %v1726, %v1726
      %v1825 = vpack.c.bf16 %v1772, %v1772
      %v1826 = vpack.c.bf16 %v1818, %v1818
      %v1827 = vld [vmem:[%s8] sm:$0xf]
      %v1828 = vld [vmem:[%s8 + $0x4] sm:$0xf]
      %v1829 = vld [vmem:[%s8 + $0x8] sm:$0xf]
      %v1830 = vld [vmem:[%s8 + $0xc] sm:$0xf]
      %v1832 = vsel %vm1397, %v1823, 0
      %v1835 = vsel %vm1641, %v1827, 0
      %1837 = vmatprep.subr.bf16.mxu0 0
      %1838 = vmatpush1.bf16.msra.mxu0 %v1835
      %1839 = vmatprep.subr.bf16.mxu0 0
      %1840 = vmatpush1.bf16.msra.mxu0 0
      %1841 = vmatprep.subr.bf16.mxu0 0
      %1842 = vmatpush1.bf16.msra.mxu0 0
      %1843 = vmatprep.subr.bf16.mxu0 0
      %1844 = vmatpush1.bf16.msra.mxu0 0
      %1845 = vmatprep.subr.bf16.mxu0 0
      %1846 = vmatpush1.bf16.msra.mxu0 0
      %1847 = vmatprep.subr.bf16.mxu0 0
      %1848 = vmatpush1.bf16.msra.mxu0 0
      %1849 = vmatprep.subr.bf16.mxu0 0
      %1850 = vmatpush1.bf16.msra.mxu0 0
      %1851 = vmatprep.subr.bf16.mxu0 0
      %1852 = vmatpush1.bf16.msra.mxu0 0
      %1853 = vmatprep.subr.bf16.mxu0 0
      %1854 = vmatpush1.bf16.msra.mxu0 0
      %1855 = vmatprep.subr.bf16.mxu0 0
      %1856 = vmatpush1.bf16.msra.mxu0 0
      %1857 = vmatprep.subr.bf16.mxu0 0
      %1858 = vmatpush1.bf16.msra.mxu0 0
      %1859 = vmatprep.subr.bf16.mxu0 0
      %1860 = vmatpush1.bf16.msra.mxu0 0
      %1861 = vmatprep.subr.bf16.mxu0 0
      %1862 = vmatpush1.bf16.msra.mxu0 0
      %1863 = vmatprep.subr.bf16.mxu0 0
      %1864 = vmatpush1.bf16.msra.mxu0 0
      %1865 = vmatprep.subr.bf16.mxu0 0
      %1866 = vmatpush1.bf16.msra.mxu0 0
      %1867 = vmatprep.subr.bf16.mxu0 0
      %1868 = vmatpush1.bf16.msra.mxu0 0
      %1869 = vmatprep.mubr.bf16.mxu0 0
      %1870 = vmatmul.mubr.bf16.gmra.mrb[0].mxu0 %v1832
      %v1871 = vpop.f32.mrb[0].mxu0
      %v1872 = vadd.f32 0.0, %v1871
      %v1873 = vpop.f32.mrb[0].mxu0
      %v1874 = vpop.f32.mrb[0].mxu0
      %v1875 = vpop.f32.mrb[0].mxu0
      %1876 = vdwg.mxu0
      %v1878 = vsel %vm1397, %v1824, 0
      %v1881 = vsel %vm1641, %v1828, 0
      %1883 = vmatprep.subr.bf16.mxu0 0
      %1884 = vmatpush1.bf16.msra.mxu0 %v1881
      %1885 = vmatprep.subr.bf16.mxu0 0
      %1886 = vmatpush1.bf16.msra.mxu0 0
      %1887 = vmatprep.subr.bf16.mxu0 0
      %1888 = vmatpush1.bf16.msra.mxu0 0
      %1889 = vmatprep.subr.bf16.mxu0 0
      %1890 = vmatpush1.bf16.msra.mxu0 0
      %1891 = vmatprep.subr.bf16.mxu0 0
      %1892 = vmatpush1.bf16.msra.mxu0 0
      %1893 = vmatprep.subr.bf16.mxu0 0
      %1894 = vmatpush1.bf16.msra.mxu0 0
      %1895 = vmatprep.subr.bf16.mxu0 0
      %1896 = vmatpush1.bf16.msra.mxu0 0
      %1897 = vmatprep.subr.bf16.mxu0 0
      %1898 = vmatpush1.bf16.msra.mxu0 0
      %1899 = vmatprep.subr.bf16.mxu0 0
      %1900 = vmatpush1.bf16.msra.mxu0 0
      %1901 = vmatprep.subr.bf16.mxu0 0
      %1902 = vmatpush1.bf16.msra.mxu0 0
      %1903 = vmatprep.subr.bf16.mxu0 0
      %1904 = vmatpush1.bf16.msra.mxu0 0
      %1905 = vmatprep.subr.bf16.mxu0 0
      %1906 = vmatpush1.bf16.msra.mxu0 0
      %1907 = vmatprep.subr.bf16.mxu0 0
      %1908 = vmatpush1.bf16.msra.mxu0 0
      %1909 = vmatprep.subr.bf16.mxu0 0
      %1910 = vmatpush1.bf16.msra.mxu0 0
      %1911 = vmatprep.subr.bf16.mxu0 0
      %1912 = vmatpush1.bf16.msra.mxu0 0
      %1913 = vmatprep.subr.bf16.mxu0 0
      %1914 = vmatpush1.bf16.msra.mxu0 0
      %1915 = vmatprep.mubr.bf16.mxu0 0
      %1916 = vmatmul.mubr.bf16.gmra.mrb[0].mxu0 %v1878
      %v1917 = vpop.f32.mrb[0].mxu0
      %v1918 = vadd.f32 0.0, %v1917
      %v1919 = vpop.f32.mrb[0].mxu0
      %v1920 = vpop.f32.mrb[0].mxu0
      %v1921 = vpop.f32.mrb[0].mxu0
      %1922 = vdwg.mxu0
      %v1924 = vsel %vm1397, %v1825, 0
      %v1927 = vsel %vm1641, %v1829, 0
      %1929 = vmatprep.subr.bf16.mxu0 0
      %1930 = vmatpush1.bf16.msra.mxu0 %v1927
      %1931 = vmatprep.subr.bf16.mxu0 0
      %1932 = vmatpush1.bf16.msra.mxu0 0
      %1933 = vmatprep.subr.bf16.mxu0 0
      %1934 = vmatpush1.bf16.msra.mxu0 0
      %1935 = vmatprep.subr.bf16.mxu0 0
      %1936 = vmatpush1.bf16.msra.mxu0 0
      %1937 = vmatprep.subr.bf16.mxu0 0
      %1938 = vmatpush1.bf16.msra.mxu0 0
      %1939 = vmatprep.subr.bf16.mxu0 0
      %1940 = vmatpush1.bf16.msra.mxu0 0
      %1941 = vmatprep.subr.bf16.mxu0 0
      %1942 = vmatpush1.bf16.msra.mxu0 0
      %1943 = vmatprep.subr.bf16.mxu0 0
      %1944 = vmatpush1.bf16.msra.mxu0 0
      %1945 = vmatprep.subr.bf16.mxu0 0
      %1946 = vmatpush1.bf16.msra.mxu0 0
      %1947 = vmatprep.subr.bf16.mxu0 0
      %1948 = vmatpush1.bf16.msra.mxu0 0
      %1949 = vmatprep.subr.bf16.mxu0 0
      %1950 = vmatpush1.bf16.msra.mxu0 0
      %1951 = vmatprep.subr.bf16.mxu0 0
      %1952 = vmatpush1.bf16.msra.mxu0 0
      %1953 = vmatprep.subr.bf16.mxu0 0
      %1954 = vmatpush1.bf16.msra.mxu0 0
      %1955 = vmatprep.subr.bf16.mxu0 0
      %1956 = vmatpush1.bf16.msra.mxu0 0
      %1957 = vmatprep.subr.bf16.mxu0 0
      %1958 = vmatpush1.bf16.msra.mxu0 0
      %1959 = vmatprep.subr.bf16.mxu0 0
      %1960 = vmatpush1.bf16.msra.mxu0 0
      %1961 = vmatprep.mubr.bf16.mxu0 0
      %1962 = vmatmul.mubr.bf16.gmra.mrb[0].mxu0 %v1924
      %v1963 = vpop.f32.mrb[0].mxu0
      %v1964 = vadd.f32 0.0, %v1963
      %v1965 = vpop.f32.mrb[0].mxu0
      %v1966 = vpop.f32.mrb[0].mxu0
      %v1967 = vpop.f32.mrb[0].mxu0
      %1968 = vdwg.mxu0
      %v1970 = vsel %vm1397, %v1826, 0
      %v1973 = vsel %vm1641, %v1830, 0
      %1975 = vmatprep.subr.bf16.mxu0 0
      %1976 = vmatpush1.bf16.msra.mxu0 %v1973
      %1977 = vmatprep.subr.bf16.mxu0 0
      %1978 = vmatpush1.bf16.msra.mxu0 0
      %1979 = vmatprep.subr.bf16.mxu0 0
      %1980 = vmatpush1.bf16.msra.mxu0 0
      %1981 = vmatprep.subr.bf16.mxu0 0
      %1982 = vmatpush1.bf16.msra.mxu0 0
      %1983 = vmatprep.subr.bf16.mxu0 0
      %1984 = vmatpush1.bf16.msra.mxu0 0
      %1985 = vmatprep.subr.bf16.mxu0 0
      %1986 = vmatpush1.bf16.msra.mxu0 0
      %1987 = vmatprep.subr.bf16.mxu0 0
      %1988 = vmatpush1.bf16.msra.mxu0 0
      %1989 = vmatprep.subr.bf16.mxu0 0
      %1990 = vmatpush1.bf16.msra.mxu0 0
      %1991 = vmatprep.subr.bf16.mxu0 0
      %1992 = vmatpush1.bf16.msra.mxu0 0
      %1993 = vmatprep.subr.bf16.mxu0 0
      %1994 = vmatpush1.bf16.msra.mxu0 0
      %1995 = vmatprep.subr.bf16.mxu0 0
      %1996 = vmatpush1.bf16.msra.mxu0 0
      %1997 = vmatprep.subr.bf16.mxu0 0
      %1998 = vmatpush1.bf16.msra.mxu0 0
      %1999 = vmatprep.subr.bf16.mxu0 0
      %2000 = vmatpush1.bf16.msra.mxu0 0
      %2001 = vmatprep.subr.bf16.mxu0 0
      %2002 = vmatpush1.bf16.msra.mxu0 0
      %2003 = vmatprep.subr.bf16.mxu0 0
      %2004 = vmatpush1.bf16.msra.mxu0 0
      %2005 = vmatprep.subr.bf16.mxu0 0
      %2006 = vmatpush1.bf16.msra.mxu0 0
      %2007 = vmatprep.mubr.bf16.mxu0 0
      %2008 = vmatmul.mubr.bf16.gmra.mrb[0].mxu0 %v1970
      %v2009 = vpop.f32.mrb[0].mxu0
      %v2010 = vadd.f32 0.0, %v2009
      %v2011 = vpop.f32.mrb[0].mxu0
      %v2012 = vpop.f32.mrb[0].mxu0
      %v2013 = vpop.f32.mrb[0].mxu0
      %2014 = vdwg.mxu0
      %v2015 = vsel %vm685, %v1872, 0.0
      %v2016 = vsel %vm685, %v1918, 0.0
      %v2017 = vadd.f32 %v2015, %v2016
      %v2018 = vsel %vm685, %v1964, 0.0
      %v2019 = vadd.f32 %v2017, %v2018
      %v2020 = vsel %vm685, %v2010, 0.0
      %v2021 = vadd.f32 %v2019, %v2020
      %v2022 = vld [vmem:[%s9] sm:$0x1]
      %v2024 = vlaneseq
      %v2025 = vshrl.u32 %v2024, 7
      %v2026 = vsub.s32 0, %v2025
      %v2027 = vrot.slane %v2022, %v2026
      %v2029 = vadd.f32 %v2021, %v2027
      %v2030 = vadd.f32 %v2029, %v627
      %v2031 = vsel %vm685, %v2030, 0.0
      %2032 = vadd.xlane.f32.xlu0 %v2031
      %v2033 = vpop.xlane.xlu0 %2032
      %v2034 = vrcp.pop 32.0
      %v2035 = vmul.f32 %v2033, %v2034
      %v2036 = vsub.f32 %v2030, %v2035
      %v2037 = vmul.f32 %v2036, %v2036
      %v2038 = vsel %vm685, %v2037, 0.0
      %2039 = vadd.xlane.f32.xlu0 %v2038
      %v2040 = vpop.xlane.xlu0 %2039
      %v2041 = vmul.f32 %v2040, %v2034
      %v2042 = vadd.f32 %v2041, 1e-12
      %v2043 = vrsqrt.pop %v2042
      %v2044 = vmul.f32 %v2036, %v2043
      %v2045 = vld [vmem:[%s10] sm:$0x1]
      %v2047 = vlaneseq
      %v2048 = vshrl.u32 %v2047, 7
      %v2049 = vsub.s32 0, %v2048
      %v2050 = vrot.slane %v2045, %v2049
      %v2052 = vmul.f32 %v2044, %v2050
      %v2053 = vld [vmem:[%s11] sm:$0x1]
      %v2055 = vlaneseq
      %v2056 = vshrl.u32 %v2055, 7
      %v2057 = vsub.s32 0, %v2056
      %v2058 = vrot.slane %v2053, %v2057
      %v2060 = vadd.f32 %v2052, %v2058
      %v2061 = vpack.c.bf16 %v2060, %v2060
      %v2062 = vld [vmem:[%s12] sm:$0xf]
      %v2063 = vld [vmem:[%s12 + $0x4] sm:$0xf]
      %v2064 = vld [vmem:[%s12 + $0x8] sm:$0xf]
      %v2065 = vld [vmem:[%s12 + $0xc] sm:$0xf]
      %v2066 = vld [vmem:[%s13] sm:$0x1]
      %v2068 = vlaneseq
      %v2069 = vshrl.u32 %v2068, 7
      %v2070 = vsub.s32 0, %v2069
      %v2071 = vrot.slane %v2066, %v2070
      %v2077 = vunpack.c.l.b16 %v2062
      %v2078 = vunpack.c.l.b16 %v2063
      %v2079 = vunpack.c.l.b16 %v2064
      %v2080 = vunpack.c.l.b16 %v2065
      %v2081 = vpack.c.b16 %v2078, %v2077
      %v2082 = vpack.c.b16 %v2080, %v2079
      %v2086 = vsel %vm685, %v2061, 0
      %2088 = vmatprep.subr.bf16.mxu0 0
      %2089 = vmatpush1.bf16.msra.mxu0 %v2081
      %2090 = vmatprep.subr.bf16.mxu0 0
      %2091 = vmatpush1.bf16.msra.mxu0 %v2082
      %2092 = vmatprep.subr.bf16.mxu0 0
      %2093 = vmatpush1.bf16.msra.mxu0 0
      %2094 = vmatprep.subr.bf16.mxu0 0
      %2095 = vmatpush1.bf16.msra.mxu0 0
      %2096 = vmatprep.subr.bf16.mxu0 0
      %2097 = vmatpush1.bf16.msra.mxu0 0
      %2098 = vmatprep.subr.bf16.mxu0 0
      %2099 = vmatpush1.bf16.msra.mxu0 0
      %2100 = vmatprep.subr.bf16.mxu0 0
      %2101 = vmatpush1.bf16.msra.mxu0 0
      %2102 = vmatprep.subr.bf16.mxu0 0
      %2103 = vmatpush1.bf16.msra.mxu0 0
      %2104 = vmatprep.subr.bf16.mxu0 0
      %2105 = vmatpush1.bf16.msra.mxu0 0
      %2106 = vmatprep.subr.bf16.mxu0 0
      %2107 = vmatpush1.bf16.msra.mxu0 0
      %2108 = vmatprep.subr.bf16.mxu0 0
      %2109 = vmatpush1.bf16.msra.mxu0 0
      %2110 = vmatprep.subr.bf16.mxu0 0
      %2111 = vmatpush1.bf16.msra.mxu0 0
      %2112 = vmatprep.subr.bf16.mxu0 0
      %2113 = vmatpush1.bf16.msra.mxu0 0
      %2114 = vmatprep.subr.bf16.mxu0 0
      %2115 = vmatpush1.bf16.msra.mxu0 0
      %2116 = vmatprep.subr.bf16.mxu0 0
      %2117 = vmatpush1.bf16.msra.mxu0 0
      %2118 = vmatprep.subr.bf16.mxu0 0
      %2119 = vmatpush1.bf16.msra.mxu0 0
      %2120 = vmatprep.mubr.bf16.mxu0 0
      %2121 = vmatmul.mubr.bf16.gmra.mrb[0].mxu0 %v2086
      %v2122 = vpop.f32.mrb[0].mxu0
      %v2123 = vadd.f32 %v2071, %v2122
      %v2124 = vpop.f32.mrb[0].mxu0
      %v2125 = vpop.f32.mrb[0].mxu0
      %v2126 = vpop.f32.mrb[0].mxu0
      %2127 = vdwg.mxu0
      %v2128 = vmul.f32 %v2123, 0.5
      %v2129 = vmul.f32 %v2123, 0.70710677
      %vm2130 = vcmp.lt.f32.partialorder %v2129, 0.0
      %v2131 = vsel %vm2130, -1.0, 1.0
      %v2132 = vand.u32 2147483647, %v2129
      %v2133 = vmul.f32 %v2132, 0.3275911
      %v2134 = vadd.f32 %v2133, 1.0
      %v2135 = vrcp.pop %v2134
      %v2136 = vmul.f32 1.0, %v2135
      %v2137 = vmul.f32 %v2136, 1.0614054
      %v2138 = vadd.f32 %v2137, -1.4531521
      %v2139 = vmul.f32 %v2138, %v2136
      %v2140 = vadd.f32 %v2139, 1.4214138
      %v2141 = vmul.f32 %v2140, %v2136
      %v2142 = vadd.f32 %v2141, -0.28449672
      %v2143 = vmul.f32 %v2142, %v2136
      %v2144 = vadd.f32 %v2143, 0.2548296
      %v2145 = vmul.f32 %v2144, %v2136
      %v2146 = vsub.f32 0.0, %v2132
      %v2147 = vmul.f32 %v2146, %v2132
      %v2148 = vmul.f32 %v2147, 1.442695
      %v2149 = vpow.pop %v2148
      %v2150 = vmul.f32 %v2145, %v2149
      %v2151 = vsub.f32 1.0, %v2150
      %v2152 = vmul.f32 %v2131, %v2151
      %v2153 = vadd.f32 %v2152, 1.0
      %v2154 = vmul.f32 %v2128, %v2153
      %2155 = vadd.xlane.f32.xlu0 %v2154
      %v2156 = vpop.xlane.xlu0 %2155
      %v2157 = vrcp.pop 128.0
      %v2158 = vmul.f32 %v2156, %v2157
      %v2159 = vsub.f32 %v2154, %v2158
      %v2160 = vmul.f32 %v2159, %v2159
      %2161 = vadd.xlane.f32.xlu0 %v2160
      %v2162 = vpop.xlane.xlu0 %2161
      %v2163 = vmul.f32 %v2162, %v2157
      %v2164 = vadd.f32 %v2163, 1e-05
      %v2165 = vrsqrt.pop %v2164
      %v2166 = vmul.f32 %v2159, %v2165
      %v2167 = vpack.c.bf16 %v2166, %v2166
      %v2168 = vld [vmem:[%s14] sm:$0xf]
      %v2169 = vld [vmem:[%s14 + $0x4] sm:$0xf]
      %v2170 = vld [vmem:[%s14 + $0x8] sm:$0xf]
      %v2171 = vld [vmem:[%s14 + $0xc] sm:$0xf]
      %v2172 = vld [vmem:[%s14 + $0x10] sm:$0xf]
      %v2173 = vld [vmem:[%s14 + $0x14] sm:$0xf]
      %v2174 = vld [vmem:[%s14 + $0x18] sm:$0xf]
      %v2175 = vld [vmem:[%s14 + $0x1c] sm:$0xf]
      %v2176 = vld [vmem:[%s14 + $0x20] sm:$0xf]
      %v2177 = vld [vmem:[%s14 + $0x24] sm:$0xf]
      %v2178 = vld [vmem:[%s14 + $0x28] sm:$0xf]
      %v2179 = vld [vmem:[%s14 + $0x2c] sm:$0xf]
      %v2180 = vld [vmem:[%s14 + $0x30] sm:$0xf]
      %v2181 = vld [vmem:[%s14 + $0x34] sm:$0xf]
      %v2182 = vld [vmem:[%s14 + $0x38] sm:$0xf]
      %v2183 = vld [vmem:[%s14 + $0x3c] sm:$0xf]
      %v2184 = vld [vmem:[%s15] sm:$0x1]
      %v2186 = vlaneseq
      %v2187 = vshrl.u32 %v2186, 7
      %v2188 = vsub.s32 0, %v2187
      %v2189 = vrot.slane %v2184, %v2188
      %v2207 = vunpack.c.l.b16 %v2168
      %v2208 = vunpack.c.l.b16 %v2169
      %v2209 = vunpack.c.l.b16 %v2170
      %v2210 = vunpack.c.l.b16 %v2171
      %v2211 = vunpack.c.l.b16 %v2172
      %v2212 = vunpack.c.l.b16 %v2173
      %v2213 = vunpack.c.l.b16 %v2174
      %v2214 = vunpack.c.l.b16 %v2175
      %v2215 = vunpack.c.l.b16 %v2176
      %v2216 = vunpack.c.l.b16 %v2177
      %v2217 = vunpack.c.l.b16 %v2178
      %v2218 = vunpack.c.l.b16 %v2179
      %v2219 = vunpack.c.l.b16 %v2180
      %v2220 = vunpack.c.l.b16 %v2181
      %v2221 = vunpack.c.l.b16 %v2182
      %v2222 = vunpack.c.l.b16 %v2183
      %v2223 = vpack.c.b16 %v2208, %v2207
      %v2224 = vpack.c.b16 %v2210, %v2209
      %v2225 = vpack.c.b16 %v2212, %v2211
      %v2226 = vpack.c.b16 %v2214, %v2213
      %v2227 = vpack.c.b16 %v2216, %v2215
      %v2228 = vpack.c.b16 %v2218, %v2217
      %v2229 = vpack.c.b16 %v2220, %v2219
      %v2230 = vpack.c.b16 %v2222, %v2221
      %2239 = vmatprep.subr.bf16.mxu0 0
      %2240 = vmatpush1.bf16.msra.mxu0 %v2223
      %2241 = vmatprep.subr.bf16.mxu0 0
      %2242 = vmatpush1.bf16.msra.mxu0 %v2224
      %2243 = vmatprep.subr.bf16.mxu0 0
      %2244 = vmatpush1.bf16.msra.mxu0 %v2225
      %2245 = vmatprep.subr.bf16.mxu0 0
      %2246 = vmatpush1.bf16.msra.mxu0 %v2226
      %2247 = vmatprep.subr.bf16.mxu0 0
      %2248 = vmatpush1.bf16.msra.mxu0 %v2227
      %2249 = vmatprep.subr.bf16.mxu0 0
      %2250 = vmatpush1.bf16.msra.mxu0 %v2228
      %2251 = vmatprep.subr.bf16.mxu0 0
      %2252 = vmatpush1.bf16.msra.mxu0 %v2229
      %2253 = vmatprep.subr.bf16.mxu0 0
      %2254 = vmatpush1.bf16.msra.mxu0 %v2230
      %2255 = vmatprep.subr.bf16.mxu0 0
      %2256 = vmatpush1.bf16.msra.mxu0 0
      %2257 = vmatprep.subr.bf16.mxu0 0
      %2258 = vmatpush1.bf16.msra.mxu0 0
      %2259 = vmatprep.subr.bf16.mxu0 0
      %2260 = vmatpush1.bf16.msra.mxu0 0
      %2261 = vmatprep.subr.bf16.mxu0 0
      %2262 = vmatpush1.bf16.msra.mxu0 0
      %2263 = vmatprep.subr.bf16.mxu0 0
      %2264 = vmatpush1.bf16.msra.mxu0 0
      %2265 = vmatprep.subr.bf16.mxu0 0
      %2266 = vmatpush1.bf16.msra.mxu0 0
      %2267 = vmatprep.subr.bf16.mxu0 0
      %2268 = vmatpush1.bf16.msra.mxu0 0
      %2269 = vmatprep.subr.bf16.mxu0 0
      %2270 = vmatpush1.bf16.msra.mxu0 0
      %2271 = vmatprep.mubr.bf16.mxu0 0
      %2272 = vmatmul.mubr.bf16.gmra.mrb[0].mxu0 %v2167
      %v2273 = vpop.f32.mrb[0].mxu0
      %v2274 = vadd.f32 %v2189, %v2273
      %v2275 = vpop.f32.mrb[0].mxu0
      %v2276 = vpop.f32.mrb[0].mxu0
      %v2277 = vpop.f32.mrb[0].mxu0
      %2278 = vdwg.mxu0
      %v2279 = vld [vmem:[%s613] sm:$0xff]
      %v2280 = vadd.f32 %v2279, %v2274
      %vm2281 = vcmask 523264
      %2282 = vst.msk [vmem:[%s621] sm:$0xff] %vm2281, %v2280
      %v2283 = vsel %vm2281, %v2280, 0.0
      %2284 = vadd.xlane.f32.xlu0 %v2283
      %v2285 = vpop.xlane.xlu0 %2284
      %v2286 = vrcp.pop 64.0
      %v2287 = vmul.f32 %v2285, %v2286
      %v2288 = vsub.f32 %v2280, %v2287
      %v2289 = vmul.f32 %v2288, %v2288
      %v2290 = vsel %vm2281, %v2289, 0.0
      %2291 = vadd.xlane.f32.xlu0 %v2290
      %v2292 = vpop.xlane.xlu0 %2291
      %v2293 = vmul.f32 %v2292, %v2286
      %v2294 = vadd.f32 %v2293, 1e-05
      %v2295 = vrsqrt.pop %v2294
      %v2296 = vmul.f32 %v2288, %v2295
      %v2297 = vpack.c.bf16 %v2296, %v2296
      %v2298 = vld [vmem:[%s16] sm:$0xf]
      %v2299 = vld [vmem:[%s16 + $0x4] sm:$0xf]
      %v2300 = vld [vmem:[%s16 + $0x8] sm:$0xf]
      %v2301 = vld [vmem:[%s16 + $0xc] sm:$0xf]
      %v2302 = vld [vmem:[%s16 + $0x10] sm:$0xf]
      %v2303 = vld [vmem:[%s16 + $0x14] sm:$0xf]
      %v2304 = vld [vmem:[%s16 + $0x18] sm:$0xf]
      %v2305 = vld [vmem:[%s16 + $0x1c] sm:$0xf]
      %v2306 = vld [vmem:[%s17] sm:$0x1]
      %v2308 = vlaneseq
      %v2309 = vshrl.u32 %v2308, 7
      %v2310 = vsub.s32 0, %v2309
      %v2311 = vrot.slane %v2306, %v2310
      %v2321 = vunpack.c.l.b16 %v2298
      %v2322 = vunpack.c.l.b16 %v2299
      %v2323 = vunpack.c.l.b16 %v2300
      %v2324 = vunpack.c.l.b16 %v2301
      %v2325 = vunpack.c.l.b16 %v2302
      %v2326 = vunpack.c.l.b16 %v2303
      %v2327 = vunpack.c.l.b16 %v2304
      %v2328 = vunpack.c.l.b16 %v2305
      %v2329 = vpack.c.b16 %v2322, %v2321
      %v2330 = vpack.c.b16 %v2324, %v2323
      %v2331 = vpack.c.b16 %v2326, %v2325
      %v2332 = vpack.c.b16 %v2328, %v2327
      %v2338 = vsel %vm2281, %v2297, 0
      %2340 = vmatprep.subr.bf16.mxu0 0
      %2341 = vmatpush1.bf16.msra.mxu0 %v2329
      %2342 = vmatprep.subr.bf16.mxu0 0
      %2343 = vmatpush1.bf16.msra.mxu0 %v2330
      %2344 = vmatprep.subr.bf16.mxu0 0
      %2345 = vmatpush1.bf16.msra.mxu0 %v2331
      %2346 = vmatprep.subr.bf16.mxu0 0
      %2347 = vmatpush1.bf16.msra.mxu0 %v2332
      %2348 = vmatprep.subr.bf16.mxu0 0
      %2349 = vmatpush1.bf16.msra.mxu0 0
      %2350 = vmatprep.subr.bf16.mxu0 0
      %2351 = vmatpush1.bf16.msra.mxu0 0
      %2352 = vmatprep.subr.bf16.mxu0 0
      %2353 = vmatpush1.bf16.msra.mxu0 0
      %2354 = vmatprep.subr.bf16.mxu0 0
      %2355 = vmatpush1.bf16.msra.mxu0 0
      %2356 = vmatprep.subr.bf16.mxu0 0
      %2357 = vmatpush1.bf16.msra.mxu0 0
      %2358 = vmatprep.subr.bf16.mxu0 0
      %2359 = vmatpush1.bf16.msra.mxu0 0
      %2360 = vmatprep.subr.bf16.mxu0 0
      %2361 = vmatpush1.bf16.msra.mxu0 0
      %2362 = vmatprep.subr.bf16.mxu0 0
      %2363 = vmatpush1.bf16.msra.mxu0 0
      %2364 = vmatprep.subr.bf16.mxu0 0
      %2365 = vmatpush1.bf16.msra.mxu0 0
      %2366 = vmatprep.subr.bf16.mxu0 0
      %2367 = vmatpush1.bf16.msra.mxu0 0
      %2368 = vmatprep.subr.bf16.mxu0 0
      %2369 = vmatpush1.bf16.msra.mxu0 0
      %2370 = vmatprep.subr.bf16.mxu0 0
      %2371 = vmatpush1.bf16.msra.mxu0 0
      %2372 = vmatprep.mubr.bf16.mxu0 0
      %2373 = vmatmul.mubr.bf16.gmra.mrb[0].mxu0 %v2338
      %v2374 = vpop.f32.mrb[0].mxu0
      %v2375 = vadd.f32 %v2311, %v2374
      %v2376 = vpop.f32.mrb[0].mxu0
      %v2377 = vpop.f32.mrb[0].mxu0
      %v2378 = vpop.f32.mrb[0].mxu0
      %2379 = vdwg.mxu0
      %v2380 = vadd.f32 %v627, %v2375
      %2381 = vst.msk [vmem:[%s625] sm:$0xff] %vm685, %v2380
      %p2382 = scmp.lt.s32.totalorder %s31, 1
      %s2383 = scalar_select %p2382, %s31, 1
      %s2384 = smul.addr %s2383, 8
      %s2385 = scalar_lea.vmem %s18, %s2384
      %p2386 = scmp.lt.s32.totalorder %s31, 1
      %s2387 = scalar_select %p2386, %s31, 1
      %s2388 = smul.addr %s2387, 8
      %s2389 = scalar_lea.vmem %s19, %s2388
      // Predicated region
      $region93: #{pallas_forward.4} parent=91 // pred_check
        %p2390 = pneg %p437
      $region94: #{pallas_forward.4} parent=91 // pred_check_branch
        %2392 = sbr.rel (%p2390) target = $region96
      $region95: #{pallas_forward.4} parent=91 // pred_region
        _
      $region96: #{pallas_forward.4} parent=91 // pred_fallthru
        _
      // Predicated region
      $region97: #{pallas_forward.4} parent=91 // pred_check
        %p2393 = pneg %p463
      $region98: #{pallas_forward.4} parent=91 // pred_check_branch
        %2395 = sbr.rel (%p2393) target = $region100
      $region99: #{pallas_forward.4} parent=91 // pred_region
        _
      $region100: #{pallas_forward.4} parent=91 // pred_fallthru
        _
    $region92: #{pallas_forward.4} parent=5 // pred_fallthru
      _
    %p2396 = scmp.le.s32.totalorder 2, %s26
    // Predicated region
    $region101: #{pallas_forward.4} parent=5 // pred_check
      %p2397 = pneg %p2396
    $region102: #{pallas_forward.4} parent=5 // pred_check_branch
      %2399 = sbr.rel (%p2397) target = $region104
    $region103: #{pallas_forward.4} parent=5 // pred_region
      %s2400 = ssub.s32 %s26, 2
      // Predicated region
      $region105: #{pallas_forward.4} parent=103 // pred_check
        %p2401 = pneg %p443
      $region106: #{pallas_forward.4} parent=103 // pred_check_branch
        %2403 = sbr.rel (%p2401) target = $region108
      $region107: #{pallas_forward.4} parent=103 // pred_region
        %p2404 = scmp.lt.s32.totalorder %s32, 1
        %s2405 = scalar_select %p2404, %s32, 1
        %s2406 = smul.addr %s2405, 8
        %s2407 = scalar_lea.vmem %s18, %s2406
      $region108: #{pallas_forward.4} parent=103 // pred_fallthru
        _
      // Predicated region
      $region109: #{pallas_forward.4} parent=103 // pred_check
        %p2408 = pneg %p469
      $region110: #{pallas_forward.4} parent=103 // pred_check_branch
        %2410 = sbr.rel (%p2408) target = $region112
      $region111: #{pallas_forward.4} parent=103 // pred_region
        %p2411 = scmp.lt.s32.totalorder %s32, 1
        %s2412 = scalar_select %p2411, %s32, 1
        %s2413 = smul.addr %s2412, 8
        %s2414 = scalar_lea.vmem %s19, %s2413
      $region112: #{pallas_forward.4} parent=103 // pred_fallthru
        _
    $region104: #{pallas_forward.4} parent=5 // pred_fallthru
      _
  $region6: #{pallas_forward.4} parent=0 // loop_footer
    %s30 = sadd.s32 1, %s26
  $region7: #{pallas_forward.4} parent=0 // loop_footer_branch
    %25 = sbr.rel target = $region3
  $region8: #{pallas_forward.4} parent=0 // loop_exit
    _

</llo_original>
